<compile_context>
chip_gen: v7x
topology: tpu7x:2x2x1
jax: 0.10.0
libtpu: 0.0.40
codegen_flags: <defaults>
</compile_context>

<pallas_src>
import functools
import math

import jax
import jax.numpy as jnp
from jax.experimental import pallas as pl
from jax.experimental.pallas import tpu as pltpu

# TODO(synk): the FixedTensor.quant()/round() spec is not included in the
# source module; emulate it deterministically as round-to-nearest on a
# 2^-FRAC_BITS fixed-point grid (no saturation).
FRAC_BITS = 8
_FIXED_SCALE = float(2 ** FRAC_BITS)
_INV_FIXED_SCALE = 1.0 / _FIXED_SCALE

_LANE = 128


def _fixed_round(x):
    return jnp.round(x * _FIXED_SCALE) * _INV_FIXED_SCALE


def _ds(start, size, stride):
    # Avoid emitting a strided access when the stride is 1.
    return pl.ds(start, size) if stride == 1 else pl.ds(start, size, stride)


# ---------------------------------------------------------------------------
# Pallas kernel: fused tap-accumulation conv + bias + fixed-point quantize
# ---------------------------------------------------------------------------
def _conv_taps_kernel(x_ref, w_ref, b_ref, o_ref, *,
                      KH, KW, sh, sw, dh, dw, TH, Wo, C_in):
    """One grid step computes TH output rows of one image.

    x_ref : (Hp, Wp, C_in)         padded input image (batch dim squeezed)
    w_ref : (KH, KW, C_in, C_pad)  weights, C_out zero-padded to lane width
    b_ref : (1, C_pad)             bias (zero in padded lanes)
    o_ref : (TH*Wo, C_pad)         flattened output rows for this step
    """
    r = pl.program_id(1)
    row0 = pl.multiple_of(r * (TH * sh), TH * sh)
    C_pad = o_ref.shape[-1]

    acc = jnp.zeros((TH * Wo, C_pad), jnp.float32) + b_ref[...]

    # KH*KW tap accumulation: each tap is a shifted (TH, Wo, C_in) window of
    # the VMEM-resident image -> (TH*Wo, C_in) @ (C_in, C_pad) on the MXU.
    # (Wo is the sublane axis here; the (TH, Wo) -> TH*Wo collapse is a pure
    # vreg renumbering when Wo % 8 == 0.)
    for kh in range(KH):
        for kw in range(KW):
            win = x_ref[_ds(row0 + kh * dh, TH, sh), _ds(kw * dw, Wo, sw), :]
            lhs = win.reshape(TH * Wo, C_in)
            acc = acc + jnp.dot(lhs, w_ref[kh, kw],
                                preferred_element_type=jnp.float32)

    # Fused fixed-point quantization (multiply by reciprocal, no division).
    o_ref[...] = (jnp.round(acc * _FIXED_SCALE) * _INV_FIXED_SCALE
                  ).astype(o_ref.dtype)


# ---------------------------------------------------------------------------
# Wrapper
# ---------------------------------------------------------------------------
def conv2d_fixed(x, weight, bias, stride=(1, 1), padding=(1, 1),
                 dilation=(1, 1), padding_mode="zeros",
                 compute_dtype=jnp.float32):
    """Fixed-point Conv2d forward (groups=1). NCHW input/weight, NCHW output."""
    # TODO(synk): groups != 1 is not implemented.
    N, C_in, H, W = x.shape
    C_out, C_in_w, KH, KW = weight.shape
    assert C_in_w == C_in, "groups != 1 not supported"
    sh, sw = stride
    ph, pw = padding
    dh, dw = dilation

    # Channels-last (NHWC) padded input so C_in sits on the lane axis as the
    # matmul contraction dim.  One layout pass instead of a KH*KW x im2col.
    mode = {"zeros": "constant", "reflect": "reflect",
            "replicate": "edge", "circular": "wrap"}[padding_mode]
    x_nhwc = jnp.transpose(x, (0, 2, 3, 1)).astype(compute_dtype)
    x_p = jnp.pad(x_nhwc, ((0, 0), (ph, ph), (pw, pw), (0, 0)), mode=mode)
    _, Hp, Wp, _ = x_p.shape

    Ho = (Hp - dh * (KH - 1) - 1) // sh + 1
    Wo = (Wp - dw * (KW - 1) - 1) // sw + 1

    # Lane-dense output: pad C_out up to a multiple of 128 with zero weight
    # and bias columns (padded lanes compute exact zeros, sliced off below).
    C_pad = ((C_out + _LANE - 1) // _LANE) * _LANE
    w_hwio = jnp.transpose(weight, (2, 3, 1, 0)).astype(compute_dtype)
    w_hwio = jnp.pad(w_hwio, ((0, 0), (0, 0), (0, 0), (0, C_pad - C_out)))
    b_row = jnp.pad(bias.astype(jnp.float32),
                    (0, C_pad - C_out)).reshape(1, C_pad)

    # Output-row tile: largest divisor of Ho with TH*Wo <= 512 (M-tile target).
    TH = 1
    for d in range(1, Ho + 1):
        if Ho % d == 0 and d * Wo <= 512:
            TH = d
    R = Ho // TH

    kernel = functools.partial(
        _conv_taps_kernel, KH=KH, KW=KW, sh=sh, sw=sw, dh=dh, dw=dw,
        TH=TH, Wo=Wo, C_in=C_in)

    itemsize = jnp.dtype(compute_dtype).itemsize
    flops = 2 * N * Ho * Wo * KH * KW * C_in * C_pad
    bytes_accessed = (N * Hp * Wp * C_in * itemsize
                      + KH * KW * C_in * C_pad * itemsize
                      + C_pad * 4
                      + N * Ho * Wo * C_pad * 4)

    out = pl.pallas_call(
        kernel,
        out_shape=jax.ShapeDtypeStruct((N, Ho * Wo, C_pad), jnp.float32),
        grid_spec=pltpu.PrefetchScalarGridSpec(
            num_scalar_prefetch=0,
            grid=(N, R),
            in_specs=[
                # One full padded image per batch element; the block index is
                # constant across the row-tile axis so it is not re-fetched.
                pl.BlockSpec((None, Hp, Wp, C_in), lambda n, r: (n, 0, 0, 0)),
                pl.BlockSpec((KH, KW, C_in, C_pad), lambda n, r: (0, 0, 0, 0)),
                pl.BlockSpec((1, C_pad), lambda n, r: (0, 0)),
            ],
            out_specs=pl.BlockSpec((None, TH * Wo, C_pad),
                                   lambda n, r: (n, r, 0)),
        ),
        compiler_params=pltpu.CompilerParams(
            dimension_semantics=("parallel", "parallel"),
            vmem_limit_bytes=32 * 1024 * 1024),
        cost_estimate=pl.CostEstimate(
            flops=flops, transcendentals=0, bytes_accessed=bytes_accessed),
    )(x_p, w_hwio, b_row)

    # Slice off padded lanes and return NCHW to match the PyTorch module.
    # TODO(synk): consumers that accept NHWC could skip this layout pass.
    out = out[:, :, :C_out].reshape(N, Ho, Wo, C_out).transpose(0, 3, 1, 2)
    return out


# ---------------------------------------------------------------------------
# Parameter init mirroring _ConvNd.reset_parameters
# (kaiming_uniform a=sqrt(5) -> U(-1/sqrt(fan_in), 1/sqrt(fan_in)),
#  then fixed-point round).
# ---------------------------------------------------------------------------
def init_conv2d_params(key, in_channels, out_channels, kernel_size):
    KH, KW = kernel_size
    fan_in = in_channels * KH * KW
    bound = 1.0 / math.sqrt(fan_in)
    k_w, k_b = jax.random.split(key)
    weight = jax.random.uniform(
        k_w, (out_channels, in_channels, KH, KW),
        minval=-bound, maxval=bound, dtype=jnp.float32)
    bias = jax.random.uniform(
        k_b, (out_channels,), minval=-bound, maxval=bound, dtype=jnp.float32)
    return _fixed_round(weight), _fixed_round(bias)


def _reference_conv(x, weight, bias, stride, padding, dilation):
    out = jax.lax.conv_general_dilated(
        x.astype(jnp.float32), weight.astype(jnp.float32),
        window_strides=stride,
        padding=[(padding[0], padding[0]), (padding[1], padding[1])],
        rhs_dilation=dilation,
        dimension_numbers=("NCHW", "OIHW", "NCHW"))
    out = out + bias.reshape(1, -1, 1, 1)
    return _fixed_round(out)


if __name__ == "__main__":
    key = jax.random.PRNGKey(0)
    k_x, k_p = jax.random.split(key)

    N, C_in, H, W = 2, 4, 16, 16
    C_out, KH, KW = 8, 3, 3
    stride, padding, dilation = (1, 1), (1, 1), (1, 1)

    x = jax.random.normal(k_x, (N, C_in, H, W), dtype=jnp.float32)
    weight, bias = init_conv2d_params(k_p, C_in, C_out, (KH, KW))

    out = conv2d_fixed(x, weight, bias, stride, padding, dilation)
    out = jax.block_until_ready(out)

    ref = _reference_conv(x, weight, bias, stride, padding, dilation)
    assert out.shape == (N, C_out, H, W), out.shape
    # Allow at most one fixed-point quantization step of disagreement caused
    # by f32 accumulation-order differences at .5 rounding boundaries.
    max_err = float(jnp.max(jnp.abs(out - ref)))
    assert max_err <= (1.0 / _FIXED_SCALE) + 1e-6, max_err

    print("KERNEL_OK")
</pallas_src>

<mosaic_0001>
module attributes {stable_mosaic.version = 11 : i64} {
  func.func @_conv_taps_kernel(%arg0: i32, %arg1: i32, %arg2: memref<1x18x18x4xf32, #tpu.memory_space<vmem>>, %arg3: memref<3x3x4x128xf32, #tpu.memory_space<vmem>>, %arg4: memref<1x128xf32, #tpu.memory_space<vmem>>, %arg5: memref<1x256x128xf32, #tpu.memory_space<vmem>>) attributes {dimension_semantics = [#tpu.dimension_semantics<parallel>, #tpu.dimension_semantics<parallel>], iteration_bounds = array<i64: 2, 1>, scalar_prefetch = 0 : i64, scratch_operands = 0 : i64, tpu.core_type = #tpu.core_type<tc>, window_params = [{transform_indices = @transform_0, window_bounds = array<i64: 1, 18, 18, 4>}, {pipeline_mode = #tpu.pipeline_mode<synchronous>, transform_indices = @transform_1, window_bounds = array<i64: 3, 3, 4, 128>}, {pipeline_mode = #tpu.pipeline_mode<synchronous>, transform_indices = @transform_2, window_bounds = array<i64: 1, 128>}, {transform_indices = @transform_3, window_bounds = array<i64: 1, 256, 128>}]} {
    %c16_i32 = arith.constant 16 : i32
    %0 = arith.muli %arg1, %c16_i32 : i32
    %1 = tpu.assume_multiple %0, 16 : i32
    %cst = arith.constant 0.000000e+00 : f32
    %2 = vector.broadcast %cst : f32 to vector<256x128xf32>
    %c0 = arith.constant 0 : index
    %c0_0 = arith.constant 0 : index
    %3 = vector.load %arg4[%c0, %c0_0] : memref<1x128xf32, #tpu.memory_space<vmem>>, vector<1x128xf32>
    %4 = vector.broadcast %3 : vector<1x128xf32> to vector<256x128xf32>
    %5 = arith.addf %2, %4 : vector<256x128xf32>
    %c0_i32 = arith.constant 0 : i32
    %6 = arith.addi %1, %c0_i32 : i32
    %c0_1 = arith.constant 0 : index
    %7 = arith.index_cast %6 : i32 to index
    %c0_2 = arith.constant 0 : index
    %c0_3 = arith.constant 0 : index
    %8 = vector.load %arg2[%c0_1, %7, %c0_2, %c0_3] : memref<1x18x18x4xf32, #tpu.memory_space<vmem>>, vector<1x16x16x4xf32>
    %9 = vector.shape_cast %8 : vector<1x16x16x4xf32> to vector<16x16x4xf32>
    %10 = vector.shape_cast %9 : vector<16x16x4xf32> to vector<256x4xf32>
    %c0_4 = arith.constant 0 : index
    %c0_5 = arith.constant 0 : index
    %c0_6 = arith.constant 0 : index
    %c0_7 = arith.constant 0 : index
    %11 = vector.load %arg3[%c0_4, %c0_5, %c0_6, %c0_7] : memref<3x3x4x128xf32, #tpu.memory_space<vmem>>, vector<1x1x4x128xf32>
    %12 = vector.shape_cast %11 : vector<1x1x4x128xf32> to vector<4x128xf32>
    %cst_8 = arith.constant dense<0.000000e+00> : vector<256x128xf32>
    %13 = tpu.matmul %10, %12, %cst_8 {dimension_numbers = #tpu.dot_dimension_numbers<[1], [0], [0], [1], [0, 0, 1, 1], [], []>} : vector<256x4xf32>, vector<4x128xf32>, vector<256x128xf32> -> vector<256x128xf32>
    %14 = arith.addf %5, %13 : vector<256x128xf32>
    %c0_i32_9 = arith.constant 0 : i32
    %15 = arith.addi %1, %c0_i32_9 : i32
    %c0_10 = arith.constant 0 : index
    %16 = arith.index_cast %15 : i32 to index
    %c1 = arith.constant 1 : index
    %c0_11 = arith.constant 0 : index
    %17 = vector.load %arg2[%c0_10, %16, %c1, %c0_11] : memref<1x18x18x4xf32, #tpu.memory_space<vmem>>, vector<1x16x16x4xf32>
    %18 = vector.shape_cast %17 : vector<1x16x16x4xf32> to vector<16x16x4xf32>
    %19 = vector.shape_cast %18 : vector<16x16x4xf32> to vector<256x4xf32>
    %c0_12 = arith.constant 0 : index
    %c1_13 = arith.constant 1 : index
    %c0_14 = arith.constant 0 : index
    %c0_15 = arith.constant 0 : index
    %20 = vector.load %arg3[%c0_12, %c1_13, %c0_14, %c0_15] : memref<3x3x4x128xf32, #tpu.memory_space<vmem>>, vector<1x1x4x128xf32>
    %21 = vector.shape_cast %20 : vector<1x1x4x128xf32> to vector<4x128xf32>
    %cst_16 = arith.constant dense<0.000000e+00> : vector<256x128xf32>
    %22 = tpu.matmul %19, %21, %cst_16 {dimension_numbers = #tpu.dot_dimension_numbers<[1], [0], [0], [1], [0, 0, 1, 1], [], []>} : vector<256x4xf32>, vector<4x128xf32>, vector<256x128xf32> -> vector<256x128xf32>
    %23 = arith.addf %14, %22 : vector<256x128xf32>
    %c0_i32_17 = arith.constant 0 : i32
    %24 = arith.addi %1, %c0_i32_17 : i32
    %c0_18 = arith.constant 0 : index
    %25 = arith.index_cast %24 : i32 to index
    %c2 = arith.constant 2 : index
    %c0_19 = arith.constant 0 : index
    %26 = vector.load %arg2[%c0_18, %25, %c2, %c0_19] : memref<1x18x18x4xf32, #tpu.memory_space<vmem>>, vector<1x16x16x4xf32>
    %27 = vector.shape_cast %26 : vector<1x16x16x4xf32> to vector<16x16x4xf32>
    %28 = vector.shape_cast %27 : vector<16x16x4xf32> to vector<256x4xf32>
    %c0_20 = arith.constant 0 : index
    %c2_21 = arith.constant 2 : index
    %c0_22 = arith.constant 0 : index
    %c0_23 = arith.constant 0 : index
    %29 = vector.load %arg3[%c0_20, %c2_21, %c0_22, %c0_23] : memref<3x3x4x128xf32, #tpu.memory_space<vmem>>, vector<1x1x4x128xf32>
    %30 = vector.shape_cast %29 : vector<1x1x4x128xf32> to vector<4x128xf32>
    %cst_24 = arith.constant dense<0.000000e+00> : vector<256x128xf32>
    %31 = tpu.matmul %28, %30, %cst_24 {dimension_numbers = #tpu.dot_dimension_numbers<[1], [0], [0], [1], [0, 0, 1, 1], [], []>} : vector<256x4xf32>, vector<4x128xf32>, vector<256x128xf32> -> vector<256x128xf32>
    %32 = arith.addf %23, %31 : vector<256x128xf32>
    %c1_i32 = arith.constant 1 : i32
    %33 = arith.addi %1, %c1_i32 : i32
    %c0_25 = arith.constant 0 : index
    %34 = arith.index_cast %33 : i32 to index
    %c0_26 = arith.constant 0 : index
    %c0_27 = arith.constant 0 : index
    %35 = vector.load %arg2[%c0_25, %34, %c0_26, %c0_27] : memref<1x18x18x4xf32, #tpu.memory_space<vmem>>, vector<1x16x16x4xf32>
    %36 = vector.shape_cast %35 : vector<1x16x16x4xf32> to vector<16x16x4xf32>
    %37 = vector.shape_cast %36 : vector<16x16x4xf32> to vector<256x4xf32>
    %c1_28 = arith.constant 1 : index
    %c0_29 = arith.constant 0 : index
    %c0_30 = arith.constant 0 : index
    %c0_31 = arith.constant 0 : index
    %38 = vector.load %arg3[%c1_28, %c0_29, %c0_30, %c0_31] : memref<3x3x4x128xf32, #tpu.memory_space<vmem>>, vector<1x1x4x128xf32>
    %39 = vector.shape_cast %38 : vector<1x1x4x128xf32> to vector<4x128xf32>
    %cst_32 = arith.constant dense<0.000000e+00> : vector<256x128xf32>
    %40 = tpu.matmul %37, %39, %cst_32 {dimension_numbers = #tpu.dot_dimension_numbers<[1], [0], [0], [1], [0, 0, 1, 1], [], []>} : vector<256x4xf32>, vector<4x128xf32>, vector<256x128xf32> -> vector<256x128xf32>
    %41 = arith.addf %32, %40 : vector<256x128xf32>
    %c1_i32_33 = arith.constant 1 : i32
    %42 = arith.addi %1, %c1_i32_33 : i32
    %c0_34 = arith.constant 0 : index
    %43 = arith.index_cast %42 : i32 to index
    %c1_35 = arith.constant 1 : index
    %c0_36 = arith.constant 0 : index
    %44 = vector.load %arg2[%c0_34, %43, %c1_35, %c0_36] : memref<1x18x18x4xf32, #tpu.memory_space<vmem>>, vector<1x16x16x4xf32>
    %45 = vector.shape_cast %44 : vector<1x16x16x4xf32> to vector<16x16x4xf32>
    %46 = vector.shape_cast %45 : vector<16x16x4xf32> to vector<256x4xf32>
    %c1_37 = arith.constant 1 : index
    %c1_38 = arith.constant 1 : index
    %c0_39 = arith.constant 0 : index
    %c0_40 = arith.constant 0 : index
    %47 = vector.load %arg3[%c1_37, %c1_38, %c0_39, %c0_40] : memref<3x3x4x128xf32, #tpu.memory_space<vmem>>, vector<1x1x4x128xf32>
    %48 = vector.shape_cast %47 : vector<1x1x4x128xf32> to vector<4x128xf32>
    %cst_41 = arith.constant dense<0.000000e+00> : vector<256x128xf32>
    %49 = tpu.matmul %46, %48, %cst_41 {dimension_numbers = #tpu.dot_dimension_numbers<[1], [0], [0], [1], [0, 0, 1, 1], [], []>} : vector<256x4xf32>, vector<4x128xf32>, vector<256x128xf32> -> vector<256x128xf32>
    %50 = arith.addf %41, %49 : vector<256x128xf32>
    %c1_i32_42 = arith.constant 1 : i32
    %51 = arith.addi %1, %c1_i32_42 : i32
    %c0_43 = arith.constant 0 : index
    %52 = arith.index_cast %51 : i32 to index
    %c2_44 = arith.constant 2 : index
    %c0_45 = arith.constant 0 : index
    %53 = vector.load %arg2[%c0_43, %52, %c2_44, %c0_45] : memref<1x18x18x4xf32, #tpu.memory_space<vmem>>, vector<1x16x16x4xf32>
    %54 = vector.shape_cast %53 : vector<1x16x16x4xf32> to vector<16x16x4xf32>
    %55 = vector.shape_cast %54 : vector<16x16x4xf32> to vector<256x4xf32>
    %c1_46 = arith.constant 1 : index
    %c2_47 = arith.constant 2 : index
    %c0_48 = arith.constant 0 : index
    %c0_49 = arith.constant 0 : index
    %56 = vector.load %arg3[%c1_46, %c2_47, %c0_48, %c0_49] : memref<3x3x4x128xf32, #tpu.memory_space<vmem>>, vector<1x1x4x128xf32>
    %57 = vector.shape_cast %56 : vector<1x1x4x128xf32> to vector<4x128xf32>
    %cst_50 = arith.constant dense<0.000000e+00> : vector<256x128xf32>
    %58 = tpu.matmul %55, %57, %cst_50 {dimension_numbers = #tpu.dot_dimension_numbers<[1], [0], [0], [1], [0, 0, 1, 1], [], []>} : vector<256x4xf32>, vector<4x128xf32>, vector<256x128xf32> -> vector<256x128xf32>
    %59 = arith.addf %50, %58 : vector<256x128xf32>
    %c2_i32 = arith.constant 2 : i32
    %60 = arith.addi %1, %c2_i32 : i32
    %c0_51 = arith.constant 0 : index
    %61 = arith.index_cast %60 : i32 to index
    %c0_52 = arith.constant 0 : index
    %c0_53 = arith.constant 0 : index
    %62 = vector.load %arg2[%c0_51, %61, %c0_52, %c0_53] : memref<1x18x18x4xf32, #tpu.memory_space<vmem>>, vector<1x16x16x4xf32>
    %63 = vector.shape_cast %62 : vector<1x16x16x4xf32> to vector<16x16x4xf32>
    %64 = vector.shape_cast %63 : vector<16x16x4xf32> to vector<256x4xf32>
    %c2_54 = arith.constant 2 : index
    %c0_55 = arith.constant 0 : index
    %c0_56 = arith.constant 0 : index
    %c0_57 = arith.constant 0 : index
    %65 = vector.load %arg3[%c2_54, %c0_55, %c0_56, %c0_57] : memref<3x3x4x128xf32, #tpu.memory_space<vmem>>, vector<1x1x4x128xf32>
    %66 = vector.shape_cast %65 : vector<1x1x4x128xf32> to vector<4x128xf32>
    %cst_58 = arith.constant dense<0.000000e+00> : vector<256x128xf32>
    %67 = tpu.matmul %64, %66, %cst_58 {dimension_numbers = #tpu.dot_dimension_numbers<[1], [0], [0], [1], [0, 0, 1, 1], [], []>} : vector<256x4xf32>, vector<4x128xf32>, vector<256x128xf32> -> vector<256x128xf32>
    %68 = arith.addf %59, %67 : vector<256x128xf32>
    %c2_i32_59 = arith.constant 2 : i32
    %69 = arith.addi %1, %c2_i32_59 : i32
    %c0_60 = arith.constant 0 : index
    %70 = arith.index_cast %69 : i32 to index
    %c1_61 = arith.constant 1 : index
    %c0_62 = arith.constant 0 : index
    %71 = vector.load %arg2[%c0_60, %70, %c1_61, %c0_62] : memref<1x18x18x4xf32, #tpu.memory_space<vmem>>, vector<1x16x16x4xf32>
    %72 = vector.shape_cast %71 : vector<1x16x16x4xf32> to vector<16x16x4xf32>
    %73 = vector.shape_cast %72 : vector<16x16x4xf32> to vector<256x4xf32>
    %c2_63 = arith.constant 2 : index
    %c1_64 = arith.constant 1 : index
    %c0_65 = arith.constant 0 : index
    %c0_66 = arith.constant 0 : index
    %74 = vector.load %arg3[%c2_63, %c1_64, %c0_65, %c0_66] : memref<3x3x4x128xf32, #tpu.memory_space<vmem>>, vector<1x1x4x128xf32>
    %75 = vector.shape_cast %74 : vector<1x1x4x128xf32> to vector<4x128xf32>
    %cst_67 = arith.constant dense<0.000000e+00> : vector<256x128xf32>
    %76 = tpu.matmul %73, %75, %cst_67 {dimension_numbers = #tpu.dot_dimension_numbers<[1], [0], [0], [1], [0, 0, 1, 1], [], []>} : vector<256x4xf32>, vector<4x128xf32>, vector<256x128xf32> -> vector<256x128xf32>
    %77 = arith.addf %68, %76 : vector<256x128xf32>
    %c2_i32_68 = arith.constant 2 : i32
    %78 = arith.addi %1, %c2_i32_68 : i32
    %c0_69 = arith.constant 0 : index
    %79 = arith.index_cast %78 : i32 to index
    %c2_70 = arith.constant 2 : index
    %c0_71 = arith.constant 0 : index
    %80 = vector.load %arg2[%c0_69, %79, %c2_70, %c0_71] : memref<1x18x18x4xf32, #tpu.memory_space<vmem>>, vector<1x16x16x4xf32>
    %81 = vector.shape_cast %80 : vector<1x16x16x4xf32> to vector<16x16x4xf32>
    %82 = vector.shape_cast %81 : vector<16x16x4xf32> to vector<256x4xf32>
    %c2_72 = arith.constant 2 : index
    %c2_73 = arith.constant 2 : index
    %c0_74 = arith.constant 0 : index
    %c0_75 = arith.constant 0 : index
    %83 = vector.load %arg3[%c2_72, %c2_73, %c0_74, %c0_75] : memref<3x3x4x128xf32, #tpu.memory_space<vmem>>, vector<1x1x4x128xf32>
    %84 = vector.shape_cast %83 : vector<1x1x4x128xf32> to vector<4x128xf32>
    %cst_76 = arith.constant dense<0.000000e+00> : vector<256x128xf32>
    %85 = tpu.matmul %82, %84, %cst_76 {dimension_numbers = #tpu.dot_dimension_numbers<[1], [0], [0], [1], [0, 0, 1, 1], [], []>} : vector<256x4xf32>, vector<4x128xf32>, vector<256x128xf32> -> vector<256x128xf32>
    %86 = arith.addf %77, %85 : vector<256x128xf32>
    %cst_77 = arith.constant 2.560000e+02 : f32
    %87 = vector.broadcast %cst_77 : f32 to vector<256x128xf32>
    %88 = arith.mulf %86, %87 : vector<256x128xf32>
    %89 = math.roundeven %88 : vector<256x128xf32>
    %cst_78 = arith.constant 3.906250e-03 : f32
    %90 = vector.broadcast %cst_78 : f32 to vector<256x128xf32>
    %91 = arith.mulf %89, %90 : vector<256x128xf32>
    %c0_79 = arith.constant 0 : index
    %c0_80 = arith.constant 0 : index
    %c0_81 = arith.constant 0 : index
    %92 = vector.load %arg5[%c0_79, %c0_80, %c0_81] : memref<1x256x128xf32, #tpu.memory_space<vmem>>, vector<1x256x128xf32>
    %93 = vector.shape_cast %92 : vector<1x256x128xf32> to vector<256x128xf32>
    %94 = vector.shape_cast %91 : vector<256x128xf32> to vector<1x256x128xf32>
    tpu.vector_store %arg5[%c0_79, %c0_80, %c0_81], %94 {strides = array<i32>} : memref<1x256x128xf32, #tpu.memory_space<vmem>>, vector<1x256x128xf32>,
    return
  }
  func.func @transform_0(%arg0: i32, %arg1: i32) -> (i32, i32, i32, i32) {
    %c0_i32 = arith.constant 0 : i32
    %c0_i32_0 = arith.constant 0 : i32
    %c0_i32_1 = arith.constant 0 : i32
    %c0_i32_2 = arith.constant 0 : i32
    return %arg0, %c0_i32, %c0_i32_0, %c0_i32_1 : i32, i32, i32, i32
  }
  func.func @transform_1(%arg0: i32, %arg1: i32) -> (i32, i32, i32, i32) {
    %c0_i32 = arith.constant 0 : i32
    %c0_i32_0 = arith.constant 0 : i32
    %c0_i32_1 = arith.constant 0 : i32
    %c0_i32_2 = arith.constant 0 : i32
    %c0_i32_3 = arith.constant 0 : i32
    return %c0_i32, %c0_i32_0, %c0_i32_1, %c0_i32_2 : i32, i32, i32, i32
  }
  func.func @transform_2(%arg0: i32, %arg1: i32) -> (i32, i32) {
    %c0_i32 = arith.constant 0 : i32
    %c0_i32_0 = arith.constant 0 : i32
    %c0_i32_1 = arith.constant 0 : i32
    return %c0_i32, %c0_i32_0 : i32, i32
  }
  func.func @transform_3(%arg0: i32, %arg1: i32) -> (i32, i32, i32) {
    %c0_i32 = arith.constant 0 : i32
    %c0_i32_0 = arith.constant 0 : i32
    return %arg0, %arg1, %c0_i32 : i32, i32, i32
  }
}

</mosaic_0001>

<llo_original>
// kernel: tpu_custom_call.1
$region0: #{tpu_custom_call.1}
  #allocation0 [shape = 'u32[]', space=smem, size = 0x4, offset = 0x4, fixed_abs, tag = 'smem constant byte address 0x4 - core index']
  #allocation1 [shape = 'u32[144,128]{1,0:T(1,128)}', space=vmem, size = 0x12000, scoped, tag = 'internal scratch']
  %s0 = inlined_call_operand.vmem [shape: f32[2,18,18,4], index: 0, kind: input, shape index: {}]
  %s1 = inlined_call_operand.vmem [shape: f32[3,3,4,128], index: 1, kind: input, shape index: {}]
  %s2 = inlined_call_operand.vmem [shape: f32[1,128], index: 2, kind: input, shape index: {}]
  %s3 = inlined_call_operand.hbm [shape: f32[2,256,128], index: 3, kind: output, shape index: {}]
  %s4 = sld [smem:[#allocation0]]
  $region45: #{tpu_custom_call.1} parent=0
    _
  %s6 = ssub.s32 1, %s4
  %s7 = scalar_select 0, %s6, %s4
  $region1: #{tpu_custom_call.1} parent=0
    #allocation2 [shape = 'u8[262144]{0}', space=vmem, size = 0x40000, scoped, tag = 'output window, operand 0']
    #allocation3 [shape = 's32[2]{0}', space=sflag, size = 0x8, scoped, tag = 'scoped memory for tpu_custom_call.1']
    %8 = vsyncpa [#allocation3], 0
    %s9 = scalar_lea.sflag [#allocation3], 1
    %10 = vsyncpa %s9, 0
    loop: start=0, step=1, limit=4
    $region2: #{tpu_custom_call.1} parent=1 // loop_pre_header
      _
    $region3: #{tpu_custom_call.1} parent=1 // loop_header
      %s12 = sphi 0, %s16
      %p13 = scmp.ge.s32.totalorder %s12, 4
      %s19 = sphi 0, %s31
      %s20 = sphi 0, %s27
      %s21 = sphi 0, %s19
      %s22 = sphi 0, %s20
      %s23 = sphi 0, %s21
      %s24 = sphi 0, %s22
      %s34 = sphi 0, %s36
      %s37 = sphi 0, %s34
      %s38 = sphi 0, %s37
      %s54 = sphi 0, %s38
      %s58 = sphi 0, %s58
      %s60 = sphi 0, %s58
      %s61 = sphi 0, %s60
      %s75 = sphi 0, %s61
      %s79 = sphi 0, %s79
      %s81 = sphi 0, %s79
      %s82 = sphi 0, %s81
      %s96 = sphi 0, %s82
      %s104 = sphi 0, %s106
      %s107 = sphi 0, %s104
      %s108 = sphi 0, %s107
      %s124 = sphi 0, %s108
    $region4: #{tpu_custom_call.1} parent=1 // loop_header_branch
      %15 = sbr.rel (%p13) target = $region8
    $region5: #{tpu_custom_call.1} parent=1 // loop_body
      %s17 = ssub.s32 %s12, 1
      %s18 = ssub.s32 %s12, 2
      %s25 = sadd.s32 1, %s20
      %p26 = scmp.ge.s32.totalorder %s25, 1
      %s27 = scalar_select %p26, 0, %s25
      %s28 = sadd.s32 1, %s19
      %s29 = scalar_select %p26, %s28, %s19
      %p30 = scmp.ge.s32.totalorder %s29, 2
      %s31 = scalar_select %p30, 0, %s29
      %s32 = ssub.s32 %s19, %s31
      %p33 = scmp.eq.s32.totalorder %s32, 0
      %s35 = sadd.s32 %s34, 1
      %s36 = scalar_select %p33, %s34, %s35
      %p39 = pneg %p33
      %p40 = scmp.eq.s32.totalorder %s12, 1
      %p41 = por %p39, %p40
      %p42 = scmp.ne.s32.totalorder %s34, %s37
      %p43 = scmp.eq.s32.totalorder %s12, 0
      %p44 = por %p42, %p43
      %p45 = scmp.ne.s32.totalorder %s34, %s37
      %p46 = scmp.eq.s32.totalorder %s17, 1
      %p47 = por %p45, %p46
      %p48 = scmp.ne.s32.totalorder %s37, %s38
      %p49 = scmp.eq.s32.totalorder %s17, 0
      %p50 = por %p48, %p49
      %p51 = scmp.ne.s32.totalorder %s37, %s38
      %p52 = scmp.eq.s32.totalorder %s18, 1
      %p53 = por %p51, %p52
      %p55 = scmp.ne.s32.totalorder %s38, %s54
      %p56 = scmp.eq.s32.totalorder %s18, 0
      %p57 = por %p55, %p56
      %s59 = sadd.s32 %s58, 1
      %p62 = scmp.eq.s32.totalorder %s12, 1
      %p63 = scmp.ne.s32.totalorder %s58, %s60
      %p64 = scmp.eq.s32.totalorder %s12, 0
      %p65 = por %p63, %p64
      %p66 = scmp.ne.s32.totalorder %s58, %s60
      %p67 = scmp.eq.s32.totalorder %s17, 1
      %p68 = por %p66, %p67
      %p69 = scmp.ne.s32.totalorder %s60, %s61
      %p70 = scmp.eq.s32.totalorder %s17, 0
      %p71 = por %p69, %p70
      %p72 = scmp.ne.s32.totalorder %s60, %s61
      %p73 = scmp.eq.s32.totalorder %s18, 1
      %p74 = por %p72, %p73
      %p76 = scmp.ne.s32.totalorder %s61, %s75
      %p77 = scmp.eq.s32.totalorder %s18, 0
      %p78 = por %p76, %p77
      %s80 = sadd.s32 %s79, 1
      %p83 = scmp.eq.s32.totalorder %s12, 1
      %p84 = scmp.ne.s32.totalorder %s79, %s81
      %p85 = scmp.eq.s32.totalorder %s12, 0
      %p86 = por %p84, %p85
      %p87 = scmp.ne.s32.totalorder %s79, %s81
      %p88 = scmp.eq.s32.totalorder %s17, 1
      %p89 = por %p87, %p88
      %p90 = scmp.ne.s32.totalorder %s81, %s82
      %p91 = scmp.eq.s32.totalorder %s17, 0
      %p92 = por %p90, %p91
      %p93 = scmp.ne.s32.totalorder %s81, %s82
      %p94 = scmp.eq.s32.totalorder %s18, 1
      %p95 = por %p93, %p94
      %p97 = scmp.ne.s32.totalorder %s82, %s96
      %p98 = scmp.eq.s32.totalorder %s18, 0
      %p99 = por %p97, %p98
      %s100 = ssub.s32 %s19, %s31
      %s101 = ssub.s32 %s20, %s27
      %s102 = sor.u32 %s100, %s101
      %p103 = scmp.eq.s32.totalorder %s102, 0
      %s105 = sadd.s32 %s104, 1
      %s106 = scalar_select %p103, %s104, %s105
      %p109 = pneg %p103
      %p110 = scmp.eq.s32.totalorder %s12, 1
      %p111 = por %p109, %p110
      %p112 = scmp.ne.s32.totalorder %s104, %s107
      %p113 = scmp.eq.s32.totalorder %s12, 0
      %p114 = por %p112, %p113
      %p115 = scmp.ne.s32.totalorder %s104, %s107
      %p116 = scmp.eq.s32.totalorder %s17, 1
      %p117 = por %p115, %p116
      %p118 = scmp.ne.s32.totalorder %s107, %s108
      %p119 = scmp.eq.s32.totalorder %s17, 0
      %p120 = por %p118, %p119
      %p121 = scmp.ne.s32.totalorder %s107, %s108
      %p122 = scmp.eq.s32.totalorder %s18, 1
      %p123 = por %p121, %p122
      %p125 = scmp.ne.s32.totalorder %s108, %s124
      %p126 = scmp.eq.s32.totalorder %s18, 0
      %p127 = por %p125, %p126
      %p128 = scmp.le.s32.totalorder 1, %s12
      %p129 = scmp.lt.s32.totalorder %s12, 3
      %p130 = pnand %p128, %p129
      %p131 = pneg %p130
      // Predicated region
      $region9: #{tpu_custom_call.1} parent=5 // pred_check
        _
      $region10: #{tpu_custom_call.1} parent=5 // pred_check_branch
        %133 = sbr.rel (%p130) target = $region12
      $region11: #{tpu_custom_call.1} parent=5 // pred_region
        %s134 = ssub.s32 %s12, 1
        // Predicated region
        $region13: #{tpu_custom_call.1} parent=11 // pred_check
          %p135 = pneg %p71
        $region14: #{tpu_custom_call.1} parent=11 // pred_check_branch
          %137 = sbr.rel (%p135) target = $region16
        $region15: #{tpu_custom_call.1} parent=11 // pred_region
          _
        $region16: #{tpu_custom_call.1} parent=11 // pred_fallthru
          _
        // Predicated region
        $region17: #{tpu_custom_call.1} parent=11 // pred_check
          %p138 = pneg %p92
        $region18: #{tpu_custom_call.1} parent=11 // pred_check_branch
          %140 = sbr.rel (%p138) target = $region20
        $region19: #{tpu_custom_call.1} parent=11 // pred_region
          _
        $region20: #{tpu_custom_call.1} parent=11 // pred_fallthru
          _
      $region12: #{tpu_custom_call.1} parent=5 // pred_fallthru
        _
      %p141 = scmp.lt.s32.totalorder %s12, 2
      // Predicated region
      $region21: #{tpu_custom_call.1} parent=5 // pred_check
        %p142 = pneg %p141
      $region22: #{tpu_custom_call.1} parent=5 // pred_check_branch
        %144 = sbr.rel (%p142) target = $region24
      $region23: #{tpu_custom_call.1} parent=5 // pred_region
        // Predicated region
        $region25: #{tpu_custom_call.1} parent=23 // pred_check
          %p145 = pneg %p44
        $region26: #{tpu_custom_call.1} parent=23 // pred_check_branch
          %147 = sbr.rel (%p145) target = $region28
        $region27: #{tpu_custom_call.1} parent=23 // pred_region
          %p148 = scmp.lt.s32.totalorder %s19, 1
          %s149 = scalar_select %p148, %s19, 1
          %s150 = smul.addr %s149, 54
          %s151 = smul.addr %s150, 8
          %s152 = scalar_lea.vmem %s0, %s151
        $region28: #{tpu_custom_call.1} parent=23 // pred_fallthru
          _
      $region24: #{tpu_custom_call.1} parent=5 // pred_fallthru
        _
      %p153 = scmp.le.s32.totalorder 1, %s12
      %p154 = scmp.lt.s32.totalorder %s12, 3
      %p155 = pnand %p153, %p154
      %p156 = pneg %p155
      // Predicated region
      $region29: #{tpu_custom_call.1} parent=5 // pred_check
        _
      $region30: #{tpu_custom_call.1} parent=5 // pred_check_branch
        %158 = sbr.rel (%p155) target = $region32
      $region31: #{tpu_custom_call.1} parent=5 // pred_region
        %s159 = ssub.s32 %s12, 1
        %p160 = scmp.lt.s32.totalorder %s21, 1
        %s161 = scalar_select %p160, %s21, 1
        %s162 = smul.addr %s161, 54
        %s163 = smul.addr %s162, 8
        %s164 = scalar_lea.vmem %s0, %s163
        %p165 = pneg %p50
        %p166 = pneg %p47
        %p167 = pneg %p71
        %p168 = pneg %p68
        %p169 = pneg %p92
        %p170 = pneg %p89
        %p171 = pneg %p120
        %p172 = pneg %p117
        %s173 = sand.u32 %s107, 1
        %s174 = scalar_lea.sflag [#allocation3], %s173
        %s175 = sand.u32 %s107, 1
        %s176 = smul.addr %s175, 256
        %s177 = scalar_lea.vmem [#allocation2], %s176
        %p178 = scmp.lt.s32.totalorder %s21, 1
        %s179 = scalar_select %p178, %s21, 1
        %s180 = smul.addr %s179, 54
        %s181 = smul.addr %s180, 8
        %s182 = scalar_lea.vmem %s0, %s181
        %s183 = smul.u32 32, %s22
        %s184 = smul.u32 %s22, 16
        %v185 = vld [vmem:[%s2] sm:$0x1]
        %v187 = vlaneseq
        %v188 = vshrl.u32 %v187, 7
        %v189 = vsub.s32 0, %v188
        %v190 = vrot.slane %v185, %v189
        %v192 = vadd.f32 %v190, 0.0
        %s193 = smul.u32 %s184, 24
        %s194 = scalar_lea.vmem %s182, %s193
        %v195 = vld [vmem:[%s194] sm:$0xff]
        %v196 = vld [vmem:[%s194 + $0x8] sm:$0xff]
        %v197 = vld [vmem:[%s194 + $0x18] sm:$0xff]
        %v198 = vld [vmem:[%s194 + $0x20] sm:$0xff]
        %v199 = vld [vmem:[%s194 + $0x30] sm:$0xff]
        %v200 = vld [vmem:[%s194 + $0x38] sm:$0xff]
        %v201 = vld [vmem:[%s194 + $0x48] sm:$0xff]
        %v202 = vld [vmem:[%s194 + $0x50] sm:$0xff]
        %v203 = vld [vmem:[%s194 + $0x60] sm:$0xff]
        %v204 = vld [vmem:[%s194 + $0x68] sm:$0xff]
        %v205 = vld [vmem:[%s194 + $0x78] sm:$0xff]
        %v206 = vld [vmem:[%s194 + $0x80] sm:$0xff]
        %v207 = vld [vmem:[%s194 + $0x90] sm:$0xff]
        %v208 = vld [vmem:[%s194 + $0x98] sm:$0xff]
        %v209 = vld [vmem:[%s194 + $0xa8] sm:$0xff]
        %v210 = vld [vmem:[%s194 + $0xb0] sm:$0xff]
        %v211 = vld [vmem:[%s194 + $0xc0] sm:$0xff]
        %v212 = vld [vmem:[%s194 + $0xc8] sm:$0xff]
        %v213 = vld [vmem:[%s194 + $0xd8] sm:$0xff]
        %v214 = vld [vmem:[%s194 + $0xe0] sm:$0xff]
        %v215 = vld [vmem:[%s194 + $0xf0] sm:$0xff]
        %v216 = vld [vmem:[%s194 + $0xf8] sm:$0xff]
        %v217 = vld [vmem:[%s194 + $0x108] sm:$0xff]
        %v218 = vld [vmem:[%s194 + $0x110] sm:$0xff]
        %v219 = vld [vmem:[%s194 + $0x120] sm:$0xff]
        %v220 = vld [vmem:[%s194 + $0x128] sm:$0xff]
        %v221 = vld [vmem:[%s194 + $0x138] sm:$0xff]
        %v222 = vld [vmem:[%s194 + $0x140] sm:$0xff]
        %v223 = vld [vmem:[%s194 + $0x150] sm:$0xff]
        %v224 = vld [vmem:[%s194 + $0x158] sm:$0xff]
        %v225 = vld [vmem:[%s194 + $0x168] sm:$0xff]
        %v226 = vld [vmem:[%s194 + $0x170] sm:$0xff]
        %v227 = vld [vmem:[%s1] sm:$0xf]
        %vm228 = vcmask 31744
        %v230 = vsel %vm228, %v195, 0
        %v233 = vsel %vm228, %v196, 0
        %v236 = vsel %vm228, %v197, 0
        %v239 = vsel %vm228, %v198, 0
        %v242 = vsel %vm228, %v199, 0
        %v245 = vsel %vm228, %v200, 0
        %v248 = vsel %vm228, %v201, 0
        %v251 = vsel %vm228, %v202, 0
        %v254 = vsel %vm228, %v203, 0
        %v257 = vsel %vm228, %v204, 0
        %v260 = vsel %vm228, %v205, 0
        %v263 = vsel %vm228, %v206, 0
        %v266 = vsel %vm228, %v207, 0
        %v269 = vsel %vm228, %v208, 0
        %v272 = vsel %vm228, %v209, 0
        %v275 = vsel %vm228, %v210, 0
        %v278 = vsel %vm228, %v211, 0
        %v281 = vsel %vm228, %v212, 0
        %v284 = vsel %vm228, %v213, 0
        %v287 = vsel %vm228, %v214, 0
        %v290 = vsel %vm228, %v215, 0
        %v293 = vsel %vm228, %v216, 0
        %v296 = vsel %vm228, %v217, 0
        %v299 = vsel %vm228, %v218, 0
        %v302 = vsel %vm228, %v219, 0
        %v305 = vsel %vm228, %v220, 0
        %v308 = vsel %vm228, %v221, 0
        %v311 = vsel %vm228, %v222, 0
        %v314 = vsel %vm228, %v223, 0
        %v317 = vsel %vm228, %v224, 0
        %v320 = vsel %vm228, %v225, 0
        %v323 = vsel %vm228, %v226, 0
        %vm325 = vcmask 1043456
        %v327 = vsel %vm325, %v227, 0
        %329 = vmatprep.subr.mxu0 0.0
        %330 = vmatpush1.msra.mxu0 %v327
        %331 = vmatprep.subr.mxu0 0.0
        %332 = vmatpush1.msra.mxu0 0.0
        %333 = vmatprep.subr.mxu0 0.0
        %334 = vmatpush1.msra.mxu0 0.0
        %335 = vmatprep.subr.mxu0 0.0
        %336 = vmatpush1.msra.mxu0 0.0
        %337 = vmatprep.subr.mxu0 0.0
        %338 = vmatpush1.msra.mxu0 0.0
        %339 = vmatprep.subr.mxu0 0.0
        %340 = vmatpush1.msra.mxu0 0.0
        %341 = vmatprep.subr.mxu0 0.0
        %342 = vmatpush1.msra.mxu0 0.0
        %343 = vmatprep.subr.mxu0 0.0
        %344 = vmatpush1.msra.mxu0 0.0
        %345 = vmatprep.subr.mxu0 0.0
        %346 = vmatpush1.msra.mxu0 0.0
        %347 = vmatprep.subr.mxu0 0.0
        %348 = vmatpush1.msra.mxu0 0.0
        %349 = vmatprep.subr.mxu0 0.0
        %350 = vmatpush1.msra.mxu0 0.0
        %351 = vmatprep.subr.mxu0 0.0
        %352 = vmatpush1.msra.mxu0 0.0
        %353 = vmatprep.subr.mxu0 0.0
        %354 = vmatpush1.msra.mxu0 0.0
        %355 = vmatprep.subr.mxu0 0.0
        %356 = vmatpush1.msra.mxu0 0.0
        %357 = vmatprep.subr.mxu0 0.0
        %358 = vmatpush1.msra.mxu0 0.0
        %359 = vmatprep.subr.mxu0 0.0
        %360 = vmatpush1.msra.mxu0 0.0
        %361 = vmatprep.subr.mxu0 0.0
        %362 = vmatpush1.msra.mxu0 0.0
        %363 = vmatprep.subr.mxu0 0.0
        %364 = vmatpush1.msra.mxu0 0.0
        %365 = vmatprep.subr.mxu0 0.0
        %366 = vmatpush1.msra.mxu0 0.0
        %367 = vmatprep.subr.mxu0 0.0
        %368 = vmatpush1.msra.mxu0 0.0
        %369 = vmatprep.subr.mxu0 0.0
        %370 = vmatpush1.msra.mxu0 0.0
        %371 = vmatprep.subr.mxu0 0.0
        %372 = vmatpush1.msra.mxu0 0.0
        %373 = vmatprep.subr.mxu0 0.0
        %374 = vmatpush1.msra.mxu0 0.0
        %375 = vmatprep.subr.mxu0 0.0
        %376 = vmatpush1.msra.mxu0 0.0
        %377 = vmatprep.subr.mxu0 0.0
        %378 = vmatpush1.msra.mxu0 0.0
        %379 = vmatprep.subr.mxu0 0.0
        %380 = vmatpush1.msra.mxu0 0.0
        %381 = vmatprep.subr.mxu0 0.0
        %382 = vmatpush1.msra.mxu0 0.0
        %383 = vmatprep.subr.mxu0 0.0
        %384 = vmatpush1.msra.mxu0 0.0
        %385 = vmatprep.subr.mxu0 0.0
        %386 = vmatpush1.msra.mxu0 0.0
        %387 = vmatprep.subr.mxu0 0.0
        %388 = vmatpush1.msra.mxu0 0.0
        %389 = vmatprep.subr.mxu0 0.0
        %390 = vmatpush1.msra.mxu0 0.0
        %391 = vmatprep.subr.mxu0 0.0
        %392 = vmatpush1.msra.mxu0 0.0
        %393 = vmatprep.mubr.f32.mxu0 0.0
        %394 = vmatmul.mubr.f32.gmra.mrb[0].mxu0 %v230
        %v395 = vpop.f32.mrb[0].mxu0
        %v396 = vadd.f32 0.0, %v395
        %v397 = vpop.f32.mrb[0].mxu0
        %398 = vmatprep.mubr.f32.mxu0 0.0
        %399 = vmatmul.mubr.f32.gmra.mrb[0].mxu0 %v233
        %v400 = vpop.f32.mrb[0].mxu0
        %v401 = vadd.f32 0.0, %v400
        %v402 = vpop.f32.mrb[0].mxu0
        %403 = vmatprep.mubr.f32.mxu0 0.0
        %404 = vmatmul.mubr.f32.gmra.mrb[0].mxu0 %v236
        %v405 = vpop.f32.mrb[0].mxu0
        %v406 = vadd.f32 0.0, %v405
        %v407 = vpop.f32.mrb[0].mxu0
        %408 = vmatprep.mubr.f32.mxu0 0.0
        %409 = vmatmul.mubr.f32.gmra.mrb[0].mxu0 %v239
        %v410 = vpop.f32.mrb[0].mxu0
        %v411 = vadd.f32 0.0, %v410
        %v412 = vpop.f32.mrb[0].mxu0
        %413 = vmatprep.mubr.f32.mxu0 0.0
        %414 = vmatmul.mubr.f32.gmra.mrb[0].mxu0 %v242
        %v415 = vpop.f32.mrb[0].mxu0
        %v416 = vadd.f32 0.0, %v415
        %v417 = vpop.f32.mrb[0].mxu0
        %418 = vmatprep.mubr.f32.mxu0 0.0
        %419 = vmatmul.mubr.f32.gmra.mrb[0].mxu0 %v245
        %v420 = vpop.f32.mrb[0].mxu0
        %v421 = vadd.f32 0.0, %v420
        %v422 = vpop.f32.mrb[0].mxu0
        %423 = vmatprep.mubr.f32.mxu0 0.0
        %424 = vmatmul.mubr.f32.gmra.mrb[0].mxu0 %v248
        %v425 = vpop.f32.mrb[0].mxu0
        %v426 = vadd.f32 0.0, %v425
        %v427 = vpop.f32.mrb[0].mxu0
        %428 = vmatprep.mubr.f32.mxu0 0.0
        %429 = vmatmul.mubr.f32.gmra.mrb[0].mxu0 %v251
        %v430 = vpop.f32.mrb[0].mxu0
        %v431 = vadd.f32 0.0, %v430
        %v432 = vpop.f32.mrb[0].mxu0
        %433 = vmatprep.mubr.f32.mxu0 0.0
        %434 = vmatmul.mubr.f32.gmra.mrb[0].mxu0 %v254
        %v435 = vpop.f32.mrb[0].mxu0
        %v436 = vadd.f32 0.0, %v435
        %v437 = vpop.f32.mrb[0].mxu0
        %438 = vmatprep.mubr.f32.mxu0 0.0
        %439 = vmatmul.mubr.f32.gmra.mrb[0].mxu0 %v257
        %v440 = vpop.f32.mrb[0].mxu0
        %v441 = vadd.f32 0.0, %v440
        %v442 = vpop.f32.mrb[0].mxu0
        %443 = vmatprep.mubr.f32.mxu0 0.0
        %444 = vmatmul.mubr.f32.gmra.mrb[0].mxu0 %v260
        %v445 = vpop.f32.mrb[0].mxu0
        %v446 = vadd.f32 0.0, %v445
        %v447 = vpop.f32.mrb[0].mxu0
        %448 = vmatprep.mubr.f32.mxu0 0.0
        %449 = vmatmul.mubr.f32.gmra.mrb[0].mxu0 %v263
        %v450 = vpop.f32.mrb[0].mxu0
        %v451 = vadd.f32 0.0, %v450
        %v452 = vpop.f32.mrb[0].mxu0
        %453 = vmatprep.mubr.f32.mxu0 0.0
        %454 = vmatmul.mubr.f32.gmra.mrb[0].mxu0 %v266
        %v455 = vpop.f32.mrb[0].mxu0
        %v456 = vadd.f32 0.0, %v455
        %v457 = vpop.f32.mrb[0].mxu0
        %458 = vmatprep.mubr.f32.mxu0 0.0
        %459 = vmatmul.mubr.f32.gmra.mrb[0].mxu0 %v269
        %v460 = vpop.f32.mrb[0].mxu0
        %v461 = vadd.f32 0.0, %v460
        %v462 = vpop.f32.mrb[0].mxu0
        %463 = vmatprep.mubr.f32.mxu0 0.0
        %464 = vmatmul.mubr.f32.gmra.mrb[0].mxu0 %v272
        %v465 = vpop.f32.mrb[0].mxu0
        %v466 = vadd.f32 0.0, %v465
        %v467 = vpop.f32.mrb[0].mxu0
        %468 = vmatprep.mubr.f32.mxu0 0.0
        %469 = vmatmul.mubr.f32.gmra.mrb[0].mxu0 %v275
        %v470 = vpop.f32.mrb[0].mxu0
        %v471 = vadd.f32 0.0, %v470
        %v472 = vpop.f32.mrb[0].mxu0
        %473 = vmatprep.mubr.f32.mxu0 0.0
        %474 = vmatmul.mubr.f32.gmra.mrb[0].mxu0 %v278
        %v475 = vpop.f32.mrb[0].mxu0
        %v476 = vadd.f32 0.0, %v475
        %v477 = vpop.f32.mrb[0].mxu0
        %478 = vmatprep.mubr.f32.mxu0 0.0
        %479 = vmatmul.mubr.f32.gmra.mrb[0].mxu0 %v281
        %v480 = vpop.f32.mrb[0].mxu0
        %v481 = vadd.f32 0.0, %v480
        %v482 = vpop.f32.mrb[0].mxu0
        %483 = vmatprep.mubr.f32.mxu0 0.0
        %484 = vmatmul.mubr.f32.gmra.mrb[0].mxu0 %v284
        %v485 = vpop.f32.mrb[0].mxu0
        %v486 = vadd.f32 0.0, %v485
        %v487 = vpop.f32.mrb[0].mxu0
        %488 = vmatprep.mubr.f32.mxu0 0.0
        %489 = vmatmul.mubr.f32.gmra.mrb[0].mxu0 %v287
        %v490 = vpop.f32.mrb[0].mxu0
        %v491 = vadd.f32 0.0, %v490
        %v492 = vpop.f32.mrb[0].mxu0
        %493 = vmatprep.mubr.f32.mxu0 0.0
        %494 = vmatmul.mubr.f32.gmra.mrb[0].mxu0 %v290
        %v495 = vpop.f32.mrb[0].mxu0
        %v496 = vadd.f32 0.0, %v495
        %v497 = vpop.f32.mrb[0].mxu0
        %498 = vmatprep.mubr.f32.mxu0 0.0
        %499 = vmatmul.mubr.f32.gmra.mrb[0].mxu0 %v293
        %v500 = vpop.f32.mrb[0].mxu0
        %v501 = vadd.f32 0.0, %v500
        %v502 = vpop.f32.mrb[0].mxu0
        %503 = vmatprep.mubr.f32.mxu0 0.0
        %504 = vmatmul.mubr.f32.gmra.mrb[0].mxu0 %v296
        %v505 = vpop.f32.mrb[0].mxu0
        %v506 = vadd.f32 0.0, %v505
        %v507 = vpop.f32.mrb[0].mxu0
        %508 = vmatprep.mubr.f32.mxu0 0.0
        %509 = vmatmul.mubr.f32.gmra.mrb[0].mxu0 %v299
        %v510 = vpop.f32.mrb[0].mxu0
        %v511 = vadd.f32 0.0, %v510
        %v512 = vpop.f32.mrb[0].mxu0
        %513 = vmatprep.mubr.f32.mxu0 0.0
        %514 = vmatmul.mubr.f32.gmra.mrb[0].mxu0 %v302
        %v515 = vpop.f32.mrb[0].mxu0
        %v516 = vadd.f32 0.0, %v515
        %v517 = vpop.f32.mrb[0].mxu0
        %518 = vmatprep.mubr.f32.mxu0 0.0
        %519 = vmatmul.mubr.f32.gmra.mrb[0].mxu0 %v305
        %v520 = vpop.f32.mrb[0].mxu0
        %v521 = vadd.f32 0.0, %v520
        %v522 = vpop.f32.mrb[0].mxu0
        %523 = vmatprep.mubr.f32.mxu0 0.0
        %524 = vmatmul.mubr.f32.gmra.mrb[0].mxu0 %v308
        %v525 = vpop.f32.mrb[0].mxu0
        %v526 = vadd.f32 0.0, %v525
        %v527 = vpop.f32.mrb[0].mxu0
        %528 = vmatprep.mubr.f32.mxu0 0.0
        %529 = vmatmul.mubr.f32.gmra.mrb[0].mxu0 %v311
        %v530 = vpop.f32.mrb[0].mxu0
        %v531 = vadd.f32 0.0, %v530
        %v532 = vpop.f32.mrb[0].mxu0
        %533 = vmatprep.mubr.f32.mxu0 0.0
        %534 = vmatmul.mubr.f32.gmra.mrb[0].mxu0 %v314
        %v535 = vpop.f32.mrb[0].mxu0
        %v536 = vadd.f32 0.0, %v535
        %v537 = vpop.f32.mrb[0].mxu0
        %538 = vmatprep.mubr.f32.mxu0 0.0
        %539 = vmatmul.mubr.f32.gmra.mrb[0].mxu0 %v317
        %v540 = vpop.f32.mrb[0].mxu0
        %v541 = vadd.f32 0.0, %v540
        %v542 = vpop.f32.mrb[0].mxu0
        %543 = vmatprep.mubr.f32.mxu0 0.0
        %544 = vmatmul.mubr.f32.gmra.mrb[0].mxu0 %v320
        %v545 = vpop.f32.mrb[0].mxu0
        %v546 = vadd.f32 0.0, %v545
        %v547 = vpop.f32.mrb[0].mxu0
        %548 = vmatprep.mubr.f32.mxu0 0.0
        %549 = vmatmul.mubr.f32.gmra.mrb[0].mxu0 %v323
        %v550 = vpop.f32.mrb[0].mxu0
        %v551 = vadd.f32 0.0, %v550
        %v552 = vpop.f32.mrb[0].mxu0
        %553 = vdwg.mxu0
        %v554 = vadd.f32 %v192, %v396
        %v555 = vadd.f32 %v192, %v401
        %v556 = vadd.f32 %v192, %v406
        %v557 = vadd.f32 %v192, %v411
        %v558 = vadd.f32 %v192, %v416
        %v559 = vadd.f32 %v192, %v421
        %v560 = vadd.f32 %v192, %v426
        %v561 = vadd.f32 %v192, %v431
        %v562 = vadd.f32 %v192, %v436
        %v563 = vadd.f32 %v192, %v441
        %v564 = vadd.f32 %v192, %v446
        %v565 = vadd.f32 %v192, %v451
        %v566 = vadd.f32 %v192, %v456
        %v567 = vadd.f32 %v192, %v461
        %v568 = vadd.f32 %v192, %v466
        %v569 = vadd.f32 %v192, %v471
        %v570 = vadd.f32 %v192, %v476
        %v571 = vadd.f32 %v192, %v481
        %v572 = vadd.f32 %v192, %v486
        %v573 = vadd.f32 %v192, %v491
        %v574 = vadd.f32 %v192, %v496
        %v575 = vadd.f32 %v192, %v501
        %v576 = vadd.f32 %v192, %v506
        %v577 = vadd.f32 %v192, %v511
        %v578 = vadd.f32 %v192, %v516
        %v579 = vadd.f32 %v192, %v521
        %v580 = vadd.f32 %v192, %v526
        %v581 = vadd.f32 %v192, %v531
        %v582 = vadd.f32 %v192, %v536
        %v583 = vadd.f32 %v192, %v541
        %v584 = vadd.f32 %v192, %v546
        %v585 = vadd.f32 %v192, %v551
        %v586 = vld [vmem:[%s194 + $0x1] sm:$0xff]
        %v587 = vld [vmem:[%s194 + $0x9] sm:$0xff]
        %v588 = vld [vmem:[%s194 + $0x19] sm:$0xff]
        %v589 = vld [vmem:[%s194 + $0x21] sm:$0xff]
        %v590 = vld [vmem:[%s194 + $0x31] sm:$0xff]
        %v591 = vld [vmem:[%s194 + $0x39] sm:$0xff]
        %v592 = vld [vmem:[%s194 + $0x49] sm:$0xff]
        %v593 = vld [vmem:[%s194 + $0x51] sm:$0xff]
        %v594 = vld [vmem:[%s194 + $0x61] sm:$0xff]
        %v595 = vld [vmem:[%s194 + $0x69] sm:$0xff]
        %v596 = vld [vmem:[%s194 + $0x79] sm:$0xff]
        %v597 = vld [vmem:[%s194 + $0x81] sm:$0xff]
        %v598 = vld [vmem:[%s194 + $0x91] sm:$0xff]
        %v599 = vld [vmem:[%s194 + $0x99] sm:$0xff]
        %v600 = vld [vmem:[%s194 + $0xa9] sm:$0xff]
        %v601 = vld [vmem:[%s194 + $0xb1] sm:$0xff]
        %v602 = vld [vmem:[%s194 + $0xc1] sm:$0xff]
        %v603 = vld [vmem:[%s194 + $0xc9] sm:$0xff]
        %v604 = vld [vmem:[%s194 + $0xd9] sm:$0xff]
        %v605 = vld [vmem:[%s194 + $0xe1] sm:$0xff]
        %v606 = vld [vmem:[%s194 + $0xf1] sm:$0xff]
        %v607 = vld [vmem:[%s194 + $0xf9] sm:$0xff]
        %v608 = vld [vmem:[%s194 + $0x109] sm:$0xff]
        %v609 = vld [vmem:[%s194 + $0x111] sm:$0xff]
        %v610 = vld [vmem:[%s194 + $0x121] sm:$0xff]
        %v611 = vld [vmem:[%s194 + $0x129] sm:$0xff]
        %v612 = vld [vmem:[%s194 + $0x139] sm:$0xff]
        %v613 = vld [vmem:[%s194 + $0x141] sm:$0xff]
        %v614 = vld [vmem:[%s194 + $0x151] sm:$0xff]
        %v615 = vld [vmem:[%s194 + $0x159] sm:$0xff]
        %v616 = vld [vmem:[%s194 + $0x169] sm:$0xff]
        %v617 = vld [vmem:[%s194 + $0x171] sm:$0xff]
        %s618 = scalar_lea.vmem %s1, 4
        %v619 = vld [vmem:[%s618] sm:$0xf]
        %v621 = vsel %vm228, %v586, 0
        %v624 = vsel %vm228, %v587, 0
        %v627 = vsel %vm228, %v588, 0
        %v630 = vsel %vm228, %v589, 0
        %v633 = vsel %vm228, %v590, 0
        %v636 = vsel %vm228, %v591, 0
        %v639 = vsel %vm228, %v592, 0
        %v642 = vsel %vm228, %v593, 0
        %v645 = vsel %vm228, %v594, 0
        %v648 = vsel %vm228, %v595, 0
        %v651 = vsel %vm228, %v596, 0
        %v654 = vsel %vm228, %v597, 0
        %v657 = vsel %vm228, %v598, 0
        %v660 = vsel %vm228, %v599, 0
        %v663 = vsel %vm228, %v600, 0
        %v666 = vsel %vm228, %v601, 0
        %v669 = vsel %vm228, %v602, 0
        %v672 = vsel %vm228, %v603, 0
        %v675 = vsel %vm228, %v604, 0
        %v678 = vsel %vm228, %v605, 0
        %v681 = vsel %vm228, %v606, 0
        %v684 = vsel %vm228, %v607, 0
        %v687 = vsel %vm228, %v608, 0
        %v690 = vsel %vm228, %v609, 0
        %v693 = vsel %vm228, %v610, 0
        %v696 = vsel %vm228, %v611, 0
        %v699 = vsel %vm228, %v612, 0
        %v702 = vsel %vm228, %v613, 0
        %v705 = vsel %vm228, %v614, 0
        %v708 = vsel %vm228, %v615, 0
        %v711 = vsel %vm228, %v616, 0
        %v714 = vsel %vm228, %v617, 0
        %v717 = vsel %vm325, %v619, 0
        %719 = vmatprep.subr.mxu0 0.0
        %720 = vmatpush1.msra.mxu0 %v717
        %721 = vmatprep.subr.mxu0 0.0
        %722 = vmatpush1.msra.mxu0 0.0
        %723 = vmatprep.subr.mxu0 0.0
        %724 = vmatpush1.msra.mxu0 0.0
        %725 = vmatprep.subr.mxu0 0.0
        %726 = vmatpush1.msra.mxu0 0.0
        %727 = vmatprep.subr.mxu0 0.0
        %728 = vmatpush1.msra.mxu0 0.0
        %729 = vmatprep.subr.mxu0 0.0
        %730 = vmatpush1.msra.mxu0 0.0
        %731 = vmatprep.subr.mxu0 0.0
        %732 = vmatpush1.msra.mxu0 0.0
        %733 = vmatprep.subr.mxu0 0.0
        %734 = vmatpush1.msra.mxu0 0.0
        %735 = vmatprep.subr.mxu0 0.0
        %736 = vmatpush1.msra.mxu0 0.0
        %737 = vmatprep.subr.mxu0 0.0
        %738 = vmatpush1.msra.mxu0 0.0
        %739 = vmatprep.subr.mxu0 0.0
        %740 = vmatpush1.msra.mxu0 0.0
        %741 = vmatprep.subr.mxu0 0.0
        %742 = vmatpush1.msra.mxu0 0.0
        %743 = vmatprep.subr.mxu0 0.0
        %744 = vmatpush1.msra.mxu0 0.0
        %745 = vmatprep.subr.mxu0 0.0
        %746 = vmatpush1.msra.mxu0 0.0
        %747 = vmatprep.subr.mxu0 0.0
        %748 = vmatpush1.msra.mxu0 0.0
        %749 = vmatprep.subr.mxu0 0.0
        %750 = vmatpush1.msra.mxu0 0.0
        %751 = vmatprep.subr.mxu0 0.0
        %752 = vmatpush1.msra.mxu0 0.0
        %753 = vmatprep.subr.mxu0 0.0
        %754 = vmatpush1.msra.mxu0 0.0
        %755 = vmatprep.subr.mxu0 0.0
        %756 = vmatpush1.msra.mxu0 0.0
        %757 = vmatprep.subr.mxu0 0.0
        %758 = vmatpush1.msra.mxu0 0.0
        %759 = vmatprep.subr.mxu0 0.0
        %760 = vmatpush1.msra.mxu0 0.0
        %761 = vmatprep.subr.mxu0 0.0
        %762 = vmatpush1.msra.mxu0 0.0
        %763 = vmatprep.subr.mxu0 0.0
        %764 = vmatpush1.msra.mxu0 0.0
        %765 = vmatprep.subr.mxu0 0.0
        %766 = vmatpush1.msra.mxu0 0.0
        %767 = vmatprep.subr.mxu0 0.0
        %768 = vmatpush1.msra.mxu0 0.0
        %769 = vmatprep.subr.mxu0 0.0
        %770 = vmatpush1.msra.mxu0 0.0
        %771 = vmatprep.subr.mxu0 0.0
        %772 = vmatpush1.msra.mxu0 0.0
        %773 = vmatprep.subr.mxu0 0.0
        %774 = vmatpush1.msra.mxu0 0.0
        %775 = vmatprep.subr.mxu0 0.0
        %776 = vmatpush1.msra.mxu0 0.0
        %777 = vmatprep.subr.mxu0 0.0
        %778 = vmatpush1.msra.mxu0 0.0
        %779 = vmatprep.subr.mxu0 0.0
        %780 = vmatpush1.msra.mxu0 0.0
        %781 = vmatprep.subr.mxu0 0.0
        %782 = vmatpush1.msra.mxu0 0.0
        %783 = vmatprep.mubr.f32.mxu0 0.0
        %784 = vmatmul.mubr.f32.gmra.mrb[0].mxu0 %v621
        %v785 = vpop.f32.mrb[0].mxu0
        %v786 = vadd.f32 0.0, %v785
        %v787 = vpop.f32.mrb[0].mxu0
        %788 = vmatprep.mubr.f32.mxu0 0.0
        %789 = vmatmul.mubr.f32.gmra.mrb[0].mxu0 %v624
        %v790 = vpop.f32.mrb[0].mxu0
        %v791 = vadd.f32 0.0, %v790
        %v792 = vpop.f32.mrb[0].mxu0
        %793 = vmatprep.mubr.f32.mxu0 0.0
        %794 = vmatmul.mubr.f32.gmra.mrb[0].mxu0 %v627
        %v795 = vpop.f32.mrb[0].mxu0
        %v796 = vadd.f32 0.0, %v795
        %v797 = vpop.f32.mrb[0].mxu0
        %798 = vmatprep.mubr.f32.mxu0 0.0
        %799 = vmatmul.mubr.f32.gmra.mrb[0].mxu0 %v630
        %v800 = vpop.f32.mrb[0].mxu0
        %v801 = vadd.f32 0.0, %v800
        %v802 = vpop.f32.mrb[0].mxu0
        %803 = vmatprep.mubr.f32.mxu0 0.0
        %804 = vmatmul.mubr.f32.gmra.mrb[0].mxu0 %v633
        %v805 = vpop.f32.mrb[0].mxu0
        %v806 = vadd.f32 0.0, %v805
        %v807 = vpop.f32.mrb[0].mxu0
        %808 = vmatprep.mubr.f32.mxu0 0.0
        %809 = vmatmul.mubr.f32.gmra.mrb[0].mxu0 %v636
        %v810 = vpop.f32.mrb[0].mxu0
        %v811 = vadd.f32 0.0, %v810
        %v812 = vpop.f32.mrb[0].mxu0
        %813 = vmatprep.mubr.f32.mxu0 0.0
        %814 = vmatmul.mubr.f32.gmra.mrb[0].mxu0 %v639
        %v815 = vpop.f32.mrb[0].mxu0
        %v816 = vadd.f32 0.0, %v815
        %v817 = vpop.f32.mrb[0].mxu0
        %818 = vmatprep.mubr.f32.mxu0 0.0
        %819 = vmatmul.mubr.f32.gmra.mrb[0].mxu0 %v642
        %v820 = vpop.f32.mrb[0].mxu0
        %v821 = vadd.f32 0.0, %v820
        %v822 = vpop.f32.mrb[0].mxu0
        %823 = vmatprep.mubr.f32.mxu0 0.0
        %824 = vmatmul.mubr.f32.gmra.mrb[0].mxu0 %v645
        %v825 = vpop.f32.mrb[0].mxu0
        %v826 = vadd.f32 0.0, %v825
        %v827 = vpop.f32.mrb[0].mxu0
        %828 = vmatprep.mubr.f32.mxu0 0.0
        %829 = vmatmul.mubr.f32.gmra.mrb[0].mxu0 %v648
        %v830 = vpop.f32.mrb[0].mxu0
        %v831 = vadd.f32 0.0, %v830
        %v832 = vpop.f32.mrb[0].mxu0
        %833 = vmatprep.mubr.f32.mxu0 0.0
        %834 = vmatmul.mubr.f32.gmra.mrb[0].mxu0 %v651
        %v835 = vpop.f32.mrb[0].mxu0
        %v836 = vadd.f32 0.0, %v835
        %v837 = vpop.f32.mrb[0].mxu0
        %838 = vmatprep.mubr.f32.mxu0 0.0
        %839 = vmatmul.mubr.f32.gmra.mrb[0].mxu0 %v654
        %v840 = vpop.f32.mrb[0].mxu0
        %v841 = vadd.f32 0.0, %v840
        %v842 = vpop.f32.mrb[0].mxu0
        %843 = vmatprep.mubr.f32.mxu0 0.0
        %844 = vmatmul.mubr.f32.gmra.mrb[0].mxu0 %v657
        %v845 = vpop.f32.mrb[0].mxu0
        %v846 = vadd.f32 0.0, %v845
        %v847 = vpop.f32.mrb[0].mxu0
        %848 = vmatprep.mubr.f32.mxu0 0.0
        %849 = vmatmul.mubr.f32.gmra.mrb[0].mxu0 %v660
        %v850 = vpop.f32.mrb[0].mxu0
        %v851 = vadd.f32 0.0, %v850
        %v852 = vpop.f32.mrb[0].mxu0
        %853 = vmatprep.mubr.f32.mxu0 0.0
        %854 = vmatmul.mubr.f32.gmra.mrb[0].mxu0 %v663
        %v855 = vpop.f32.mrb[0].mxu0
        %v856 = vadd.f32 0.0, %v855
        %v857 = vpop.f32.mrb[0].mxu0
        %858 = vmatprep.mubr.f32.mxu0 0.0
        %859 = vmatmul.mubr.f32.gmra.mrb[0].mxu0 %v666
        %v860 = vpop.f32.mrb[0].mxu0
        %v861 = vadd.f32 0.0, %v860
        %v862 = vpop.f32.mrb[0].mxu0
        %863 = vmatprep.mubr.f32.mxu0 0.0
        %864 = vmatmul.mubr.f32.gmra.mrb[0].mxu0 %v669
        %v865 = vpop.f32.mrb[0].mxu0
        %v866 = vadd.f32 0.0, %v865
        %v867 = vpop.f32.mrb[0].mxu0
        %868 = vmatprep.mubr.f32.mxu0 0.0
        %869 = vmatmul.mubr.f32.gmra.mrb[0].mxu0 %v672
        %v870 = vpop.f32.mrb[0].mxu0
        %v871 = vadd.f32 0.0, %v870
        %v872 = vpop.f32.mrb[0].mxu0
        %873 = vmatprep.mubr.f32.mxu0 0.0
        %874 = vmatmul.mubr.f32.gmra.mrb[0].mxu0 %v675
        %v875 = vpop.f32.mrb[0].mxu0
        %v876 = vadd.f32 0.0, %v875
        %v877 = vpop.f32.mrb[0].mxu0
        %878 = vmatprep.mubr.f32.mxu0 0.0
        %879 = vmatmul.mubr.f32.gmra.mrb[0].mxu0 %v678
        %v880 = vpop.f32.mrb[0].mxu0
        %v881 = vadd.f32 0.0, %v880
        %v882 = vpop.f32.mrb[0].mxu0
        %883 = vmatprep.mubr.f32.mxu0 0.0
        %884 = vmatmul.mubr.f32.gmra.mrb[0].mxu0 %v681
        %v885 = vpop.f32.mrb[0].mxu0
        %v886 = vadd.f32 0.0, %v885
        %v887 = vpop.f32.mrb[0].mxu0
        %888 = vmatprep.mubr.f32.mxu0 0.0
        %889 = vmatmul.mubr.f32.gmra.mrb[0].mxu0 %v684
        %v890 = vpop.f32.mrb[0].mxu0
        %v891 = vadd.f32 0.0, %v890
        %v892 = vpop.f32.mrb[0].mxu0
        %893 = vmatprep.mubr.f32.mxu0 0.0
        %894 = vmatmul.mubr.f32.gmra.mrb[0].mxu0 %v687
        %v895 = vpop.f32.mrb[0].mxu0
        %v896 = vadd.f32 0.0, %v895
        %v897 = vpop.f32.mrb[0].mxu0
        %898 = vmatprep.mubr.f32.mxu0 0.0
        %899 = vmatmul.mubr.f32.gmra.mrb[0].mxu0 %v690
        %v900 = vpop.f32.mrb[0].mxu0
        %v901 = vadd.f32 0.0, %v900
        %v902 = vpop.f32.mrb[0].mxu0
        %903 = vmatprep.mubr.f32.mxu0 0.0
        %904 = vmatmul.mubr.f32.gmra.mrb[0].mxu0 %v693
        %v905 = vpop.f32.mrb[0].mxu0
        %v906 = vadd.f32 0.0, %v905
        %v907 = vpop.f32.mrb[0].mxu0
        %908 = vmatprep.mubr.f32.mxu0 0.0
        %909 = vmatmul.mubr.f32.gmra.mrb[0].mxu0 %v696
        %v910 = vpop.f32.mrb[0].mxu0
        %v911 = vadd.f32 0.0, %v910
        %v912 = vpop.f32.mrb[0].mxu0
        %913 = vmatprep.mubr.f32.mxu0 0.0
        %914 = vmatmul.mubr.f32.gmra.mrb[0].mxu0 %v699
        %v915 = vpop.f32.mrb[0].mxu0
        %v916 = vadd.f32 0.0, %v915
        %v917 = vpop.f32.mrb[0].mxu0
        %918 = vmatprep.mubr.f32.mxu0 0.0
        %919 = vmatmul.mubr.f32.gmra.mrb[0].mxu0 %v702
        %v920 = vpop.f32.mrb[0].mxu0
        %v921 = vadd.f32 0.0, %v920
        %v922 = vpop.f32.mrb[0].mxu0
        %923 = vmatprep.mubr.f32.mxu0 0.0
        %924 = vmatmul.mubr.f32.gmra.mrb[0].mxu0 %v705
        %v925 = vpop.f32.mrb[0].mxu0
        %v926 = vadd.f32 0.0, %v925
        %v927 = vpop.f32.mrb[0].mxu0
        %928 = vmatprep.mubr.f32.mxu0 0.0
        %929 = vmatmul.mubr.f32.gmra.mrb[0].mxu0 %v708
        %v930 = vpop.f32.mrb[0].mxu0
        %v931 = vadd.f32 0.0, %v930
        %v932 = vpop.f32.mrb[0].mxu0
        %933 = vmatprep.mubr.f32.mxu0 0.0
        %934 = vmatmul.mubr.f32.gmra.mrb[0].mxu0 %v711
        %v935 = vpop.f32.mrb[0].mxu0
        %v936 = vadd.f32 0.0, %v935
        %v937 = vpop.f32.mrb[0].mxu0
        %938 = vmatprep.mubr.f32.mxu0 0.0
        %939 = vmatmul.mubr.f32.gmra.mrb[0].mxu0 %v714
        %v940 = vpop.f32.mrb[0].mxu0
        %v941 = vadd.f32 0.0, %v940
        %v942 = vpop.f32.mrb[0].mxu0
        %943 = vdwg.mxu0
        %v944 = vadd.f32 %v554, %v786
        %v945 = vadd.f32 %v555, %v791
        %v946 = vadd.f32 %v556, %v796
        %v947 = vadd.f32 %v557, %v801
        %v948 = vadd.f32 %v558, %v806
        %v949 = vadd.f32 %v559, %v811
        %v950 = vadd.f32 %v560, %v816
        %v951 = vadd.f32 %v561, %v821
        %v952 = vadd.f32 %v562, %v826
        %v953 = vadd.f32 %v563, %v831
        %v954 = vadd.f32 %v564, %v836
        %v955 = vadd.f32 %v565, %v841
        %v956 = vadd.f32 %v566, %v846
        %v957 = vadd.f32 %v567, %v851
        %v958 = vadd.f32 %v568, %v856
        %v959 = vadd.f32 %v569, %v861
        %v960 = vadd.f32 %v570, %v866
        %v961 = vadd.f32 %v571, %v871
        %v962 = vadd.f32 %v572, %v876
        %v963 = vadd.f32 %v573, %v881
        %v964 = vadd.f32 %v574, %v886
        %v965 = vadd.f32 %v575, %v891
        %v966 = vadd.f32 %v576, %v896
        %v967 = vadd.f32 %v577, %v901
        %v968 = vadd.f32 %v578, %v906
        %v969 = vadd.f32 %v579, %v911
        %v970 = vadd.f32 %v580, %v916
        %v971 = vadd.f32 %v581, %v921
        %v972 = vadd.f32 %v582, %v926
        %v973 = vadd.f32 %v583, %v931
        %v974 = vadd.f32 %v584, %v936
        %v975 = vadd.f32 %v585, %v941
        %v976 = vld [vmem:[%s194 + $0x2] sm:$0xff]
        %v977 = vld [vmem:[%s194 + $0xa] sm:$0xff]
        %v978 = vld [vmem:[%s194 + $0x1a] sm:$0xff]
        %v979 = vld [vmem:[%s194 + $0x22] sm:$0xff]
        %v980 = vld [vmem:[%s194 + $0x32] sm:$0xff]
        %v981 = vld [vmem:[%s194 + $0x3a] sm:$0xff]
        %v982 = vld [vmem:[%s194 + $0x4a] sm:$0xff]
        %v983 = vld [vmem:[%s194 + $0x52] sm:$0xff]
        %v984 = vld [vmem:[%s194 + $0x62] sm:$0xff]
        %v985 = vld [vmem:[%s194 + $0x6a] sm:$0xff]
        %v986 = vld [vmem:[%s194 + $0x7a] sm:$0xff]
        %v987 = vld [vmem:[%s194 + $0x82] sm:$0xff]
        %v988 = vld [vmem:[%s194 + $0x92] sm:$0xff]
        %v989 = vld [vmem:[%s194 + $0x9a] sm:$0xff]
        %v990 = vld [vmem:[%s194 + $0xaa] sm:$0xff]
        %v991 = vld [vmem:[%s194 + $0xb2] sm:$0xff]
        %v992 = vld [vmem:[%s194 + $0xc2] sm:$0xff]
        %v993 = vld [vmem:[%s194 + $0xca] sm:$0xff]
        %v994 = vld [vmem:[%s194 + $0xda] sm:$0xff]
        %v995 = vld [vmem:[%s194 + $0xe2] sm:$0xff]
        %v996 = vld [vmem:[%s194 + $0xf2] sm:$0xff]
        %v997 = vld [vmem:[%s194 + $0xfa] sm:$0xff]
        %v998 = vld [vmem:[%s194 + $0x10a] sm:$0xff]
        %v999 = vld [vmem:[%s194 + $0x112] sm:$0xff]
        %v1000 = vld [vmem:[%s194 + $0x122] sm:$0xff]
        %v1001 = vld [vmem:[%s194 + $0x12a] sm:$0xff]
        %v1002 = vld [vmem:[%s194 + $0x13a] sm:$0xff]
        %v1003 = vld [vmem:[%s194 + $0x142] sm:$0xff]
        %v1004 = vld [vmem:[%s194 + $0x152] sm:$0xff]
        %v1005 = vld [vmem:[%s194 + $0x15a] sm:$0xff]
        %v1006 = vld [vmem:[%s194 + $0x16a] sm:$0xff]
        %v1007 = vld [vmem:[%s194 + $0x172] sm:$0xff]
        %s1008 = scalar_lea.vmem %s1, 8
        %v1009 = vld [vmem:[%s1008] sm:$0xf]
        %v1011 = vsel %vm228, %v976, 0
        %v1014 = vsel %vm228, %v977, 0
        %v1017 = vsel %vm228, %v978, 0
        %v1020 = vsel %vm228, %v979, 0
        %v1023 = vsel %vm228, %v980, 0
        %v1026 = vsel %vm228, %v981, 0
        %v1029 = vsel %vm228, %v982, 0
        %v1032 = vsel %vm228, %v983, 0
        %v1035 = vsel %vm228, %v984, 0
        %v1038 = vsel %vm228, %v985, 0
        %v1041 = vsel %vm228, %v986, 0
        %v1044 = vsel %vm228, %v987, 0
        %v1047 = vsel %vm228, %v988, 0
        %v1050 = vsel %vm228, %v989, 0
        %v1053 = vsel %vm228, %v990, 0
        %v1056 = vsel %vm228, %v991, 0
        %v1059 = vsel %vm228, %v992, 0
        %v1062 = vsel %vm228, %v993, 0
        %v1065 = vsel %vm228, %v994, 0
        %v1068 = vsel %vm228, %v995, 0
        %v1071 = vsel %vm228, %v996, 0
        %v1074 = vsel %vm228, %v997, 0
        %v1077 = vsel %vm228, %v998, 0
        %v1080 = vsel %vm228, %v999, 0
        %v1083 = vsel %vm228, %v1000, 0
        %v1086 = vsel %vm228, %v1001, 0
        %v1089 = vsel %vm228, %v1002, 0
        %v1092 = vsel %vm228, %v1003, 0
        %v1095 = vsel %vm228, %v1004, 0
        %v1098 = vsel %vm228, %v1005, 0
        %v1101 = vsel %vm228, %v1006, 0
        %v1104 = vsel %vm228, %v1007, 0
        %v1107 = vsel %vm325, %v1009, 0
        %1109 = vmatprep.subr.mxu0 0.0
        %1110 = vmatpush1.msra.mxu0 %v1107
        %1111 = vmatprep.subr.mxu0 0.0
        %1112 = vmatpush1.msra.mxu0 0.0
        %1113 = vmatprep.subr.mxu0 0.0
        %1114 = vmatpush1.msra.mxu0 0.0
        %1115 = vmatprep.subr.mxu0 0.0
        %1116 = vmatpush1.msra.mxu0 0.0
        %1117 = vmatprep.subr.mxu0 0.0
        %1118 = vmatpush1.msra.mxu0 0.0
        %1119 = vmatprep.subr.mxu0 0.0
        %1120 = vmatpush1.msra.mxu0 0.0
        %1121 = vmatprep.subr.mxu0 0.0
        %1122 = vmatpush1.msra.mxu0 0.0
        %1123 = vmatprep.subr.mxu0 0.0
        %1124 = vmatpush1.msra.mxu0 0.0
        %1125 = vmatprep.subr.mxu0 0.0
        %1126 = vmatpush1.msra.mxu0 0.0
        %1127 = vmatprep.subr.mxu0 0.0
        %1128 = vmatpush1.msra.mxu0 0.0
        %1129 = vmatprep.subr.mxu0 0.0
        %1130 = vmatpush1.msra.mxu0 0.0
        %1131 = vmatprep.subr.mxu0 0.0
        %1132 = vmatpush1.msra.mxu0 0.0
        %1133 = vmatprep.subr.mxu0 0.0
        %1134 = vmatpush1.msra.mxu0 0.0
        %1135 = vmatprep.subr.mxu0 0.0
        %1136 = vmatpush1.msra.mxu0 0.0
        %1137 = vmatprep.subr.mxu0 0.0
        %1138 = vmatpush1.msra.mxu0 0.0
        %1139 = vmatprep.subr.mxu0 0.0
        %1140 = vmatpush1.msra.mxu0 0.0
        %1141 = vmatprep.subr.mxu0 0.0
        %1142 = vmatpush1.msra.mxu0 0.0
        %1143 = vmatprep.subr.mxu0 0.0
        %1144 = vmatpush1.msra.mxu0 0.0
        %1145 = vmatprep.subr.mxu0 0.0
        %1146 = vmatpush1.msra.mxu0 0.0
        %1147 = vmatprep.subr.mxu0 0.0
        %1148 = vmatpush1.msra.mxu0 0.0
        %1149 = vmatprep.subr.mxu0 0.0
        %1150 = vmatpush1.msra.mxu0 0.0
        %1151 = vmatprep.subr.mxu0 0.0
        %1152 = vmatpush1.msra.mxu0 0.0
        %1153 = vmatprep.subr.mxu0 0.0
        %1154 = vmatpush1.msra.mxu0 0.0
        %1155 = vmatprep.subr.mxu0 0.0
        %1156 = vmatpush1.msra.mxu0 0.0
        %1157 = vmatprep.subr.mxu0 0.0
        %1158 = vmatpush1.msra.mxu0 0.0
        %1159 = vmatprep.subr.mxu0 0.0
        %1160 = vmatpush1.msra.mxu0 0.0
        %1161 = vmatprep.subr.mxu0 0.0
        %1162 = vmatpush1.msra.mxu0 0.0
        %1163 = vmatprep.subr.mxu0 0.0
        %1164 = vmatpush1.msra.mxu0 0.0
        %1165 = vmatprep.subr.mxu0 0.0
        %1166 = vmatpush1.msra.mxu0 0.0
        %1167 = vmatprep.subr.mxu0 0.0
        %1168 = vmatpush1.msra.mxu0 0.0
        %1169 = vmatprep.subr.mxu0 0.0
        %1170 = vmatpush1.msra.mxu0 0.0
        %1171 = vmatprep.subr.mxu0 0.0
        %1172 = vmatpush1.msra.mxu0 0.0
        %1173 = vmatprep.mubr.f32.mxu0 0.0
        %1174 = vmatmul.mubr.f32.gmra.mrb[0].mxu0 %v1011
        %v1175 = vpop.f32.mrb[0].mxu0
        %v1176 = vadd.f32 0.0, %v1175
        %v1177 = vpop.f32.mrb[0].mxu0
        %1178 = vmatprep.mubr.f32.mxu0 0.0
        %1179 = vmatmul.mubr.f32.gmra.mrb[0].mxu0 %v1014
        %v1180 = vpop.f32.mrb[0].mxu0
        %v1181 = vadd.f32 0.0, %v1180
        %v1182 = vpop.f32.mrb[0].mxu0
        %1183 = vmatprep.mubr.f32.mxu0 0.0
        %1184 = vmatmul.mubr.f32.gmra.mrb[0].mxu0 %v1017
        %v1185 = vpop.f32.mrb[0].mxu0
        %v1186 = vadd.f32 0.0, %v1185
        %v1187 = vpop.f32.mrb[0].mxu0
        %1188 = vmatprep.mubr.f32.mxu0 0.0
        %1189 = vmatmul.mubr.f32.gmra.mrb[0].mxu0 %v1020
        %v1190 = vpop.f32.mrb[0].mxu0
        %v1191 = vadd.f32 0.0, %v1190
        %v1192 = vpop.f32.mrb[0].mxu0
        %1193 = vmatprep.mubr.f32.mxu0 0.0
        %1194 = vmatmul.mubr.f32.gmra.mrb[0].mxu0 %v1023
        %v1195 = vpop.f32.mrb[0].mxu0
        %v1196 = vadd.f32 0.0, %v1195
        %v1197 = vpop.f32.mrb[0].mxu0
        %1198 = vmatprep.mubr.f32.mxu0 0.0
        %1199 = vmatmul.mubr.f32.gmra.mrb[0].mxu0 %v1026
        %v1200 = vpop.f32.mrb[0].mxu0
        %v1201 = vadd.f32 0.0, %v1200
        %v1202 = vpop.f32.mrb[0].mxu0
        %1203 = vmatprep.mubr.f32.mxu0 0.0
        %1204 = vmatmul.mubr.f32.gmra.mrb[0].mxu0 %v1029
        %v1205 = vpop.f32.mrb[0].mxu0
        %v1206 = vadd.f32 0.0, %v1205
        %v1207 = vpop.f32.mrb[0].mxu0
        %1208 = vmatprep.mubr.f32.mxu0 0.0
        %1209 = vmatmul.mubr.f32.gmra.mrb[0].mxu0 %v1032
        %v1210 = vpop.f32.mrb[0].mxu0
        %v1211 = vadd.f32 0.0, %v1210
        %v1212 = vpop.f32.mrb[0].mxu0
        %1213 = vmatprep.mubr.f32.mxu0 0.0
        %1214 = vmatmul.mubr.f32.gmra.mrb[0].mxu0 %v1035
        %v1215 = vpop.f32.mrb[0].mxu0
        %v1216 = vadd.f32 0.0, %v1215
        %v1217 = vpop.f32.mrb[0].mxu0
        %1218 = vmatprep.mubr.f32.mxu0 0.0
        %1219 = vmatmul.mubr.f32.gmra.mrb[0].mxu0 %v1038
        %v1220 = vpop.f32.mrb[0].mxu0
        %v1221 = vadd.f32 0.0, %v1220
        %v1222 = vpop.f32.mrb[0].mxu0
        %1223 = vmatprep.mubr.f32.mxu0 0.0
        %1224 = vmatmul.mubr.f32.gmra.mrb[0].mxu0 %v1041
        %v1225 = vpop.f32.mrb[0].mxu0
        %v1226 = vadd.f32 0.0, %v1225
        %v1227 = vpop.f32.mrb[0].mxu0
        %1228 = vmatprep.mubr.f32.mxu0 0.0
        %1229 = vmatmul.mubr.f32.gmra.mrb[0].mxu0 %v1044
        %v1230 = vpop.f32.mrb[0].mxu0
        %v1231 = vadd.f32 0.0, %v1230
        %v1232 = vpop.f32.mrb[0].mxu0
        %1233 = vmatprep.mubr.f32.mxu0 0.0
        %1234 = vmatmul.mubr.f32.gmra.mrb[0].mxu0 %v1047
        %v1235 = vpop.f32.mrb[0].mxu0
        %v1236 = vadd.f32 0.0, %v1235
        %v1237 = vpop.f32.mrb[0].mxu0
        %1238 = vmatprep.mubr.f32.mxu0 0.0
        %1239 = vmatmul.mubr.f32.gmra.mrb[0].mxu0 %v1050
        %v1240 = vpop.f32.mrb[0].mxu0
        %v1241 = vadd.f32 0.0, %v1240
        %v1242 = vpop.f32.mrb[0].mxu0
        %1243 = vmatprep.mubr.f32.mxu0 0.0
        %1244 = vmatmul.mubr.f32.gmra.mrb[0].mxu0 %v1053
        %v1245 = vpop.f32.mrb[0].mxu0
        %v1246 = vadd.f32 0.0, %v1245
        %v1247 = vpop.f32.mrb[0].mxu0
        %1248 = vmatprep.mubr.f32.mxu0 0.0
        %1249 = vmatmul.mubr.f32.gmra.mrb[0].mxu0 %v1056
        %v1250 = vpop.f32.mrb[0].mxu0
        %v1251 = vadd.f32 0.0, %v1250
        %v1252 = vpop.f32.mrb[0].mxu0
        %1253 = vmatprep.mubr.f32.mxu0 0.0
        %1254 = vmatmul.mubr.f32.gmra.mrb[0].mxu0 %v1059
        %v1255 = vpop.f32.mrb[0].mxu0
        %v1256 = vadd.f32 0.0, %v1255
        %v1257 = vpop.f32.mrb[0].mxu0
        %1258 = vmatprep.mubr.f32.mxu0 0.0
        %1259 = vmatmul.mubr.f32.gmra.mrb[0].mxu0 %v1062
        %v1260 = vpop.f32.mrb[0].mxu0
        %v1261 = vadd.f32 0.0, %v1260
        %v1262 = vpop.f32.mrb[0].mxu0
        %1263 = vmatprep.mubr.f32.mxu0 0.0
        %1264 = vmatmul.mubr.f32.gmra.mrb[0].mxu0 %v1065
        %v1265 = vpop.f32.mrb[0].mxu0
        %v1266 = vadd.f32 0.0, %v1265
        %v1267 = vpop.f32.mrb[0].mxu0
        %1268 = vmatprep.mubr.f32.mxu0 0.0
        %1269 = vmatmul.mubr.f32.gmra.mrb[0].mxu0 %v1068
        %v1270 = vpop.f32.mrb[0].mxu0
        %v1271 = vadd.f32 0.0, %v1270
        %v1272 = vpop.f32.mrb[0].mxu0
        %1273 = vmatprep.mubr.f32.mxu0 0.0
        %1274 = vmatmul.mubr.f32.gmra.mrb[0].mxu0 %v1071
        %v1275 = vpop.f32.mrb[0].mxu0
        %v1276 = vadd.f32 0.0, %v1275
        %v1277 = vpop.f32.mrb[0].mxu0
        %1278 = vmatprep.mubr.f32.mxu0 0.0
        %1279 = vmatmul.mubr.f32.gmra.mrb[0].mxu0 %v1074
        %v1280 = vpop.f32.mrb[0].mxu0
        %v1281 = vadd.f32 0.0, %v1280
        %v1282 = vpop.f32.mrb[0].mxu0
        %1283 = vmatprep.mubr.f32.mxu0 0.0
        %1284 = vmatmul.mubr.f32.gmra.mrb[0].mxu0 %v1077
        %v1285 = vpop.f32.mrb[0].mxu0
        %v1286 = vadd.f32 0.0, %v1285
        %v1287 = vpop.f32.mrb[0].mxu0
        %1288 = vmatprep.mubr.f32.mxu0 0.0
        %1289 = vmatmul.mubr.f32.gmra.mrb[0].mxu0 %v1080
        %v1290 = vpop.f32.mrb[0].mxu0
        %v1291 = vadd.f32 0.0, %v1290
        %v1292 = vpop.f32.mrb[0].mxu0
        %1293 = vmatprep.mubr.f32.mxu0 0.0
        %1294 = vmatmul.mubr.f32.gmra.mrb[0].mxu0 %v1083
        %v1295 = vpop.f32.mrb[0].mxu0
        %v1296 = vadd.f32 0.0, %v1295
        %v1297 = vpop.f32.mrb[0].mxu0
        %1298 = vmatprep.mubr.f32.mxu0 0.0
        %1299 = vmatmul.mubr.f32.gmra.mrb[0].mxu0 %v1086
        %v1300 = vpop.f32.mrb[0].mxu0
        %v1301 = vadd.f32 0.0, %v1300
        %v1302 = vpop.f32.mrb[0].mxu0
        %1303 = vmatprep.mubr.f32.mxu0 0.0
        %1304 = vmatmul.mubr.f32.gmra.mrb[0].mxu0 %v1089
        %v1305 = vpop.f32.mrb[0].mxu0
        %v1306 = vadd.f32 0.0, %v1305
        %v1307 = vpop.f32.mrb[0].mxu0
        %1308 = vmatprep.mubr.f32.mxu0 0.0
        %1309 = vmatmul.mubr.f32.gmra.mrb[0].mxu0 %v1092
        %v1310 = vpop.f32.mrb[0].mxu0
        %v1311 = vadd.f32 0.0, %v1310
        %v1312 = vpop.f32.mrb[0].mxu0
        %1313 = vmatprep.mubr.f32.mxu0 0.0
        %1314 = vmatmul.mubr.f32.gmra.mrb[0].mxu0 %v1095
        %v1315 = vpop.f32.mrb[0].mxu0
        %v1316 = vadd.f32 0.0, %v1315
        %v1317 = vpop.f32.mrb[0].mxu0
        %1318 = vmatprep.mubr.f32.mxu0 0.0
        %1319 = vmatmul.mubr.f32.gmra.mrb[0].mxu0 %v1098
        %v1320 = vpop.f32.mrb[0].mxu0
        %v1321 = vadd.f32 0.0, %v1320
        %v1322 = vpop.f32.mrb[0].mxu0
        %1323 = vmatprep.mubr.f32.mxu0 0.0
        %1324 = vmatmul.mubr.f32.gmra.mrb[0].mxu0 %v1101
        %v1325 = vpop.f32.mrb[0].mxu0
        %v1326 = vadd.f32 0.0, %v1325
        %v1327 = vpop.f32.mrb[0].mxu0
        %1328 = vmatprep.mubr.f32.mxu0 0.0
        %1329 = vmatmul.mubr.f32.gmra.mrb[0].mxu0 %v1104
        %v1330 = vpop.f32.mrb[0].mxu0
        %v1331 = vadd.f32 0.0, %v1330
        %v1332 = vpop.f32.mrb[0].mxu0
        %1333 = vdwg.mxu0
        %v1334 = vadd.f32 %v944, %v1176
        %v1335 = vadd.f32 %v945, %v1181
        %v1336 = vadd.f32 %v946, %v1186
        %v1337 = vadd.f32 %v947, %v1191
        %v1338 = vadd.f32 %v948, %v1196
        %v1339 = vadd.f32 %v949, %v1201
        %v1340 = vadd.f32 %v950, %v1206
        %v1341 = vadd.f32 %v951, %v1211
        %v1342 = vadd.f32 %v952, %v1216
        %v1343 = vadd.f32 %v953, %v1221
        %v1344 = vadd.f32 %v954, %v1226
        %v1345 = vadd.f32 %v955, %v1231
        %v1346 = vadd.f32 %v956, %v1236
        %v1347 = vadd.f32 %v957, %v1241
        %v1348 = vadd.f32 %v958, %v1246
        %v1349 = vadd.f32 %v959, %v1251
        %v1350 = vadd.f32 %v960, %v1256
        %v1351 = vadd.f32 %v961, %v1261
        %v1352 = vadd.f32 %v962, %v1266
        %v1353 = vadd.f32 %v963, %v1271
        %v1354 = vadd.f32 %v964, %v1276
        %v1355 = vadd.f32 %v965, %v1281
        %v1356 = vadd.f32 %v966, %v1286
        %v1357 = vadd.f32 %v967, %v1291
        %v1358 = vadd.f32 %v968, %v1296
        %v1359 = vadd.f32 %v969, %v1301
        %v1360 = vadd.f32 %v970, %v1306
        %v1361 = vadd.f32 %v971, %v1311
        %v1362 = vadd.f32 %v972, %v1316
        %v1363 = vadd.f32 %v973, %v1321
        %v1364 = vadd.f32 %v974, %v1326
        %v1365 = vadd.f32 %v975, %v1331
        %s1366 = sadd.s32 %s184, 1
        %s1367 = smul.u32 %s1366, 24
        %s1368 = scalar_lea.vmem %s182, %s1367
        %v1369 = vld [vmem:[%s1368] sm:$0xff]
        %v1370 = vld [vmem:[%s1368 + $0x8] sm:$0xff]
        %v1371 = vld [vmem:[%s1368 + $0x18] sm:$0xff]
        %v1372 = vld [vmem:[%s1368 + $0x20] sm:$0xff]
        %v1373 = vld [vmem:[%s1368 + $0x30] sm:$0xff]
        %v1374 = vld [vmem:[%s1368 + $0x38] sm:$0xff]
        %v1375 = vld [vmem:[%s1368 + $0x48] sm:$0xff]
        %v1376 = vld [vmem:[%s1368 + $0x50] sm:$0xff]
        %v1377 = vld [vmem:[%s1368 + $0x60] sm:$0xff]
        %v1378 = vld [vmem:[%s1368 + $0x68] sm:$0xff]
        %v1379 = vld [vmem:[%s1368 + $0x78] sm:$0xff]
        %v1380 = vld [vmem:[%s1368 + $0x80] sm:$0xff]
        %v1381 = vld [vmem:[%s1368 + $0x90] sm:$0xff]
        %v1382 = vld [vmem:[%s1368 + $0x98] sm:$0xff]
        %v1383 = vld [vmem:[%s1368 + $0xa8] sm:$0xff]
        %v1384 = vld [vmem:[%s1368 + $0xb0] sm:$0xff]
        %v1385 = vld [vmem:[%s1368 + $0xc0] sm:$0xff]
        %v1386 = vld [vmem:[%s1368 + $0xc8] sm:$0xff]
        %v1387 = vld [vmem:[%s1368 + $0xd8] sm:$0xff]
        %v1388 = vld [vmem:[%s1368 + $0xe0] sm:$0xff]
        %v1389 = vld [vmem:[%s1368 + $0xf0] sm:$0xff]
        %v1390 = vld [vmem:[%s1368 + $0xf8] sm:$0xff]
        %v1391 = vld [vmem:[%s1368 + $0x108] sm:$0xff]
        %v1392 = vld [vmem:[%s1368 + $0x110] sm:$0xff]
        %v1393 = vld [vmem:[%s1368 + $0x120] sm:$0xff]
        %v1394 = vld [vmem:[%s1368 + $0x128] sm:$0xff]
        %v1395 = vld [vmem:[%s1368 + $0x138] sm:$0xff]
        %v1396 = vld [vmem:[%s1368 + $0x140] sm:$0xff]
        %v1397 = vld [vmem:[%s1368 + $0x150] sm:$0xff]
        %v1398 = vld [vmem:[%s1368 + $0x158] sm:$0xff]
        %v1399 = vld [vmem:[%s1368 + $0x168] sm:$0xff]
        %v1400 = vld [vmem:[%s1368 + $0x170] sm:$0xff]
        %s1401 = scalar_lea.vmem %s1, 12
        %v1402 = vld [vmem:[%s1401] sm:$0xf]
        %v1404 = vsel %vm228, %v1369, 0
        %v1407 = vsel %vm228, %v1370, 0
        %v1410 = vsel %vm228, %v1371, 0
        %v1413 = vsel %vm228, %v1372, 0
        %v1416 = vsel %vm228, %v1373, 0
        %v1419 = vsel %vm228, %v1374, 0
        %v1422 = vsel %vm228, %v1375, 0
        %v1425 = vsel %vm228, %v1376, 0
        %v1428 = vsel %vm228, %v1377, 0
        %v1431 = vsel %vm228, %v1378, 0
        %v1434 = vsel %vm228, %v1379, 0
        %v1437 = vsel %vm228, %v1380, 0
        %v1440 = vsel %vm228, %v1381, 0
        %v1443 = vsel %vm228, %v1382, 0
        %v1446 = vsel %vm228, %v1383, 0
        %v1449 = vsel %vm228, %v1384, 0
        %v1452 = vsel %vm228, %v1385, 0
        %v1455 = vsel %vm228, %v1386, 0
        %v1458 = vsel %vm228, %v1387, 0
        %v1461 = vsel %vm228, %v1388, 0
        %v1464 = vsel %vm228, %v1389, 0
        %v1467 = vsel %vm228, %v1390, 0
        %v1470 = vsel %vm228, %v1391, 0
        %v1473 = vsel %vm228, %v1392, 0
        %v1476 = vsel %vm228, %v1393, 0
        %v1479 = vsel %vm228, %v1394, 0
        %v1482 = vsel %vm228, %v1395, 0
        %v1485 = vsel %vm228, %v1396, 0
        %v1488 = vsel %vm228, %v1397, 0
        %v1491 = vsel %vm228, %v1398, 0
        %v1494 = vsel %vm228, %v1399, 0
        %v1497 = vsel %vm228, %v1400, 0
        %v1500 = vsel %vm325, %v1402, 0
        %1502 = vmatprep.subr.mxu0 0.0
        %1503 = vmatpush1.msra.mxu0 %v1500
        %1504 = vmatprep.subr.mxu0 0.0
        %1505 = vmatpush1.msra.mxu0 0.0
        %1506 = vmatprep.subr.mxu0 0.0
        %1507 = vmatpush1.msra.mxu0 0.0
        %1508 = vmatprep.subr.mxu0 0.0
        %1509 = vmatpush1.msra.mxu0 0.0
        %1510 = vmatprep.subr.mxu0 0.0
        %1511 = vmatpush1.msra.mxu0 0.0
        %1512 = vmatprep.subr.mxu0 0.0
        %1513 = vmatpush1.msra.mxu0 0.0
        %1514 = vmatprep.subr.mxu0 0.0
        %1515 = vmatpush1.msra.mxu0 0.0
        %1516 = vmatprep.subr.mxu0 0.0
        %1517 = vmatpush1.msra.mxu0 0.0
        %1518 = vmatprep.subr.mxu0 0.0
        %1519 = vmatpush1.msra.mxu0 0.0
        %1520 = vmatprep.subr.mxu0 0.0
        %1521 = vmatpush1.msra.mxu0 0.0
        %1522 = vmatprep.subr.mxu0 0.0
        %1523 = vmatpush1.msra.mxu0 0.0
        %1524 = vmatprep.subr.mxu0 0.0
        %1525 = vmatpush1.msra.mxu0 0.0
        %1526 = vmatprep.subr.mxu0 0.0
        %1527 = vmatpush1.msra.mxu0 0.0
        %1528 = vmatprep.subr.mxu0 0.0
        %1529 = vmatpush1.msra.mxu0 0.0
        %1530 = vmatprep.subr.mxu0 0.0
        %1531 = vmatpush1.msra.mxu0 0.0
        %1532 = vmatprep.subr.mxu0 0.0
        %1533 = vmatpush1.msra.mxu0 0.0
        %1534 = vmatprep.subr.mxu0 0.0
        %1535 = vmatpush1.msra.mxu0 0.0
        %1536 = vmatprep.subr.mxu0 0.0
        %1537 = vmatpush1.msra.mxu0 0.0
        %1538 = vmatprep.subr.mxu0 0.0
        %1539 = vmatpush1.msra.mxu0 0.0
        %1540 = vmatprep.subr.mxu0 0.0
        %1541 = vmatpush1.msra.mxu0 0.0
        %1542 = vmatprep.subr.mxu0 0.0
        %1543 = vmatpush1.msra.mxu0 0.0
        %1544 = vmatprep.subr.mxu0 0.0
        %1545 = vmatpush1.msra.mxu0 0.0
        %1546 = vmatprep.subr.mxu0 0.0
        %1547 = vmatpush1.msra.mxu0 0.0
        %1548 = vmatprep.subr.mxu0 0.0
        %1549 = vmatpush1.msra.mxu0 0.0
        %1550 = vmatprep.subr.mxu0 0.0
        %1551 = vmatpush1.msra.mxu0 0.0
        %1552 = vmatprep.subr.mxu0 0.0
        %1553 = vmatpush1.msra.mxu0 0.0
        %1554 = vmatprep.subr.mxu0 0.0
        %1555 = vmatpush1.msra.mxu0 0.0
        %1556 = vmatprep.subr.mxu0 0.0
        %1557 = vmatpush1.msra.mxu0 0.0
        %1558 = vmatprep.subr.mxu0 0.0
        %1559 = vmatpush1.msra.mxu0 0.0
        %1560 = vmatprep.subr.mxu0 0.0
        %1561 = vmatpush1.msra.mxu0 0.0
        %1562 = vmatprep.subr.mxu0 0.0
        %1563 = vmatpush1.msra.mxu0 0.0
        %1564 = vmatprep.subr.mxu0 0.0
        %1565 = vmatpush1.msra.mxu0 0.0
        %1566 = vmatprep.mubr.f32.mxu0 0.0
        %1567 = vmatmul.mubr.f32.gmra.mrb[0].mxu0 %v1404
        %v1568 = vpop.f32.mrb[0].mxu0
        %v1569 = vadd.f32 0.0, %v1568
        %v1570 = vpop.f32.mrb[0].mxu0
        %1571 = vmatprep.mubr.f32.mxu0 0.0
        %1572 = vmatmul.mubr.f32.gmra.mrb[0].mxu0 %v1407
        %v1573 = vpop.f32.mrb[0].mxu0
        %v1574 = vadd.f32 0.0, %v1573
        %v1575 = vpop.f32.mrb[0].mxu0
        %1576 = vmatprep.mubr.f32.mxu0 0.0
        %1577 = vmatmul.mubr.f32.gmra.mrb[0].mxu0 %v1410
        %v1578 = vpop.f32.mrb[0].mxu0
        %v1579 = vadd.f32 0.0, %v1578
        %v1580 = vpop.f32.mrb[0].mxu0
        %1581 = vmatprep.mubr.f32.mxu0 0.0
        %1582 = vmatmul.mubr.f32.gmra.mrb[0].mxu0 %v1413
        %v1583 = vpop.f32.mrb[0].mxu0
        %v1584 = vadd.f32 0.0, %v1583
        %v1585 = vpop.f32.mrb[0].mxu0
        %1586 = vmatprep.mubr.f32.mxu0 0.0
        %1587 = vmatmul.mubr.f32.gmra.mrb[0].mxu0 %v1416
        %v1588 = vpop.f32.mrb[0].mxu0
        %v1589 = vadd.f32 0.0, %v1588
        %v1590 = vpop.f32.mrb[0].mxu0
        %1591 = vmatprep.mubr.f32.mxu0 0.0
        %1592 = vmatmul.mubr.f32.gmra.mrb[0].mxu0 %v1419
        %v1593 = vpop.f32.mrb[0].mxu0
        %v1594 = vadd.f32 0.0, %v1593
        %v1595 = vpop.f32.mrb[0].mxu0
        %1596 = vmatprep.mubr.f32.mxu0 0.0
        %1597 = vmatmul.mubr.f32.gmra.mrb[0].mxu0 %v1422
        %v1598 = vpop.f32.mrb[0].mxu0
        %v1599 = vadd.f32 0.0, %v1598
        %v1600 = vpop.f32.mrb[0].mxu0
        %1601 = vmatprep.mubr.f32.mxu0 0.0
        %1602 = vmatmul.mubr.f32.gmra.mrb[0].mxu0 %v1425
        %v1603 = vpop.f32.mrb[0].mxu0
        %v1604 = vadd.f32 0.0, %v1603
        %v1605 = vpop.f32.mrb[0].mxu0
        %1606 = vmatprep.mubr.f32.mxu0 0.0
        %1607 = vmatmul.mubr.f32.gmra.mrb[0].mxu0 %v1428
        %v1608 = vpop.f32.mrb[0].mxu0
        %v1609 = vadd.f32 0.0, %v1608
        %v1610 = vpop.f32.mrb[0].mxu0
        %1611 = vmatprep.mubr.f32.mxu0 0.0
        %1612 = vmatmul.mubr.f32.gmra.mrb[0].mxu0 %v1431
        %v1613 = vpop.f32.mrb[0].mxu0
        %v1614 = vadd.f32 0.0, %v1613
        %v1615 = vpop.f32.mrb[0].mxu0
        %1616 = vmatprep.mubr.f32.mxu0 0.0
        %1617 = vmatmul.mubr.f32.gmra.mrb[0].mxu0 %v1434
        %v1618 = vpop.f32.mrb[0].mxu0
        %v1619 = vadd.f32 0.0, %v1618
        %v1620 = vpop.f32.mrb[0].mxu0
        %1621 = vmatprep.mubr.f32.mxu0 0.0
        %1622 = vmatmul.mubr.f32.gmra.mrb[0].mxu0 %v1437
        %v1623 = vpop.f32.mrb[0].mxu0
        %v1624 = vadd.f32 0.0, %v1623
        %v1625 = vpop.f32.mrb[0].mxu0
        %1626 = vmatprep.mubr.f32.mxu0 0.0
        %1627 = vmatmul.mubr.f32.gmra.mrb[0].mxu0 %v1440
        %v1628 = vpop.f32.mrb[0].mxu0
        %v1629 = vadd.f32 0.0, %v1628
        %v1630 = vpop.f32.mrb[0].mxu0
        %1631 = vmatprep.mubr.f32.mxu0 0.0
        %1632 = vmatmul.mubr.f32.gmra.mrb[0].mxu0 %v1443
        %v1633 = vpop.f32.mrb[0].mxu0
        %v1634 = vadd.f32 0.0, %v1633
        %v1635 = vpop.f32.mrb[0].mxu0
        %1636 = vmatprep.mubr.f32.mxu0 0.0
        %1637 = vmatmul.mubr.f32.gmra.mrb[0].mxu0 %v1446
        %v1638 = vpop.f32.mrb[0].mxu0
        %v1639 = vadd.f32 0.0, %v1638
        %v1640 = vpop.f32.mrb[0].mxu0
        %1641 = vmatprep.mubr.f32.mxu0 0.0
        %1642 = vmatmul.mubr.f32.gmra.mrb[0].mxu0 %v1449
        %v1643 = vpop.f32.mrb[0].mxu0
        %v1644 = vadd.f32 0.0, %v1643
        %v1645 = vpop.f32.mrb[0].mxu0
        %1646 = vmatprep.mubr.f32.mxu0 0.0
        %1647 = vmatmul.mubr.f32.gmra.mrb[0].mxu0 %v1452
        %v1648 = vpop.f32.mrb[0].mxu0
        %v1649 = vadd.f32 0.0, %v1648
        %v1650 = vpop.f32.mrb[0].mxu0
        %1651 = vmatprep.mubr.f32.mxu0 0.0
        %1652 = vmatmul.mubr.f32.gmra.mrb[0].mxu0 %v1455
        %v1653 = vpop.f32.mrb[0].mxu0
        %v1654 = vadd.f32 0.0, %v1653
        %v1655 = vpop.f32.mrb[0].mxu0
        %1656 = vmatprep.mubr.f32.mxu0 0.0
        %1657 = vmatmul.mubr.f32.gmra.mrb[0].mxu0 %v1458
        %v1658 = vpop.f32.mrb[0].mxu0
        %v1659 = vadd.f32 0.0, %v1658
        %v1660 = vpop.f32.mrb[0].mxu0
        %1661 = vmatprep.mubr.f32.mxu0 0.0
        %1662 = vmatmul.mubr.f32.gmra.mrb[0].mxu0 %v1461
        %v1663 = vpop.f32.mrb[0].mxu0
        %v1664 = vadd.f32 0.0, %v1663
        %v1665 = vpop.f32.mrb[0].mxu0
        %1666 = vmatprep.mubr.f32.mxu0 0.0
        %1667 = vmatmul.mubr.f32.gmra.mrb[0].mxu0 %v1464
        %v1668 = vpop.f32.mrb[0].mxu0
        %v1669 = vadd.f32 0.0, %v1668
        %v1670 = vpop.f32.mrb[0].mxu0
        %1671 = vmatprep.mubr.f32.mxu0 0.0
        %1672 = vmatmul.mubr.f32.gmra.mrb[0].mxu0 %v1467
        %v1673 = vpop.f32.mrb[0].mxu0
        %v1674 = vadd.f32 0.0, %v1673
        %v1675 = vpop.f32.mrb[0].mxu0
        %1676 = vmatprep.mubr.f32.mxu0 0.0
        %1677 = vmatmul.mubr.f32.gmra.mrb[0].mxu0 %v1470
        %v1678 = vpop.f32.mrb[0].mxu0
        %v1679 = vadd.f32 0.0, %v1678
        %v1680 = vpop.f32.mrb[0].mxu0
        %1681 = vmatprep.mubr.f32.mxu0 0.0
        %1682 = vmatmul.mubr.f32.gmra.mrb[0].mxu0 %v1473
        %v1683 = vpop.f32.mrb[0].mxu0
        %v1684 = vadd.f32 0.0, %v1683
        %v1685 = vpop.f32.mrb[0].mxu0
        %1686 = vmatprep.mubr.f32.mxu0 0.0
        %1687 = vmatmul.mubr.f32.gmra.mrb[0].mxu0 %v1476
        %v1688 = vpop.f32.mrb[0].mxu0
        %v1689 = vadd.f32 0.0, %v1688
        %v1690 = vpop.f32.mrb[0].mxu0
        %1691 = vmatprep.mubr.f32.mxu0 0.0
        %1692 = vmatmul.mubr.f32.gmra.mrb[0].mxu0 %v1479
        %v1693 = vpop.f32.mrb[0].mxu0
        %v1694 = vadd.f32 0.0, %v1693
        %v1695 = vpop.f32.mrb[0].mxu0
        %1696 = vmatprep.mubr.f32.mxu0 0.0
        %1697 = vmatmul.mubr.f32.gmra.mrb[0].mxu0 %v1482
        %v1698 = vpop.f32.mrb[0].mxu0
        %v1699 = vadd.f32 0.0, %v1698
        %v1700 = vpop.f32.mrb[0].mxu0
        %1701 = vmatprep.mubr.f32.mxu0 0.0
        %1702 = vmatmul.mubr.f32.gmra.mrb[0].mxu0 %v1485
        %v1703 = vpop.f32.mrb[0].mxu0
        %v1704 = vadd.f32 0.0, %v1703
        %v1705 = vpop.f32.mrb[0].mxu0
        %1706 = vmatprep.mubr.f32.mxu0 0.0
        %1707 = vmatmul.mubr.f32.gmra.mrb[0].mxu0 %v1488
        %v1708 = vpop.f32.mrb[0].mxu0
        %v1709 = vadd.f32 0.0, %v1708
        %v1710 = vpop.f32.mrb[0].mxu0
        %1711 = vmatprep.mubr.f32.mxu0 0.0
        %1712 = vmatmul.mubr.f32.gmra.mrb[0].mxu0 %v1491
        %v1713 = vpop.f32.mrb[0].mxu0
        %v1714 = vadd.f32 0.0, %v1713
        %v1715 = vpop.f32.mrb[0].mxu0
        %1716 = vmatprep.mubr.f32.mxu0 0.0
        %1717 = vmatmul.mubr.f32.gmra.mrb[0].mxu0 %v1494
        %v1718 = vpop.f32.mrb[0].mxu0
        %v1719 = vadd.f32 0.0, %v1718
        %v1720 = vpop.f32.mrb[0].mxu0
        %1721 = vmatprep.mubr.f32.mxu0 0.0
        %1722 = vmatmul.mubr.f32.gmra.mrb[0].mxu0 %v1497
        %v1723 = vpop.f32.mrb[0].mxu0
        %v1724 = vadd.f32 0.0, %v1723
        %v1725 = vpop.f32.mrb[0].mxu0
        %1726 = vdwg.mxu0
        %v1727 = vadd.f32 %v1334, %v1569
        %v1728 = vadd.f32 %v1335, %v1574
        %v1729 = vadd.f32 %v1336, %v1579
        %v1730 = vadd.f32 %v1337, %v1584
        %v1731 = vadd.f32 %v1338, %v1589
        %v1732 = vadd.f32 %v1339, %v1594
        %v1733 = vadd.f32 %v1340, %v1599
        %v1734 = vadd.f32 %v1341, %v1604
        %v1735 = vadd.f32 %v1342, %v1609
        %v1736 = vadd.f32 %v1343, %v1614
        %v1737 = vadd.f32 %v1344, %v1619
        %v1738 = vadd.f32 %v1345, %v1624
        %v1739 = vadd.f32 %v1346, %v1629
        %v1740 = vadd.f32 %v1347, %v1634
        %v1741 = vadd.f32 %v1348, %v1639
        %v1742 = vadd.f32 %v1349, %v1644
        %v1743 = vadd.f32 %v1350, %v1649
        %v1744 = vadd.f32 %v1351, %v1654
        %v1745 = vadd.f32 %v1352, %v1659
        %v1746 = vadd.f32 %v1353, %v1664
        %v1747 = vadd.f32 %v1354, %v1669
        %v1748 = vadd.f32 %v1355, %v1674
        %v1749 = vadd.f32 %v1356, %v1679
        %v1750 = vadd.f32 %v1357, %v1684
        %v1751 = vadd.f32 %v1358, %v1689
        %v1752 = vadd.f32 %v1359, %v1694
        %v1753 = vadd.f32 %v1360, %v1699
        %v1754 = vadd.f32 %v1361, %v1704
        %v1755 = vadd.f32 %v1362, %v1709
        %v1756 = vadd.f32 %v1363, %v1714
        %v1757 = vadd.f32 %v1364, %v1719
        %v1758 = vadd.f32 %v1365, %v1724
        %v1759 = vld [vmem:[%s1368 + $0x1] sm:$0xff]
        %v1760 = vld [vmem:[%s1368 + $0x9] sm:$0xff]
        %v1761 = vld [vmem:[%s1368 + $0x19] sm:$0xff]
        %v1762 = vld [vmem:[%s1368 + $0x21] sm:$0xff]
        %v1763 = vld [vmem:[%s1368 + $0x31] sm:$0xff]
        %v1764 = vld [vmem:[%s1368 + $0x39] sm:$0xff]
        %v1765 = vld [vmem:[%s1368 + $0x49] sm:$0xff]
        %v1766 = vld [vmem:[%s1368 + $0x51] sm:$0xff]
        %v1767 = vld [vmem:[%s1368 + $0x61] sm:$0xff]
        %v1768 = vld [vmem:[%s1368 + $0x69] sm:$0xff]
        %v1769 = vld [vmem:[%s1368 + $0x79] sm:$0xff]
        %v1770 = vld [vmem:[%s1368 + $0x81] sm:$0xff]
        %v1771 = vld [vmem:[%s1368 + $0x91] sm:$0xff]
        %v1772 = vld [vmem:[%s1368 + $0x99] sm:$0xff]
        %v1773 = vld [vmem:[%s1368 + $0xa9] sm:$0xff]
        %v1774 = vld [vmem:[%s1368 + $0xb1] sm:$0xff]
        %v1775 = vld [vmem:[%s1368 + $0xc1] sm:$0xff]
        %v1776 = vld [vmem:[%s1368 + $0xc9] sm:$0xff]
        %v1777 = vld [vmem:[%s1368 + $0xd9] sm:$0xff]
        %v1778 = vld [vmem:[%s1368 + $0xe1] sm:$0xff]
        %v1779 = vld [vmem:[%s1368 + $0xf1] sm:$0xff]
        %v1780 = vld [vmem:[%s1368 + $0xf9] sm:$0xff]
        %v1781 = vld [vmem:[%s1368 + $0x109] sm:$0xff]
        %v1782 = vld [vmem:[%s1368 + $0x111] sm:$0xff]
        %v1783 = vld [vmem:[%s1368 + $0x121] sm:$0xff]
        %v1784 = vld [vmem:[%s1368 + $0x129] sm:$0xff]
        %v1785 = vld [vmem:[%s1368 + $0x139] sm:$0xff]
        %v1786 = vld [vmem:[%s1368 + $0x141] sm:$0xff]
        %v1787 = vld [vmem:[%s1368 + $0x151] sm:$0xff]
        %v1788 = vld [vmem:[%s1368 + $0x159] sm:$0xff]
        %v1789 = vld [vmem:[%s1368 + $0x169] sm:$0xff]
        %v1790 = vld [vmem:[%s1368 + $0x171] sm:$0xff]
        %s1791 = scalar_lea.vmem %s1, 16
        %v1792 = vld [vmem:[%s1791] sm:$0xf]
        %v1794 = vsel %vm228, %v1759, 0
        %v1797 = vsel %vm228, %v1760, 0
        %v1800 = vsel %vm228, %v1761, 0
        %v1803 = vsel %vm228, %v1762, 0
        %v1806 = vsel %vm228, %v1763, 0
        %v1809 = vsel %vm228, %v1764, 0
        %v1812 = vsel %vm228, %v1765, 0
        %v1815 = vsel %vm228, %v1766, 0
        %v1818 = vsel %vm228, %v1767, 0
        %v1821 = vsel %vm228, %v1768, 0
        %v1824 = vsel %vm228, %v1769, 0
        %v1827 = vsel %vm228, %v1770, 0
        %v1830 = vsel %vm228, %v1771, 0
        %v1833 = vsel %vm228, %v1772, 0
        %v1836 = vsel %vm228, %v1773, 0
        %v1839 = vsel %vm228, %v1774, 0
        %v1842 = vsel %vm228, %v1775, 0
        %v1845 = vsel %vm228, %v1776, 0
        %v1848 = vsel %vm228, %v1777, 0
        %v1851 = vsel %vm228, %v1778, 0
        %v1854 = vsel %vm228, %v1779, 0
        %v1857 = vsel %vm228, %v1780, 0
        %v1860 = vsel %vm228, %v1781, 0
        %v1863 = vsel %vm228, %v1782, 0
        %v1866 = vsel %vm228, %v1783, 0
        %v1869 = vsel %vm228, %v1784, 0
        %v1872 = vsel %vm228, %v1785, 0
        %v1875 = vsel %vm228, %v1786, 0
        %v1878 = vsel %vm228, %v1787, 0
        %v1881 = vsel %vm228, %v1788, 0
        %v1884 = vsel %vm228, %v1789, 0
        %v1887 = vsel %vm228, %v1790, 0
        %v1890 = vsel %vm325, %v1792, 0
        %1892 = vmatprep.subr.mxu0 0.0
        %1893 = vmatpush1.msra.mxu0 %v1890
        %1894 = vmatprep.subr.mxu0 0.0
        %1895 = vmatpush1.msra.mxu0 0.0
        %1896 = vmatprep.subr.mxu0 0.0
        %1897 = vmatpush1.msra.mxu0 0.0
        %1898 = vmatprep.subr.mxu0 0.0
        %1899 = vmatpush1.msra.mxu0 0.0
        %1900 = vmatprep.subr.mxu0 0.0
        %1901 = vmatpush1.msra.mxu0 0.0
        %1902 = vmatprep.subr.mxu0 0.0
        %1903 = vmatpush1.msra.mxu0 0.0
        %1904 = vmatprep.subr.mxu0 0.0
        %1905 = vmatpush1.msra.mxu0 0.0
        %1906 = vmatprep.subr.mxu0 0.0
        %1907 = vmatpush1.msra.mxu0 0.0
        %1908 = vmatprep.subr.mxu0 0.0
        %1909 = vmatpush1.msra.mxu0 0.0
        %1910 = vmatprep.subr.mxu0 0.0
        %1911 = vmatpush1.msra.mxu0 0.0
        %1912 = vmatprep.subr.mxu0 0.0
        %1913 = vmatpush1.msra.mxu0 0.0
        %1914 = vmatprep.subr.mxu0 0.0
        %1915 = vmatpush1.msra.mxu0 0.0
        %1916 = vmatprep.subr.mxu0 0.0
        %1917 = vmatpush1.msra.mxu0 0.0
        %1918 = vmatprep.subr.mxu0 0.0
        %1919 = vmatpush1.msra.mxu0 0.0
        %1920 = vmatprep.subr.mxu0 0.0
        %1921 = vmatpush1.msra.mxu0 0.0
        %1922 = vmatprep.subr.mxu0 0.0
        %1923 = vmatpush1.msra.mxu0 0.0
        %1924 = vmatprep.subr.mxu0 0.0
        %1925 = vmatpush1.msra.mxu0 0.0
        %1926 = vmatprep.subr.mxu0 0.0
        %1927 = vmatpush1.msra.mxu0 0.0
        %1928 = vmatprep.subr.mxu0 0.0
        %1929 = vmatpush1.msra.mxu0 0.0
        %1930 = vmatprep.subr.mxu0 0.0
        %1931 = vmatpush1.msra.mxu0 0.0
        %1932 = vmatprep.subr.mxu0 0.0
        %1933 = vmatpush1.msra.mxu0 0.0
        %1934 = vmatprep.subr.mxu0 0.0
        %1935 = vmatpush1.msra.mxu0 0.0
        %1936 = vmatprep.subr.mxu0 0.0
        %1937 = vmatpush1.msra.mxu0 0.0
        %1938 = vmatprep.subr.mxu0 0.0
        %1939 = vmatpush1.msra.mxu0 0.0
        %1940 = vmatprep.subr.mxu0 0.0
        %1941 = vmatpush1.msra.mxu0 0.0
        %1942 = vmatprep.subr.mxu0 0.0
        %1943 = vmatpush1.msra.mxu0 0.0
        %1944 = vmatprep.subr.mxu0 0.0
        %1945 = vmatpush1.msra.mxu0 0.0
        %1946 = vmatprep.subr.mxu0 0.0
        %1947 = vmatpush1.msra.mxu0 0.0
        %1948 = vmatprep.subr.mxu0 0.0
        %1949 = vmatpush1.msra.mxu0 0.0
        %1950 = vmatprep.subr.mxu0 0.0
        %1951 = vmatpush1.msra.mxu0 0.0
        %1952 = vmatprep.subr.mxu0 0.0
        %1953 = vmatpush1.msra.mxu0 0.0
        %1954 = vmatprep.subr.mxu0 0.0
        %1955 = vmatpush1.msra.mxu0 0.0
        %1956 = vmatprep.mubr.f32.mxu0 0.0
        %1957 = vmatmul.mubr.f32.gmra.mrb[0].mxu0 %v1794
        %v1958 = vpop.f32.mrb[0].mxu0
        %v1959 = vadd.f32 0.0, %v1958
        %v1960 = vpop.f32.mrb[0].mxu0
        %1961 = vmatprep.mubr.f32.mxu0 0.0
        %1962 = vmatmul.mubr.f32.gmra.mrb[0].mxu0 %v1797
        %v1963 = vpop.f32.mrb[0].mxu0
        %v1964 = vadd.f32 0.0, %v1963
        %v1965 = vpop.f32.mrb[0].mxu0
        %1966 = vmatprep.mubr.f32.mxu0 0.0
        %1967 = vmatmul.mubr.f32.gmra.mrb[0].mxu0 %v1800
        %v1968 = vpop.f32.mrb[0].mxu0
        %v1969 = vadd.f32 0.0, %v1968
        %v1970 = vpop.f32.mrb[0].mxu0
        %1971 = vmatprep.mubr.f32.mxu0 0.0
        %1972 = vmatmul.mubr.f32.gmra.mrb[0].mxu0 %v1803
        %v1973 = vpop.f32.mrb[0].mxu0
        %v1974 = vadd.f32 0.0, %v1973
        %v1975 = vpop.f32.mrb[0].mxu0
        %1976 = vmatprep.mubr.f32.mxu0 0.0
        %1977 = vmatmul.mubr.f32.gmra.mrb[0].mxu0 %v1806
        %v1978 = vpop.f32.mrb[0].mxu0
        %v1979 = vadd.f32 0.0, %v1978
        %v1980 = vpop.f32.mrb[0].mxu0
        %1981 = vmatprep.mubr.f32.mxu0 0.0
        %1982 = vmatmul.mubr.f32.gmra.mrb[0].mxu0 %v1809
        %v1983 = vpop.f32.mrb[0].mxu0
        %v1984 = vadd.f32 0.0, %v1983
        %v1985 = vpop.f32.mrb[0].mxu0
        %1986 = vmatprep.mubr.f32.mxu0 0.0
        %1987 = vmatmul.mubr.f32.gmra.mrb[0].mxu0 %v1812
        %v1988 = vpop.f32.mrb[0].mxu0
        %v1989 = vadd.f32 0.0, %v1988
        %v1990 = vpop.f32.mrb[0].mxu0
        %1991 = vmatprep.mubr.f32.mxu0 0.0
        %1992 = vmatmul.mubr.f32.gmra.mrb[0].mxu0 %v1815
        %v1993 = vpop.f32.mrb[0].mxu0
        %v1994 = vadd.f32 0.0, %v1993
        %v1995 = vpop.f32.mrb[0].mxu0
        %1996 = vmatprep.mubr.f32.mxu0 0.0
        %1997 = vmatmul.mubr.f32.gmra.mrb[0].mxu0 %v1818
        %v1998 = vpop.f32.mrb[0].mxu0
        %v1999 = vadd.f32 0.0, %v1998
        %v2000 = vpop.f32.mrb[0].mxu0
        %2001 = vmatprep.mubr.f32.mxu0 0.0
        %2002 = vmatmul.mubr.f32.gmra.mrb[0].mxu0 %v1821
        %v2003 = vpop.f32.mrb[0].mxu0
        %v2004 = vadd.f32 0.0, %v2003
        %v2005 = vpop.f32.mrb[0].mxu0
        %2006 = vmatprep.mubr.f32.mxu0 0.0
        %2007 = vmatmul.mubr.f32.gmra.mrb[0].mxu0 %v1824
        %v2008 = vpop.f32.mrb[0].mxu0
        %v2009 = vadd.f32 0.0, %v2008
        %v2010 = vpop.f32.mrb[0].mxu0
        %2011 = vmatprep.mubr.f32.mxu0 0.0
        %2012 = vmatmul.mubr.f32.gmra.mrb[0].mxu0 %v1827
        %v2013 = vpop.f32.mrb[0].mxu0
        %v2014 = vadd.f32 0.0, %v2013
        %v2015 = vpop.f32.mrb[0].mxu0
        %2016 = vmatprep.mubr.f32.mxu0 0.0
        %2017 = vmatmul.mubr.f32.gmra.mrb[0].mxu0 %v1830
        %v2018 = vpop.f32.mrb[0].mxu0
        %v2019 = vadd.f32 0.0, %v2018
        %v2020 = vpop.f32.mrb[0].mxu0
        %2021 = vmatprep.mubr.f32.mxu0 0.0
        %2022 = vmatmul.mubr.f32.gmra.mrb[0].mxu0 %v1833
        %v2023 = vpop.f32.mrb[0].mxu0
        %v2024 = vadd.f32 0.0, %v2023
        %v2025 = vpop.f32.mrb[0].mxu0
        %2026 = vmatprep.mubr.f32.mxu0 0.0
        %2027 = vmatmul.mubr.f32.gmra.mrb[0].mxu0 %v1836
        %v2028 = vpop.f32.mrb[0].mxu0
        %v2029 = vadd.f32 0.0, %v2028
        %v2030 = vpop.f32.mrb[0].mxu0
        %2031 = vmatprep.mubr.f32.mxu0 0.0
        %2032 = vmatmul.mubr.f32.gmra.mrb[0].mxu0 %v1839
        %v2033 = vpop.f32.mrb[0].mxu0
        %v2034 = vadd.f32 0.0, %v2033
        %v2035 = vpop.f32.mrb[0].mxu0
        %2036 = vmatprep.mubr.f32.mxu0 0.0
        %2037 = vmatmul.mubr.f32.gmra.mrb[0].mxu0 %v1842
        %v2038 = vpop.f32.mrb[0].mxu0
        %v2039 = vadd.f32 0.0, %v2038
        %v2040 = vpop.f32.mrb[0].mxu0
        %2041 = vmatprep.mubr.f32.mxu0 0.0
        %2042 = vmatmul.mubr.f32.gmra.mrb[0].mxu0 %v1845
        %v2043 = vpop.f32.mrb[0].mxu0
        %v2044 = vadd.f32 0.0, %v2043
        %v2045 = vpop.f32.mrb[0].mxu0
        %2046 = vmatprep.mubr.f32.mxu0 0.0
        %2047 = vmatmul.mubr.f32.gmra.mrb[0].mxu0 %v1848
        %v2048 = vpop.f32.mrb[0].mxu0
        %v2049 = vadd.f32 0.0, %v2048
        %v2050 = vpop.f32.mrb[0].mxu0
        %2051 = vmatprep.mubr.f32.mxu0 0.0
        %2052 = vmatmul.mubr.f32.gmra.mrb[0].mxu0 %v1851
        %v2053 = vpop.f32.mrb[0].mxu0
        %v2054 = vadd.f32 0.0, %v2053
        %v2055 = vpop.f32.mrb[0].mxu0
        %2056 = vmatprep.mubr.f32.mxu0 0.0
        %2057 = vmatmul.mubr.f32.gmra.mrb[0].mxu0 %v1854
        %v2058 = vpop.f32.mrb[0].mxu0
        %v2059 = vadd.f32 0.0, %v2058
        %v2060 = vpop.f32.mrb[0].mxu0
        %2061 = vmatprep.mubr.f32.mxu0 0.0
        %2062 = vmatmul.mubr.f32.gmra.mrb[0].mxu0 %v1857
        %v2063 = vpop.f32.mrb[0].mxu0
        %v2064 = vadd.f32 0.0, %v2063
        %v2065 = vpop.f32.mrb[0].mxu0
        %2066 = vmatprep.mubr.f32.mxu0 0.0
        %2067 = vmatmul.mubr.f32.gmra.mrb[0].mxu0 %v1860
        %v2068 = vpop.f32.mrb[0].mxu0
        %v2069 = vadd.f32 0.0, %v2068
        %v2070 = vpop.f32.mrb[0].mxu0
        %2071 = vmatprep.mubr.f32.mxu0 0.0
        %2072 = vmatmul.mubr.f32.gmra.mrb[0].mxu0 %v1863
        %v2073 = vpop.f32.mrb[0].mxu0
        %v2074 = vadd.f32 0.0, %v2073
        %v2075 = vpop.f32.mrb[0].mxu0
        %2076 = vmatprep.mubr.f32.mxu0 0.0
        %2077 = vmatmul.mubr.f32.gmra.mrb[0].mxu0 %v1866
        %v2078 = vpop.f32.mrb[0].mxu0
        %v2079 = vadd.f32 0.0, %v2078
        %v2080 = vpop.f32.mrb[0].mxu0
        %2081 = vmatprep.mubr.f32.mxu0 0.0
        %2082 = vmatmul.mubr.f32.gmra.mrb[0].mxu0 %v1869
        %v2083 = vpop.f32.mrb[0].mxu0
        %v2084 = vadd.f32 0.0, %v2083
        %v2085 = vpop.f32.mrb[0].mxu0
        %2086 = vmatprep.mubr.f32.mxu0 0.0
        %2087 = vmatmul.mubr.f32.gmra.mrb[0].mxu0 %v1872
        %v2088 = vpop.f32.mrb[0].mxu0
        %v2089 = vadd.f32 0.0, %v2088
        %v2090 = vpop.f32.mrb[0].mxu0
        %2091 = vmatprep.mubr.f32.mxu0 0.0
        %2092 = vmatmul.mubr.f32.gmra.mrb[0].mxu0 %v1875
        %v2093 = vpop.f32.mrb[0].mxu0
        %v2094 = vadd.f32 0.0, %v2093
        %v2095 = vpop.f32.mrb[0].mxu0
        %2096 = vmatprep.mubr.f32.mxu0 0.0
        %2097 = vmatmul.mubr.f32.gmra.mrb[0].mxu0 %v1878
        %v2098 = vpop.f32.mrb[0].mxu0
        %v2099 = vadd.f32 0.0, %v2098
        %v2100 = vpop.f32.mrb[0].mxu0
        %2101 = vmatprep.mubr.f32.mxu0 0.0
        %2102 = vmatmul.mubr.f32.gmra.mrb[0].mxu0 %v1881
        %v2103 = vpop.f32.mrb[0].mxu0
        %v2104 = vadd.f32 0.0, %v2103
        %v2105 = vpop.f32.mrb[0].mxu0
        %2106 = vmatprep.mubr.f32.mxu0 0.0
        %2107 = vmatmul.mubr.f32.gmra.mrb[0].mxu0 %v1884
        %v2108 = vpop.f32.mrb[0].mxu0
        %v2109 = vadd.f32 0.0, %v2108
        %v2110 = vpop.f32.mrb[0].mxu0
        %2111 = vmatprep.mubr.f32.mxu0 0.0
        %2112 = vmatmul.mubr.f32.gmra.mrb[0].mxu0 %v1887
        %v2113 = vpop.f32.mrb[0].mxu0
        %v2114 = vadd.f32 0.0, %v2113
        %v2115 = vpop.f32.mrb[0].mxu0
        %2116 = vdwg.mxu0
        %v2117 = vadd.f32 %v1727, %v1959
        %v2118 = vadd.f32 %v1728, %v1964
        %v2119 = vadd.f32 %v1729, %v1969
        %v2120 = vadd.f32 %v1730, %v1974
        %v2121 = vadd.f32 %v1731, %v1979
        %v2122 = vadd.f32 %v1732, %v1984
        %v2123 = vadd.f32 %v1733, %v1989
        %v2124 = vadd.f32 %v1734, %v1994
        %v2125 = vadd.f32 %v1735, %v1999
        %v2126 = vadd.f32 %v1736, %v2004
        %v2127 = vadd.f32 %v1737, %v2009
        %v2128 = vadd.f32 %v1738, %v2014
        %v2129 = vadd.f32 %v1739, %v2019
        %v2130 = vadd.f32 %v1740, %v2024
        %v2131 = vadd.f32 %v1741, %v2029
        %v2132 = vadd.f32 %v1742, %v2034
        %v2133 = vadd.f32 %v1743, %v2039
        %v2134 = vadd.f32 %v1744, %v2044
        %v2135 = vadd.f32 %v1745, %v2049
        %v2136 = vadd.f32 %v1746, %v2054
        %v2137 = vadd.f32 %v1747, %v2059
        %v2138 = vadd.f32 %v1748, %v2064
        %v2139 = vadd.f32 %v1749, %v2069
        %v2140 = vadd.f32 %v1750, %v2074
        %v2141 = vadd.f32 %v1751, %v2079
        %v2142 = vadd.f32 %v1752, %v2084
        %v2143 = vadd.f32 %v1753, %v2089
        %v2144 = vadd.f32 %v1754, %v2094
        %v2145 = vadd.f32 %v1755, %v2099
        %v2146 = vadd.f32 %v1756, %v2104
        %v2147 = vadd.f32 %v1757, %v2109
        %v2148 = vadd.f32 %v1758, %v2114
        %v2149 = vld [vmem:[%s1368 + $0x2] sm:$0xff]
        %v2150 = vld [vmem:[%s1368 + $0xa] sm:$0xff]
        %v2151 = vld [vmem:[%s1368 + $0x1a] sm:$0xff]
        %v2152 = vld [vmem:[%s1368 + $0x22] sm:$0xff]
        %v2153 = vld [vmem:[%s1368 + $0x32] sm:$0xff]
        %v2154 = vld [vmem:[%s1368 + $0x3a] sm:$0xff]
        %v2155 = vld [vmem:[%s1368 + $0x4a] sm:$0xff]
        %v2156 = vld [vmem:[%s1368 + $0x52] sm:$0xff]
        %v2157 = vld [vmem:[%s1368 + $0x62] sm:$0xff]
        %v2158 = vld [vmem:[%s1368 + $0x6a] sm:$0xff]
        %v2159 = vld [vmem:[%s1368 + $0x7a] sm:$0xff]
        %v2160 = vld [vmem:[%s1368 + $0x82] sm:$0xff]
        %v2161 = vld [vmem:[%s1368 + $0x92] sm:$0xff]
        %v2162 = vld [vmem:[%s1368 + $0x9a] sm:$0xff]
        %v2163 = vld [vmem:[%s1368 + $0xaa] sm:$0xff]
        %v2164 = vld [vmem:[%s1368 + $0xb2] sm:$0xff]
        %v2165 = vld [vmem:[%s1368 + $0xc2] sm:$0xff]
        %v2166 = vld [vmem:[%s1368 + $0xca] sm:$0xff]
        %v2167 = vld [vmem:[%s1368 + $0xda] sm:$0xff]
        %v2168 = vld [vmem:[%s1368 + $0xe2] sm:$0xff]
        %v2169 = vld [vmem:[%s1368 + $0xf2] sm:$0xff]
        %v2170 = vld [vmem:[%s1368 + $0xfa] sm:$0xff]
        %v2171 = vld [vmem:[%s1368 + $0x10a] sm:$0xff]
        %v2172 = vld [vmem:[%s1368 + $0x112] sm:$0xff]
        %v2173 = vld [vmem:[%s1368 + $0x122] sm:$0xff]
        %v2174 = vld [vmem:[%s1368 + $0x12a] sm:$0xff]
        %v2175 = vld [vmem:[%s1368 + $0x13a] sm:$0xff]
        %v2176 = vld [vmem:[%s1368 + $0x142] sm:$0xff]
        %v2177 = vld [vmem:[%s1368 + $0x152] sm:$0xff]
        %v2178 = vld [vmem:[%s1368 + $0x15a] sm:$0xff]
        %v2179 = vld [vmem:[%s1368 + $0x16a] sm:$0xff]
        %v2180 = vld [vmem:[%s1368 + $0x172] sm:$0xff]
        %s2181 = scalar_lea.vmem %s1, 20
        %v2182 = vld [vmem:[%s2181] sm:$0xf]
        %v2184 = vsel %vm228, %v2149, 0
        %v2187 = vsel %vm228, %v2150, 0
        %v2190 = vsel %vm228, %v2151, 0
        %v2193 = vsel %vm228, %v2152, 0
        %v2196 = vsel %vm228, %v2153, 0
        %v2199 = vsel %vm228, %v2154, 0
        %v2202 = vsel %vm228, %v2155, 0
        %v2205 = vsel %vm228, %v2156, 0
        %v2208 = vsel %vm228, %v2157, 0
        %v2211 = vsel %vm228, %v2158, 0
        %v2214 = vsel %vm228, %v2159, 0
        %v2217 = vsel %vm228, %v2160, 0
        %v2220 = vsel %vm228, %v2161, 0
        %v2223 = vsel %vm228, %v2162, 0
        %v2226 = vsel %vm228, %v2163, 0
        %v2229 = vsel %vm228, %v2164, 0
        %v2232 = vsel %vm228, %v2165, 0
        %v2235 = vsel %vm228, %v2166, 0
        %v2238 = vsel %vm228, %v2167, 0
        %v2241 = vsel %vm228, %v2168, 0
        %v2244 = vsel %vm228, %v2169, 0
        %v2247 = vsel %vm228, %v2170, 0
        %v2250 = vsel %vm228, %v2171, 0
        %v2253 = vsel %vm228, %v2172, 0
        %v2256 = vsel %vm228, %v2173, 0
        %v2259 = vsel %vm228, %v2174, 0
        %v2262 = vsel %vm228, %v2175, 0
        %v2265 = vsel %vm228, %v2176, 0
        %v2268 = vsel %vm228, %v2177, 0
        %v2271 = vsel %vm228, %v2178, 0
        %v2274 = vsel %vm228, %v2179, 0
        %v2277 = vsel %vm228, %v2180, 0
        %v2280 = vsel %vm325, %v2182, 0
        %2282 = vmatprep.subr.mxu0 0.0
        %2283 = vmatpush1.msra.mxu0 %v2280
        %2284 = vmatprep.subr.mxu0 0.0
        %2285 = vmatpush1.msra.mxu0 0.0
        %2286 = vmatprep.subr.mxu0 0.0
        %2287 = vmatpush1.msra.mxu0 0.0
        %2288 = vmatprep.subr.mxu0 0.0
        %2289 = vmatpush1.msra.mxu0 0.0
        %2290 = vmatprep.subr.mxu0 0.0
        %2291 = vmatpush1.msra.mxu0 0.0
        %2292 = vmatprep.subr.mxu0 0.0
        %2293 = vmatpush1.msra.mxu0 0.0
        %2294 = vmatprep.subr.mxu0 0.0
        %2295 = vmatpush1.msra.mxu0 0.0
        %2296 = vmatprep.subr.mxu0 0.0
        %2297 = vmatpush1.msra.mxu0 0.0
        %2298 = vmatprep.subr.mxu0 0.0
        %2299 = vmatpush1.msra.mxu0 0.0
        %2300 = vmatprep.subr.mxu0 0.0
        %2301 = vmatpush1.msra.mxu0 0.0
        %2302 = vmatprep.subr.mxu0 0.0
        %2303 = vmatpush1.msra.mxu0 0.0
        %2304 = vmatprep.subr.mxu0 0.0
        %2305 = vmatpush1.msra.mxu0 0.0
        %2306 = vmatprep.subr.mxu0 0.0
        %2307 = vmatpush1.msra.mxu0 0.0
        %2308 = vmatprep.subr.mxu0 0.0
        %2309 = vmatpush1.msra.mxu0 0.0
        %2310 = vmatprep.subr.mxu0 0.0
        %2311 = vmatpush1.msra.mxu0 0.0
        %2312 = vmatprep.subr.mxu0 0.0
        %2313 = vmatpush1.msra.mxu0 0.0
        %2314 = vmatprep.subr.mxu0 0.0
        %2315 = vmatpush1.msra.mxu0 0.0
        %2316 = vmatprep.subr.mxu0 0.0
        %2317 = vmatpush1.msra.mxu0 0.0
        %2318 = vmatprep.subr.mxu0 0.0
        %2319 = vmatpush1.msra.mxu0 0.0
        %2320 = vmatprep.subr.mxu0 0.0
        %2321 = vmatpush1.msra.mxu0 0.0
        %2322 = vmatprep.subr.mxu0 0.0
        %2323 = vmatpush1.msra.mxu0 0.0
        %2324 = vmatprep.subr.mxu0 0.0
        %2325 = vmatpush1.msra.mxu0 0.0
        %2326 = vmatprep.subr.mxu0 0.0
        %2327 = vmatpush1.msra.mxu0 0.0
        %2328 = vmatprep.subr.mxu0 0.0
        %2329 = vmatpush1.msra.mxu0 0.0
        %2330 = vmatprep.subr.mxu0 0.0
        %2331 = vmatpush1.msra.mxu0 0.0
        %2332 = vmatprep.subr.mxu0 0.0
        %2333 = vmatpush1.msra.mxu0 0.0
        %2334 = vmatprep.subr.mxu0 0.0
        %2335 = vmatpush1.msra.mxu0 0.0
        %2336 = vmatprep.subr.mxu0 0.0
        %2337 = vmatpush1.msra.mxu0 0.0
        %2338 = vmatprep.subr.mxu0 0.0
        %2339 = vmatpush1.msra.mxu0 0.0
        %2340 = vmatprep.subr.mxu0 0.0
        %2341 = vmatpush1.msra.mxu0 0.0
        %2342 = vmatprep.subr.mxu0 0.0
        %2343 = vmatpush1.msra.mxu0 0.0
        %2344 = vmatprep.subr.mxu0 0.0
        %2345 = vmatpush1.msra.mxu0 0.0
        %2346 = vmatprep.mubr.f32.mxu0 0.0
        %2347 = vmatmul.mubr.f32.gmra.mrb[0].mxu0 %v2184
        %v2348 = vpop.f32.mrb[0].mxu0
        %v2349 = vadd.f32 0.0, %v2348
        %v2350 = vpop.f32.mrb[0].mxu0
        %2351 = vmatprep.mubr.f32.mxu0 0.0
        %2352 = vmatmul.mubr.f32.gmra.mrb[0].mxu0 %v2187
        %v2353 = vpop.f32.mrb[0].mxu0
        %v2354 = vadd.f32 0.0, %v2353
        %v2355 = vpop.f32.mrb[0].mxu0
        %2356 = vmatprep.mubr.f32.mxu0 0.0
        %2357 = vmatmul.mubr.f32.gmra.mrb[0].mxu0 %v2190
        %v2358 = vpop.f32.mrb[0].mxu0
        %v2359 = vadd.f32 0.0, %v2358
        %v2360 = vpop.f32.mrb[0].mxu0
        %2361 = vmatprep.mubr.f32.mxu0 0.0
        %2362 = vmatmul.mubr.f32.gmra.mrb[0].mxu0 %v2193
        %v2363 = vpop.f32.mrb[0].mxu0
        %v2364 = vadd.f32 0.0, %v2363
        %v2365 = vpop.f32.mrb[0].mxu0
        %2366 = vmatprep.mubr.f32.mxu0 0.0
        %2367 = vmatmul.mubr.f32.gmra.mrb[0].mxu0 %v2196
        %v2368 = vpop.f32.mrb[0].mxu0
        %v2369 = vadd.f32 0.0, %v2368
        %v2370 = vpop.f32.mrb[0].mxu0
        %2371 = vmatprep.mubr.f32.mxu0 0.0
        %2372 = vmatmul.mubr.f32.gmra.mrb[0].mxu0 %v2199
        %v2373 = vpop.f32.mrb[0].mxu0
        %v2374 = vadd.f32 0.0, %v2373
        %v2375 = vpop.f32.mrb[0].mxu0
        %2376 = vmatprep.mubr.f32.mxu0 0.0
        %2377 = vmatmul.mubr.f32.gmra.mrb[0].mxu0 %v2202
        %v2378 = vpop.f32.mrb[0].mxu0
        %v2379 = vadd.f32 0.0, %v2378
        %v2380 = vpop.f32.mrb[0].mxu0
        %2381 = vmatprep.mubr.f32.mxu0 0.0
        %2382 = vmatmul.mubr.f32.gmra.mrb[0].mxu0 %v2205
        %v2383 = vpop.f32.mrb[0].mxu0
        %v2384 = vadd.f32 0.0, %v2383
        %v2385 = vpop.f32.mrb[0].mxu0
        %2386 = vmatprep.mubr.f32.mxu0 0.0
        %2387 = vmatmul.mubr.f32.gmra.mrb[0].mxu0 %v2208
        %v2388 = vpop.f32.mrb[0].mxu0
        %v2389 = vadd.f32 0.0, %v2388
        %v2390 = vpop.f32.mrb[0].mxu0
        %2391 = vmatprep.mubr.f32.mxu0 0.0
        %2392 = vmatmul.mubr.f32.gmra.mrb[0].mxu0 %v2211
        %v2393 = vpop.f32.mrb[0].mxu0
        %v2394 = vadd.f32 0.0, %v2393
        %v2395 = vpop.f32.mrb[0].mxu0
        %2396 = vmatprep.mubr.f32.mxu0 0.0
        %2397 = vmatmul.mubr.f32.gmra.mrb[0].mxu0 %v2214
        %v2398 = vpop.f32.mrb[0].mxu0
        %v2399 = vadd.f32 0.0, %v2398
        %v2400 = vpop.f32.mrb[0].mxu0
        %2401 = vmatprep.mubr.f32.mxu0 0.0
        %2402 = vmatmul.mubr.f32.gmra.mrb[0].mxu0 %v2217
        %v2403 = vpop.f32.mrb[0].mxu0
        %v2404 = vadd.f32 0.0, %v2403
        %v2405 = vpop.f32.mrb[0].mxu0
        %2406 = vmatprep.mubr.f32.mxu0 0.0
        %2407 = vmatmul.mubr.f32.gmra.mrb[0].mxu0 %v2220
        %v2408 = vpop.f32.mrb[0].mxu0
        %v2409 = vadd.f32 0.0, %v2408
        %v2410 = vpop.f32.mrb[0].mxu0
        %2411 = vmatprep.mubr.f32.mxu0 0.0
        %2412 = vmatmul.mubr.f32.gmra.mrb[0].mxu0 %v2223
        %v2413 = vpop.f32.mrb[0].mxu0
        %v2414 = vadd.f32 0.0, %v2413
        %v2415 = vpop.f32.mrb[0].mxu0
        %2416 = vmatprep.mubr.f32.mxu0 0.0
        %2417 = vmatmul.mubr.f32.gmra.mrb[0].mxu0 %v2226
        %v2418 = vpop.f32.mrb[0].mxu0
        %v2419 = vadd.f32 0.0, %v2418
        %v2420 = vpop.f32.mrb[0].mxu0
        %2421 = vmatprep.mubr.f32.mxu0 0.0
        %2422 = vmatmul.mubr.f32.gmra.mrb[0].mxu0 %v2229
        %v2423 = vpop.f32.mrb[0].mxu0
        %v2424 = vadd.f32 0.0, %v2423
        %v2425 = vpop.f32.mrb[0].mxu0
        %2426 = vmatprep.mubr.f32.mxu0 0.0
        %2427 = vmatmul.mubr.f32.gmra.mrb[0].mxu0 %v2232
        %v2428 = vpop.f32.mrb[0].mxu0
        %v2429 = vadd.f32 0.0, %v2428
        %v2430 = vpop.f32.mrb[0].mxu0
        %2431 = vmatprep.mubr.f32.mxu0 0.0
        %2432 = vmatmul.mubr.f32.gmra.mrb[0].mxu0 %v2235
        %v2433 = vpop.f32.mrb[0].mxu0
        %v2434 = vadd.f32 0.0, %v2433
        %v2435 = vpop.f32.mrb[0].mxu0
        %2436 = vmatprep.mubr.f32.mxu0 0.0
        %2437 = vmatmul.mubr.f32.gmra.mrb[0].mxu0 %v2238
        %v2438 = vpop.f32.mrb[0].mxu0
        %v2439 = vadd.f32 0.0, %v2438
        %v2440 = vpop.f32.mrb[0].mxu0
        %2441 = vmatprep.mubr.f32.mxu0 0.0
        %2442 = vmatmul.mubr.f32.gmra.mrb[0].mxu0 %v2241
        %v2443 = vpop.f32.mrb[0].mxu0
        %v2444 = vadd.f32 0.0, %v2443
        %v2445 = vpop.f32.mrb[0].mxu0
        %2446 = vmatprep.mubr.f32.mxu0 0.0
        %2447 = vmatmul.mubr.f32.gmra.mrb[0].mxu0 %v2244
        %v2448 = vpop.f32.mrb[0].mxu0
        %v2449 = vadd.f32 0.0, %v2448
        %v2450 = vpop.f32.mrb[0].mxu0
        %2451 = vmatprep.mubr.f32.mxu0 0.0
        %2452 = vmatmul.mubr.f32.gmra.mrb[0].mxu0 %v2247
        %v2453 = vpop.f32.mrb[0].mxu0
        %v2454 = vadd.f32 0.0, %v2453
        %v2455 = vpop.f32.mrb[0].mxu0
        %2456 = vmatprep.mubr.f32.mxu0 0.0
        %2457 = vmatmul.mubr.f32.gmra.mrb[0].mxu0 %v2250
        %v2458 = vpop.f32.mrb[0].mxu0
        %v2459 = vadd.f32 0.0, %v2458
        %v2460 = vpop.f32.mrb[0].mxu0
        %2461 = vmatprep.mubr.f32.mxu0 0.0
        %2462 = vmatmul.mubr.f32.gmra.mrb[0].mxu0 %v2253
        %v2463 = vpop.f32.mrb[0].mxu0
        %v2464 = vadd.f32 0.0, %v2463
        %v2465 = vpop.f32.mrb[0].mxu0
        %2466 = vmatprep.mubr.f32.mxu0 0.0
        %2467 = vmatmul.mubr.f32.gmra.mrb[0].mxu0 %v2256
        %v2468 = vpop.f32.mrb[0].mxu0
        %v2469 = vadd.f32 0.0, %v2468
        %v2470 = vpop.f32.mrb[0].mxu0
        %2471 = vmatprep.mubr.f32.mxu0 0.0
        %2472 = vmatmul.mubr.f32.gmra.mrb[0].mxu0 %v2259
        %v2473 = vpop.f32.mrb[0].mxu0
        %v2474 = vadd.f32 0.0, %v2473
        %v2475 = vpop.f32.mrb[0].mxu0
        %2476 = vmatprep.mubr.f32.mxu0 0.0
        %2477 = vmatmul.mubr.f32.gmra.mrb[0].mxu0 %v2262
        %v2478 = vpop.f32.mrb[0].mxu0
        %v2479 = vadd.f32 0.0, %v2478
        %v2480 = vpop.f32.mrb[0].mxu0
        %2481 = vmatprep.mubr.f32.mxu0 0.0
        %2482 = vmatmul.mubr.f32.gmra.mrb[0].mxu0 %v2265
        %v2483 = vpop.f32.mrb[0].mxu0
        %v2484 = vadd.f32 0.0, %v2483
        %v2485 = vpop.f32.mrb[0].mxu0
        %2486 = vmatprep.mubr.f32.mxu0 0.0
        %2487 = vmatmul.mubr.f32.gmra.mrb[0].mxu0 %v2268
        %v2488 = vpop.f32.mrb[0].mxu0
        %v2489 = vadd.f32 0.0, %v2488
        %v2490 = vpop.f32.mrb[0].mxu0
        %2491 = vmatprep.mubr.f32.mxu0 0.0
        %2492 = vmatmul.mubr.f32.gmra.mrb[0].mxu0 %v2271
        %v2493 = vpop.f32.mrb[0].mxu0
        %v2494 = vadd.f32 0.0, %v2493
        %v2495 = vpop.f32.mrb[0].mxu0
        %2496 = vmatprep.mubr.f32.mxu0 0.0
        %2497 = vmatmul.mubr.f32.gmra.mrb[0].mxu0 %v2274
        %v2498 = vpop.f32.mrb[0].mxu0
        %v2499 = vadd.f32 0.0, %v2498
        %v2500 = vpop.f32.mrb[0].mxu0
        %2501 = vmatprep.mubr.f32.mxu0 0.0
        %2502 = vmatmul.mubr.f32.gmra.mrb[0].mxu0 %v2277
        %v2503 = vpop.f32.mrb[0].mxu0
        %v2504 = vadd.f32 0.0, %v2503
        %v2505 = vpop.f32.mrb[0].mxu0
        %2506 = vdwg.mxu0
        %v2507 = vadd.f32 %v2117, %v2349
        %v2508 = vadd.f32 %v2118, %v2354
        %v2509 = vadd.f32 %v2119, %v2359
        %v2510 = vadd.f32 %v2120, %v2364
        %v2511 = vadd.f32 %v2121, %v2369
        %v2512 = vadd.f32 %v2122, %v2374
        %v2513 = vadd.f32 %v2123, %v2379
        %v2514 = vadd.f32 %v2124, %v2384
        %v2515 = vadd.f32 %v2125, %v2389
        %v2516 = vadd.f32 %v2126, %v2394
        %v2517 = vadd.f32 %v2127, %v2399
        %v2518 = vadd.f32 %v2128, %v2404
        %v2519 = vadd.f32 %v2129, %v2409
        %v2520 = vadd.f32 %v2130, %v2414
        %v2521 = vadd.f32 %v2131, %v2419
        %v2522 = vadd.f32 %v2132, %v2424
        %v2523 = vadd.f32 %v2133, %v2429
        %v2524 = vadd.f32 %v2134, %v2434
        %v2525 = vadd.f32 %v2135, %v2439
        %v2526 = vadd.f32 %v2136, %v2444
        %v2527 = vadd.f32 %v2137, %v2449
        %v2528 = vadd.f32 %v2138, %v2454
        %v2529 = vadd.f32 %v2139, %v2459
        %v2530 = vadd.f32 %v2140, %v2464
        %v2531 = vadd.f32 %v2141, %v2469
        %v2532 = vadd.f32 %v2142, %v2474
        %v2533 = vadd.f32 %v2143, %v2479
        %v2534 = vadd.f32 %v2144, %v2484
        %v2535 = vadd.f32 %v2145, %v2489
        %v2536 = vadd.f32 %v2146, %v2494
        %v2537 = vadd.f32 %v2147, %v2499
        %v2538 = vadd.f32 %v2148, %v2504
        %s2539 = sadd.s32 %s184, 2
        %s2540 = smul.u32 %s2539, 24
        %s2541 = scalar_lea.vmem %s182, %s2540
        %v2542 = vld [vmem:[%s2541] sm:$0xff]
        %v2543 = vld [vmem:[%s2541 + $0x8] sm:$0xff]
        %v2544 = vld [vmem:[%s2541 + $0x18] sm:$0xff]
        %v2545 = vld [vmem:[%s2541 + $0x20] sm:$0xff]
        %v2546 = vld [vmem:[%s2541 + $0x30] sm:$0xff]
        %v2547 = vld [vmem:[%s2541 + $0x38] sm:$0xff]
        %v2548 = vld [vmem:[%s2541 + $0x48] sm:$0xff]
        %v2549 = vld [vmem:[%s2541 + $0x50] sm:$0xff]
        %v2550 = vld [vmem:[%s2541 + $0x60] sm:$0xff]
        %v2551 = vld [vmem:[%s2541 + $0x68] sm:$0xff]
        %v2552 = vld [vmem:[%s2541 + $0x78] sm:$0xff]
        %v2553 = vld [vmem:[%s2541 + $0x80] sm:$0xff]
        %v2554 = vld [vmem:[%s2541 + $0x90] sm:$0xff]
        %v2555 = vld [vmem:[%s2541 + $0x98] sm:$0xff]
        %v2556 = vld [vmem:[%s2541 + $0xa8] sm:$0xff]
        %v2557 = vld [vmem:[%s2541 + $0xb0] sm:$0xff]
        %v2558 = vld [vmem:[%s2541 + $0xc0] sm:$0xff]
        %v2559 = vld [vmem:[%s2541 + $0xc8] sm:$0xff]
        %v2560 = vld [vmem:[%s2541 + $0xd8] sm:$0xff]
        %v2561 = vld [vmem:[%s2541 + $0xe0] sm:$0xff]
        %v2562 = vld [vmem:[%s2541 + $0xf0] sm:$0xff]
        %v2563 = vld [vmem:[%s2541 + $0xf8] sm:$0xff]
        %v2564 = vld [vmem:[%s2541 + $0x108] sm:$0xff]
        %v2565 = vld [vmem:[%s2541 + $0x110] sm:$0xff]
        %v2566 = vld [vmem:[%s2541 + $0x120] sm:$0xff]
        %v2567 = vld [vmem:[%s2541 + $0x128] sm:$0xff]
        %v2568 = vld [vmem:[%s2541 + $0x138] sm:$0xff]
        %v2569 = vld [vmem:[%s2541 + $0x140] sm:$0xff]
        %v2570 = vld [vmem:[%s2541 + $0x150] sm:$0xff]
        %v2571 = vld [vmem:[%s2541 + $0x158] sm:$0xff]
        %v2572 = vld [vmem:[%s2541 + $0x168] sm:$0xff]
        %v2573 = vld [vmem:[%s2541 + $0x170] sm:$0xff]
        %s2574 = scalar_lea.vmem %s1, 24
        %v2575 = vld [vmem:[%s2574] sm:$0xf]
        %v2577 = vsel %vm228, %v2542, 0
        %v2580 = vsel %vm228, %v2543, 0
        %v2583 = vsel %vm228, %v2544, 0
        %v2586 = vsel %vm228, %v2545, 0
        %v2589 = vsel %vm228, %v2546, 0
        %v2592 = vsel %vm228, %v2547, 0
        %v2595 = vsel %vm228, %v2548, 0
        %v2598 = vsel %vm228, %v2549, 0
        %v2601 = vsel %vm228, %v2550, 0
        %v2604 = vsel %vm228, %v2551, 0
        %v2607 = vsel %vm228, %v2552, 0
        %v2610 = vsel %vm228, %v2553, 0
        %v2613 = vsel %vm228, %v2554, 0
        %v2616 = vsel %vm228, %v2555, 0
        %v2619 = vsel %vm228, %v2556, 0
        %v2622 = vsel %vm228, %v2557, 0
        %v2625 = vsel %vm228, %v2558, 0
        %v2628 = vsel %vm228, %v2559, 0
        %v2631 = vsel %vm228, %v2560, 0
        %v2634 = vsel %vm228, %v2561, 0
        %v2637 = vsel %vm228, %v2562, 0
        %v2640 = vsel %vm228, %v2563, 0
        %v2643 = vsel %vm228, %v2564, 0
        %v2646 = vsel %vm228, %v2565, 0
        %v2649 = vsel %vm228, %v2566, 0
        %v2652 = vsel %vm228, %v2567, 0
        %v2655 = vsel %vm228, %v2568, 0
        %v2658 = vsel %vm228, %v2569, 0
        %v2661 = vsel %vm228, %v2570, 0
        %v2664 = vsel %vm228, %v2571, 0
        %v2667 = vsel %vm228, %v2572, 0
        %v2670 = vsel %vm228, %v2573, 0
        %v2673 = vsel %vm325, %v2575, 0
        %2675 = vmatprep.subr.mxu0 0.0
        %2676 = vmatpush1.msra.mxu0 %v2673
        %2677 = vmatprep.subr.mxu0 0.0
        %2678 = vmatpush1.msra.mxu0 0.0
        %2679 = vmatprep.subr.mxu0 0.0
        %2680 = vmatpush1.msra.mxu0 0.0
        %2681 = vmatprep.subr.mxu0 0.0
        %2682 = vmatpush1.msra.mxu0 0.0
        %2683 = vmatprep.subr.mxu0 0.0
        %2684 = vmatpush1.msra.mxu0 0.0
        %2685 = vmatprep.subr.mxu0 0.0
        %2686 = vmatpush1.msra.mxu0 0.0
        %2687 = vmatprep.subr.mxu0 0.0
        %2688 = vmatpush1.msra.mxu0 0.0
        %2689 = vmatprep.subr.mxu0 0.0
        %2690 = vmatpush1.msra.mxu0 0.0
        %2691 = vmatprep.subr.mxu0 0.0
        %2692 = vmatpush1.msra.mxu0 0.0
        %2693 = vmatprep.subr.mxu0 0.0
        %2694 = vmatpush1.msra.mxu0 0.0
        %2695 = vmatprep.subr.mxu0 0.0
        %2696 = vmatpush1.msra.mxu0 0.0
        %2697 = vmatprep.subr.mxu0 0.0
        %2698 = vmatpush1.msra.mxu0 0.0
        %2699 = vmatprep.subr.mxu0 0.0
        %2700 = vmatpush1.msra.mxu0 0.0
        %2701 = vmatprep.subr.mxu0 0.0
        %2702 = vmatpush1.msra.mxu0 0.0
        %2703 = vmatprep.subr.mxu0 0.0
        %2704 = vmatpush1.msra.mxu0 0.0
        %2705 = vmatprep.subr.mxu0 0.0
        %2706 = vmatpush1.msra.mxu0 0.0
        %2707 = vmatprep.subr.mxu0 0.0
        %2708 = vmatpush1.msra.mxu0 0.0
        %2709 = vmatprep.subr.mxu0 0.0
        %2710 = vmatpush1.msra.mxu0 0.0
        %2711 = vmatprep.subr.mxu0 0.0
        %2712 = vmatpush1.msra.mxu0 0.0
        %2713 = vmatprep.subr.mxu0 0.0
        %2714 = vmatpush1.msra.mxu0 0.0
        %2715 = vmatprep.subr.mxu0 0.0
        %2716 = vmatpush1.msra.mxu0 0.0
        %2717 = vmatprep.subr.mxu0 0.0
        %2718 = vmatpush1.msra.mxu0 0.0
        %2719 = vmatprep.subr.mxu0 0.0
        %2720 = vmatpush1.msra.mxu0 0.0
        %2721 = vmatprep.subr.mxu0 0.0
        %2722 = vmatpush1.msra.mxu0 0.0
        %2723 = vmatprep.subr.mxu0 0.0
        %2724 = vmatpush1.msra.mxu0 0.0
        %2725 = vmatprep.subr.mxu0 0.0
        %2726 = vmatpush1.msra.mxu0 0.0
        %2727 = vmatprep.subr.mxu0 0.0
        %2728 = vmatpush1.msra.mxu0 0.0
        %2729 = vmatprep.subr.mxu0 0.0
        %2730 = vmatpush1.msra.mxu0 0.0
        %2731 = vmatprep.subr.mxu0 0.0
        %2732 = vmatpush1.msra.mxu0 0.0
        %2733 = vmatprep.subr.mxu0 0.0
        %2734 = vmatpush1.msra.mxu0 0.0
        %2735 = vmatprep.subr.mxu0 0.0
        %2736 = vmatpush1.msra.mxu0 0.0
        %2737 = vmatprep.subr.mxu0 0.0
        %2738 = vmatpush1.msra.mxu0 0.0
        %2739 = vmatprep.mubr.f32.mxu0 0.0
        %2740 = vmatmul.mubr.f32.gmra.mrb[0].mxu0 %v2577
        %v2741 = vpop.f32.mrb[0].mxu0
        %v2742 = vadd.f32 0.0, %v2741
        %v2743 = vpop.f32.mrb[0].mxu0
        %2744 = vmatprep.mubr.f32.mxu0 0.0
        %2745 = vmatmul.mubr.f32.gmra.mrb[0].mxu0 %v2580
        %v2746 = vpop.f32.mrb[0].mxu0
        %v2747 = vadd.f32 0.0, %v2746
        %v2748 = vpop.f32.mrb[0].mxu0
        %2749 = vmatprep.mubr.f32.mxu0 0.0
        %2750 = vmatmul.mubr.f32.gmra.mrb[0].mxu0 %v2583
        %v2751 = vpop.f32.mrb[0].mxu0
        %v2752 = vadd.f32 0.0, %v2751
        %v2753 = vpop.f32.mrb[0].mxu0
        %2754 = vmatprep.mubr.f32.mxu0 0.0
        %2755 = vmatmul.mubr.f32.gmra.mrb[0].mxu0 %v2586
        %v2756 = vpop.f32.mrb[0].mxu0
        %v2757 = vadd.f32 0.0, %v2756
        %v2758 = vpop.f32.mrb[0].mxu0
        %2759 = vmatprep.mubr.f32.mxu0 0.0
        %2760 = vmatmul.mubr.f32.gmra.mrb[0].mxu0 %v2589
        %v2761 = vpop.f32.mrb[0].mxu0
        %v2762 = vadd.f32 0.0, %v2761
        %v2763 = vpop.f32.mrb[0].mxu0
        %2764 = vmatprep.mubr.f32.mxu0 0.0
        %2765 = vmatmul.mubr.f32.gmra.mrb[0].mxu0 %v2592
        %v2766 = vpop.f32.mrb[0].mxu0
        %v2767 = vadd.f32 0.0, %v2766
        %v2768 = vpop.f32.mrb[0].mxu0
        %2769 = vmatprep.mubr.f32.mxu0 0.0
        %2770 = vmatmul.mubr.f32.gmra.mrb[0].mxu0 %v2595
        %v2771 = vpop.f32.mrb[0].mxu0
        %v2772 = vadd.f32 0.0, %v2771
        %v2773 = vpop.f32.mrb[0].mxu0
        %2774 = vmatprep.mubr.f32.mxu0 0.0
        %2775 = vmatmul.mubr.f32.gmra.mrb[0].mxu0 %v2598
        %v2776 = vpop.f32.mrb[0].mxu0
        %v2777 = vadd.f32 0.0, %v2776
        %v2778 = vpop.f32.mrb[0].mxu0
        %2779 = vmatprep.mubr.f32.mxu0 0.0
        %2780 = vmatmul.mubr.f32.gmra.mrb[0].mxu0 %v2601
        %v2781 = vpop.f32.mrb[0].mxu0
        %v2782 = vadd.f32 0.0, %v2781
        %v2783 = vpop.f32.mrb[0].mxu0
        %2784 = vmatprep.mubr.f32.mxu0 0.0
        %2785 = vmatmul.mubr.f32.gmra.mrb[0].mxu0 %v2604
        %v2786 = vpop.f32.mrb[0].mxu0
        %v2787 = vadd.f32 0.0, %v2786
        %v2788 = vpop.f32.mrb[0].mxu0
        %2789 = vmatprep.mubr.f32.mxu0 0.0
        %2790 = vmatmul.mubr.f32.gmra.mrb[0].mxu0 %v2607
        %v2791 = vpop.f32.mrb[0].mxu0
        %v2792 = vadd.f32 0.0, %v2791
        %v2793 = vpop.f32.mrb[0].mxu0
        %2794 = vmatprep.mubr.f32.mxu0 0.0
        %2795 = vmatmul.mubr.f32.gmra.mrb[0].mxu0 %v2610
        %v2796 = vpop.f32.mrb[0].mxu0
        %v2797 = vadd.f32 0.0, %v2796
        %v2798 = vpop.f32.mrb[0].mxu0
        %2799 = vmatprep.mubr.f32.mxu0 0.0
        %2800 = vmatmul.mubr.f32.gmra.mrb[0].mxu0 %v2613
        %v2801 = vpop.f32.mrb[0].mxu0
        %v2802 = vadd.f32 0.0, %v2801
        %v2803 = vpop.f32.mrb[0].mxu0
        %2804 = vmatprep.mubr.f32.mxu0 0.0
        %2805 = vmatmul.mubr.f32.gmra.mrb[0].mxu0 %v2616
        %v2806 = vpop.f32.mrb[0].mxu0
        %v2807 = vadd.f32 0.0, %v2806
        %v2808 = vpop.f32.mrb[0].mxu0
        %2809 = vmatprep.mubr.f32.mxu0 0.0
        %2810 = vmatmul.mubr.f32.gmra.mrb[0].mxu0 %v2619
        %v2811 = vpop.f32.mrb[0].mxu0
        %v2812 = vadd.f32 0.0, %v2811
        %v2813 = vpop.f32.mrb[0].mxu0
        %2814 = vmatprep.mubr.f32.mxu0 0.0
        %2815 = vmatmul.mubr.f32.gmra.mrb[0].mxu0 %v2622
        %v2816 = vpop.f32.mrb[0].mxu0
        %v2817 = vadd.f32 0.0, %v2816
        %v2818 = vpop.f32.mrb[0].mxu0
        %2819 = vmatprep.mubr.f32.mxu0 0.0
        %2820 = vmatmul.mubr.f32.gmra.mrb[0].mxu0 %v2625
        %v2821 = vpop.f32.mrb[0].mxu0
        %v2822 = vadd.f32 0.0, %v2821
        %v2823 = vpop.f32.mrb[0].mxu0
        %2824 = vmatprep.mubr.f32.mxu0 0.0
        %2825 = vmatmul.mubr.f32.gmra.mrb[0].mxu0 %v2628
        %v2826 = vpop.f32.mrb[0].mxu0
        %v2827 = vadd.f32 0.0, %v2826
        %v2828 = vpop.f32.mrb[0].mxu0
        %2829 = vmatprep.mubr.f32.mxu0 0.0
        %2830 = vmatmul.mubr.f32.gmra.mrb[0].mxu0 %v2631
        %v2831 = vpop.f32.mrb[0].mxu0
        %v2832 = vadd.f32 0.0, %v2831
        %v2833 = vpop.f32.mrb[0].mxu0
        %2834 = vmatprep.mubr.f32.mxu0 0.0
        %2835 = vmatmul.mubr.f32.gmra.mrb[0].mxu0 %v2634
        %v2836 = vpop.f32.mrb[0].mxu0
        %v2837 = vadd.f32 0.0, %v2836
        %v2838 = vpop.f32.mrb[0].mxu0
        %2839 = vmatprep.mubr.f32.mxu0 0.0
        %2840 = vmatmul.mubr.f32.gmra.mrb[0].mxu0 %v2637
        %v2841 = vpop.f32.mrb[0].mxu0
        %v2842 = vadd.f32 0.0, %v2841
        %v2843 = vpop.f32.mrb[0].mxu0
        %2844 = vmatprep.mubr.f32.mxu0 0.0
        %2845 = vmatmul.mubr.f32.gmra.mrb[0].mxu0 %v2640
        %v2846 = vpop.f32.mrb[0].mxu0
        %v2847 = vadd.f32 0.0, %v2846
        %v2848 = vpop.f32.mrb[0].mxu0
        %2849 = vmatprep.mubr.f32.mxu0 0.0
        %2850 = vmatmul.mubr.f32.gmra.mrb[0].mxu0 %v2643
        %v2851 = vpop.f32.mrb[0].mxu0
        %v2852 = vadd.f32 0.0, %v2851
        %v2853 = vpop.f32.mrb[0].mxu0
        %2854 = vmatprep.mubr.f32.mxu0 0.0
        %2855 = vmatmul.mubr.f32.gmra.mrb[0].mxu0 %v2646
        %v2856 = vpop.f32.mrb[0].mxu0
        %v2857 = vadd.f32 0.0, %v2856
        %v2858 = vpop.f32.mrb[0].mxu0
        %2859 = vmatprep.mubr.f32.mxu0 0.0
        %2860 = vmatmul.mubr.f32.gmra.mrb[0].mxu0 %v2649
        %v2861 = vpop.f32.mrb[0].mxu0
        %v2862 = vadd.f32 0.0, %v2861
        %v2863 = vpop.f32.mrb[0].mxu0
        %2864 = vmatprep.mubr.f32.mxu0 0.0
        %2865 = vmatmul.mubr.f32.gmra.mrb[0].mxu0 %v2652
        %v2866 = vpop.f32.mrb[0].mxu0
        %v2867 = vadd.f32 0.0, %v2866
        %v2868 = vpop.f32.mrb[0].mxu0
        %2869 = vmatprep.mubr.f32.mxu0 0.0
        %2870 = vmatmul.mubr.f32.gmra.mrb[0].mxu0 %v2655
        %v2871 = vpop.f32.mrb[0].mxu0
        %v2872 = vadd.f32 0.0, %v2871
        %v2873 = vpop.f32.mrb[0].mxu0
        %2874 = vmatprep.mubr.f32.mxu0 0.0
        %2875 = vmatmul.mubr.f32.gmra.mrb[0].mxu0 %v2658
        %v2876 = vpop.f32.mrb[0].mxu0
        %v2877 = vadd.f32 0.0, %v2876
        %v2878 = vpop.f32.mrb[0].mxu0
        %2879 = vmatprep.mubr.f32.mxu0 0.0
        %2880 = vmatmul.mubr.f32.gmra.mrb[0].mxu0 %v2661
        %v2881 = vpop.f32.mrb[0].mxu0
        %v2882 = vadd.f32 0.0, %v2881
        %v2883 = vpop.f32.mrb[0].mxu0
        %2884 = vmatprep.mubr.f32.mxu0 0.0
        %2885 = vmatmul.mubr.f32.gmra.mrb[0].mxu0 %v2664
        %v2886 = vpop.f32.mrb[0].mxu0
        %v2887 = vadd.f32 0.0, %v2886
        %v2888 = vpop.f32.mrb[0].mxu0
        %2889 = vmatprep.mubr.f32.mxu0 0.0
        %2890 = vmatmul.mubr.f32.gmra.mrb[0].mxu0 %v2667
        %v2891 = vpop.f32.mrb[0].mxu0
        %v2892 = vadd.f32 0.0, %v2891
        %v2893 = vpop.f32.mrb[0].mxu0
        %2894 = vmatprep.mubr.f32.mxu0 0.0
        %2895 = vmatmul.mubr.f32.gmra.mrb[0].mxu0 %v2670
        %v2896 = vpop.f32.mrb[0].mxu0
        %v2897 = vadd.f32 0.0, %v2896
        %v2898 = vpop.f32.mrb[0].mxu0
        %2899 = vdwg.mxu0
        %v2900 = vadd.f32 %v2507, %v2742
        %v2901 = vadd.f32 %v2508, %v2747
        %v2902 = vadd.f32 %v2509, %v2752
        %v2903 = vadd.f32 %v2510, %v2757
        %v2904 = vadd.f32 %v2511, %v2762
        %v2905 = vadd.f32 %v2512, %v2767
        %v2906 = vadd.f32 %v2513, %v2772
        %v2907 = vadd.f32 %v2514, %v2777
        %v2908 = vadd.f32 %v2515, %v2782
        %v2909 = vadd.f32 %v2516, %v2787
        %v2910 = vadd.f32 %v2517, %v2792
        %v2911 = vadd.f32 %v2518, %v2797
        %v2912 = vadd.f32 %v2519, %v2802
        %v2913 = vadd.f32 %v2520, %v2807
        %v2914 = vadd.f32 %v2521, %v2812
        %v2915 = vadd.f32 %v2522, %v2817
        %v2916 = vadd.f32 %v2523, %v2822
        %v2917 = vadd.f32 %v2524, %v2827
        %v2918 = vadd.f32 %v2525, %v2832
        %v2919 = vadd.f32 %v2526, %v2837
        %v2920 = vadd.f32 %v2527, %v2842
        %v2921 = vadd.f32 %v2528, %v2847
        %v2922 = vadd.f32 %v2529, %v2852
        %v2923 = vadd.f32 %v2530, %v2857
        %v2924 = vadd.f32 %v2531, %v2862
        %v2925 = vadd.f32 %v2532, %v2867
        %v2926 = vadd.f32 %v2533, %v2872
        %v2927 = vadd.f32 %v2534, %v2877
        %v2928 = vadd.f32 %v2535, %v2882
        %v2929 = vadd.f32 %v2536, %v2887
        %v2930 = vadd.f32 %v2537, %v2892
        %v2931 = vadd.f32 %v2538, %v2897
        %v2932 = vld [vmem:[%s2541 + $0x1] sm:$0xff]
        %v2933 = vld [vmem:[%s2541 + $0x9] sm:$0xff]
        %v2934 = vld [vmem:[%s2541 + $0x19] sm:$0xff]
        %v2935 = vld [vmem:[%s2541 + $0x21] sm:$0xff]
        %v2936 = vld [vmem:[%s2541 + $0x31] sm:$0xff]
        %v2937 = vld [vmem:[%s2541 + $0x39] sm:$0xff]
        %v2938 = vld [vmem:[%s2541 + $0x49] sm:$0xff]
        %v2939 = vld [vmem:[%s2541 + $0x51] sm:$0xff]
        %v2940 = vld [vmem:[%s2541 + $0x61] sm:$0xff]
        %v2941 = vld [vmem:[%s2541 + $0x69] sm:$0xff]
        %v2942 = vld [vmem:[%s2541 + $0x79] sm:$0xff]
        %v2943 = vld [vmem:[%s2541 + $0x81] sm:$0xff]
        %v2944 = vld [vmem:[%s2541 + $0x91] sm:$0xff]
        %v2945 = vld [vmem:[%s2541 + $0x99] sm:$0xff]
        %v2946 = vld [vmem:[%s2541 + $0xa9] sm:$0xff]
        %v2947 = vld [vmem:[%s2541 + $0xb1] sm:$0xff]
        %v2948 = vld [vmem:[%s2541 + $0xc1] sm:$0xff]
        %v2949 = vld [vmem:[%s2541 + $0xc9] sm:$0xff]
        %v2950 = vld [vmem:[%s2541 + $0xd9] sm:$0xff]
        %v2951 = vld [vmem:[%s2541 + $0xe1] sm:$0xff]
        %v2952 = vld [vmem:[%s2541 + $0xf1] sm:$0xff]
        %v2953 = vld [vmem:[%s2541 + $0xf9] sm:$0xff]
        %v2954 = vld [vmem:[%s2541 + $0x109] sm:$0xff]
        %v2955 = vld [vmem:[%s2541 + $0x111] sm:$0xff]
        %v2956 = vld [vmem:[%s2541 + $0x121] sm:$0xff]
        %v2957 = vld [vmem:[%s2541 + $0x129] sm:$0xff]
        %v2958 = vld [vmem:[%s2541 + $0x139] sm:$0xff]
        %v2959 = vld [vmem:[%s2541 + $0x141] sm:$0xff]
        %v2960 = vld [vmem:[%s2541 + $0x151] sm:$0xff]
        %v2961 = vld [vmem:[%s2541 + $0x159] sm:$0xff]
        %v2962 = vld [vmem:[%s2541 + $0x169] sm:$0xff]
        %v2963 = vld [vmem:[%s2541 + $0x171] sm:$0xff]
        %s2964 = scalar_lea.vmem %s1, 28
        %v2965 = vld [vmem:[%s2964] sm:$0xf]
        %v2967 = vsel %vm228, %v2932, 0
        %v2970 = vsel %vm228, %v2933, 0
        %v2973 = vsel %vm228, %v2934, 0
        %v2976 = vsel %vm228, %v2935, 0
        %v2979 = vsel %vm228, %v2936, 0
        %v2982 = vsel %vm228, %v2937, 0
        %v2985 = vsel %vm228, %v2938, 0
        %v2988 = vsel %vm228, %v2939, 0
        %v2991 = vsel %vm228, %v2940, 0
        %v2994 = vsel %vm228, %v2941, 0
        %v2997 = vsel %vm228, %v2942, 0
        %v3000 = vsel %vm228, %v2943, 0
        %v3003 = vsel %vm228, %v2944, 0
        %v3006 = vsel %vm228, %v2945, 0
        %v3009 = vsel %vm228, %v2946, 0
        %v3012 = vsel %vm228, %v2947, 0
        %v3015 = vsel %vm228, %v2948, 0
        %v3018 = vsel %vm228, %v2949, 0
        %v3021 = vsel %vm228, %v2950, 0
        %v3024 = vsel %vm228, %v2951, 0
        %v3027 = vsel %vm228, %v2952, 0
        %v3030 = vsel %vm228, %v2953, 0
        %v3033 = vsel %vm228, %v2954, 0
        %v3036 = vsel %vm228, %v2955, 0
        %v3039 = vsel %vm228, %v2956, 0
        %v3042 = vsel %vm228, %v2957, 0
        %v3045 = vsel %vm228, %v2958, 0
        %v3048 = vsel %vm228, %v2959, 0
        %v3051 = vsel %vm228, %v2960, 0
        %v3054 = vsel %vm228, %v2961, 0
        %v3057 = vsel %vm228, %v2962, 0
        %v3060 = vsel %vm228, %v2963, 0
        %v3063 = vsel %vm325, %v2965, 0
        %3065 = vmatprep.subr.mxu0 0.0
        %3066 = vmatpush1.msra.mxu0 %v3063
        %3067 = vmatprep.subr.mxu0 0.0
        %3068 = vmatpush1.msra.mxu0 0.0
        %3069 = vmatprep.subr.mxu0 0.0
        %3070 = vmatpush1.msra.mxu0 0.0
        %3071 = vmatprep.subr.mxu0 0.0
        %3072 = vmatpush1.msra.mxu0 0.0
        %3073 = vmatprep.subr.mxu0 0.0
        %3074 = vmatpush1.msra.mxu0 0.0
        %3075 = vmatprep.subr.mxu0 0.0
        %3076 = vmatpush1.msra.mxu0 0.0
        %3077 = vmatprep.subr.mxu0 0.0
        %3078 = vmatpush1.msra.mxu0 0.0
        %3079 = vmatprep.subr.mxu0 0.0
        %3080 = vmatpush1.msra.mxu0 0.0
        %3081 = vmatprep.subr.mxu0 0.0
        %3082 = vmatpush1.msra.mxu0 0.0
        %3083 = vmatprep.subr.mxu0 0.0
        %3084 = vmatpush1.msra.mxu0 0.0
        %3085 = vmatprep.subr.mxu0 0.0
        %3086 = vmatpush1.msra.mxu0 0.0
        %3087 = vmatprep.subr.mxu0 0.0
        %3088 = vmatpush1.msra.mxu0 0.0
        %3089 = vmatprep.subr.mxu0 0.0
        %3090 = vmatpush1.msra.mxu0 0.0
        %3091 = vmatprep.subr.mxu0 0.0
        %3092 = vmatpush1.msra.mxu0 0.0
        %3093 = vmatprep.subr.mxu0 0.0
        %3094 = vmatpush1.msra.mxu0 0.0
        %3095 = vmatprep.subr.mxu0 0.0
        %3096 = vmatpush1.msra.mxu0 0.0
        %3097 = vmatprep.subr.mxu0 0.0
        %3098 = vmatpush1.msra.mxu0 0.0
        %3099 = vmatprep.subr.mxu0 0.0
        %3100 = vmatpush1.msra.mxu0 0.0
        %3101 = vmatprep.subr.mxu0 0.0
        %3102 = vmatpush1.msra.mxu0 0.0
        %3103 = vmatprep.subr.mxu0 0.0
        %3104 = vmatpush1.msra.mxu0 0.0
        %3105 = vmatprep.subr.mxu0 0.0
        %3106 = vmatpush1.msra.mxu0 0.0
        %3107 = vmatprep.subr.mxu0 0.0
        %3108 = vmatpush1.msra.mxu0 0.0
        %3109 = vmatprep.subr.mxu0 0.0
        %3110 = vmatpush1.msra.mxu0 0.0
        %3111 = vmatprep.subr.mxu0 0.0
        %3112 = vmatpush1.msra.mxu0 0.0
        %3113 = vmatprep.subr.mxu0 0.0
        %3114 = vmatpush1.msra.mxu0 0.0
        %3115 = vmatprep.subr.mxu0 0.0
        %3116 = vmatpush1.msra.mxu0 0.0
        %3117 = vmatprep.subr.mxu0 0.0
        %3118 = vmatpush1.msra.mxu0 0.0
        %3119 = vmatprep.subr.mxu0 0.0
        %3120 = vmatpush1.msra.mxu0 0.0
        %3121 = vmatprep.subr.mxu0 0.0
        %3122 = vmatpush1.msra.mxu0 0.0
        %3123 = vmatprep.subr.mxu0 0.0
        %3124 = vmatpush1.msra.mxu0 0.0
        %3125 = vmatprep.subr.mxu0 0.0
        %3126 = vmatpush1.msra.mxu0 0.0
        %3127 = vmatprep.subr.mxu0 0.0
        %3128 = vmatpush1.msra.mxu0 0.0
        %3129 = vmatprep.mubr.f32.mxu0 0.0
        %3130 = vmatmul.mubr.f32.gmra.mrb[0].mxu0 %v2967
        %v3131 = vpop.f32.mrb[0].mxu0
        %v3132 = vadd.f32 0.0, %v3131
        %v3133 = vpop.f32.mrb[0].mxu0
        %3134 = vmatprep.mubr.f32.mxu0 0.0
        %3135 = vmatmul.mubr.f32.gmra.mrb[0].mxu0 %v2970
        %v3136 = vpop.f32.mrb[0].mxu0
        %v3137 = vadd.f32 0.0, %v3136
        %v3138 = vpop.f32.mrb[0].mxu0
        %3139 = vmatprep.mubr.f32.mxu0 0.0
        %3140 = vmatmul.mubr.f32.gmra.mrb[0].mxu0 %v2973
        %v3141 = vpop.f32.mrb[0].mxu0
        %v3142 = vadd.f32 0.0, %v3141
        %v3143 = vpop.f32.mrb[0].mxu0
        %3144 = vmatprep.mubr.f32.mxu0 0.0
        %3145 = vmatmul.mubr.f32.gmra.mrb[0].mxu0 %v2976
        %v3146 = vpop.f32.mrb[0].mxu0
        %v3147 = vadd.f32 0.0, %v3146
        %v3148 = vpop.f32.mrb[0].mxu0
        %3149 = vmatprep.mubr.f32.mxu0 0.0
        %3150 = vmatmul.mubr.f32.gmra.mrb[0].mxu0 %v2979
        %v3151 = vpop.f32.mrb[0].mxu0
        %v3152 = vadd.f32 0.0, %v3151
        %v3153 = vpop.f32.mrb[0].mxu0
        %3154 = vmatprep.mubr.f32.mxu0 0.0
        %3155 = vmatmul.mubr.f32.gmra.mrb[0].mxu0 %v2982
        %v3156 = vpop.f32.mrb[0].mxu0
        %v3157 = vadd.f32 0.0, %v3156
        %v3158 = vpop.f32.mrb[0].mxu0
        %3159 = vmatprep.mubr.f32.mxu0 0.0
        %3160 = vmatmul.mubr.f32.gmra.mrb[0].mxu0 %v2985
        %v3161 = vpop.f32.mrb[0].mxu0
        %v3162 = vadd.f32 0.0, %v3161
        %v3163 = vpop.f32.mrb[0].mxu0
        %3164 = vmatprep.mubr.f32.mxu0 0.0
        %3165 = vmatmul.mubr.f32.gmra.mrb[0].mxu0 %v2988
        %v3166 = vpop.f32.mrb[0].mxu0
        %v3167 = vadd.f32 0.0, %v3166
        %v3168 = vpop.f32.mrb[0].mxu0
        %3169 = vmatprep.mubr.f32.mxu0 0.0
        %3170 = vmatmul.mubr.f32.gmra.mrb[0].mxu0 %v2991
        %v3171 = vpop.f32.mrb[0].mxu0
        %v3172 = vadd.f32 0.0, %v3171
        %v3173 = vpop.f32.mrb[0].mxu0
        %3174 = vmatprep.mubr.f32.mxu0 0.0
        %3175 = vmatmul.mubr.f32.gmra.mrb[0].mxu0 %v2994
        %v3176 = vpop.f32.mrb[0].mxu0
        %v3177 = vadd.f32 0.0, %v3176
        %v3178 = vpop.f32.mrb[0].mxu0
        %3179 = vmatprep.mubr.f32.mxu0 0.0
        %3180 = vmatmul.mubr.f32.gmra.mrb[0].mxu0 %v2997
        %v3181 = vpop.f32.mrb[0].mxu0
        %v3182 = vadd.f32 0.0, %v3181
        %v3183 = vpop.f32.mrb[0].mxu0
        %3184 = vmatprep.mubr.f32.mxu0 0.0
        %3185 = vmatmul.mubr.f32.gmra.mrb[0].mxu0 %v3000
        %v3186 = vpop.f32.mrb[0].mxu0
        %v3187 = vadd.f32 0.0, %v3186
        %v3188 = vpop.f32.mrb[0].mxu0
        %3189 = vmatprep.mubr.f32.mxu0 0.0
        %3190 = vmatmul.mubr.f32.gmra.mrb[0].mxu0 %v3003
        %v3191 = vpop.f32.mrb[0].mxu0
        %v3192 = vadd.f32 0.0, %v3191
        %v3193 = vpop.f32.mrb[0].mxu0
        %3194 = vmatprep.mubr.f32.mxu0 0.0
        %3195 = vmatmul.mubr.f32.gmra.mrb[0].mxu0 %v3006
        %v3196 = vpop.f32.mrb[0].mxu0
        %v3197 = vadd.f32 0.0, %v3196
        %v3198 = vpop.f32.mrb[0].mxu0
        %3199 = vmatprep.mubr.f32.mxu0 0.0
        %3200 = vmatmul.mubr.f32.gmra.mrb[0].mxu0 %v3009
        %v3201 = vpop.f32.mrb[0].mxu0
        %v3202 = vadd.f32 0.0, %v3201
        %v3203 = vpop.f32.mrb[0].mxu0
        %3204 = vmatprep.mubr.f32.mxu0 0.0
        %3205 = vmatmul.mubr.f32.gmra.mrb[0].mxu0 %v3012
        %v3206 = vpop.f32.mrb[0].mxu0
        %v3207 = vadd.f32 0.0, %v3206
        %v3208 = vpop.f32.mrb[0].mxu0
        %3209 = vmatprep.mubr.f32.mxu0 0.0
        %3210 = vmatmul.mubr.f32.gmra.mrb[0].mxu0 %v3015
        %v3211 = vpop.f32.mrb[0].mxu0
        %v3212 = vadd.f32 0.0, %v3211
        %v3213 = vpop.f32.mrb[0].mxu0
        %3214 = vmatprep.mubr.f32.mxu0 0.0
        %3215 = vmatmul.mubr.f32.gmra.mrb[0].mxu0 %v3018
        %v3216 = vpop.f32.mrb[0].mxu0
        %v3217 = vadd.f32 0.0, %v3216
        %v3218 = vpop.f32.mrb[0].mxu0
        %3219 = vmatprep.mubr.f32.mxu0 0.0
        %3220 = vmatmul.mubr.f32.gmra.mrb[0].mxu0 %v3021
        %v3221 = vpop.f32.mrb[0].mxu0
        %v3222 = vadd.f32 0.0, %v3221
        %v3223 = vpop.f32.mrb[0].mxu0
        %3224 = vmatprep.mubr.f32.mxu0 0.0
        %3225 = vmatmul.mubr.f32.gmra.mrb[0].mxu0 %v3024
        %v3226 = vpop.f32.mrb[0].mxu0
        %v3227 = vadd.f32 0.0, %v3226
        %v3228 = vpop.f32.mrb[0].mxu0
        %3229 = vmatprep.mubr.f32.mxu0 0.0
        %3230 = vmatmul.mubr.f32.gmra.mrb[0].mxu0 %v3027
        %v3231 = vpop.f32.mrb[0].mxu0
        %v3232 = vadd.f32 0.0, %v3231
        %v3233 = vpop.f32.mrb[0].mxu0
        %3234 = vmatprep.mubr.f32.mxu0 0.0
        %3235 = vmatmul.mubr.f32.gmra.mrb[0].mxu0 %v3030
        %v3236 = vpop.f32.mrb[0].mxu0
        %v3237 = vadd.f32 0.0, %v3236
        %v3238 = vpop.f32.mrb[0].mxu0
        %3239 = vmatprep.mubr.f32.mxu0 0.0
        %3240 = vmatmul.mubr.f32.gmra.mrb[0].mxu0 %v3033
        %v3241 = vpop.f32.mrb[0].mxu0
        %v3242 = vadd.f32 0.0, %v3241
        %v3243 = vpop.f32.mrb[0].mxu0
        %3244 = vmatprep.mubr.f32.mxu0 0.0
        %3245 = vmatmul.mubr.f32.gmra.mrb[0].mxu0 %v3036
        %v3246 = vpop.f32.mrb[0].mxu0
        %v3247 = vadd.f32 0.0, %v3246
        %v3248 = vpop.f32.mrb[0].mxu0
        %3249 = vmatprep.mubr.f32.mxu0 0.0
        %3250 = vmatmul.mubr.f32.gmra.mrb[0].mxu0 %v3039
        %v3251 = vpop.f32.mrb[0].mxu0
        %v3252 = vadd.f32 0.0, %v3251
        %v3253 = vpop.f32.mrb[0].mxu0
        %3254 = vmatprep.mubr.f32.mxu0 0.0
        %3255 = vmatmul.mubr.f32.gmra.mrb[0].mxu0 %v3042
        %v3256 = vpop.f32.mrb[0].mxu0
        %v3257 = vadd.f32 0.0, %v3256
        %v3258 = vpop.f32.mrb[0].mxu0
        %3259 = vmatprep.mubr.f32.mxu0 0.0
        %3260 = vmatmul.mubr.f32.gmra.mrb[0].mxu0 %v3045
        %v3261 = vpop.f32.mrb[0].mxu0
        %v3262 = vadd.f32 0.0, %v3261
        %v3263 = vpop.f32.mrb[0].mxu0
        %3264 = vmatprep.mubr.f32.mxu0 0.0
        %3265 = vmatmul.mubr.f32.gmra.mrb[0].mxu0 %v3048
        %v3266 = vpop.f32.mrb[0].mxu0
        %v3267 = vadd.f32 0.0, %v3266
        %v3268 = vpop.f32.mrb[0].mxu0
        %3269 = vmatprep.mubr.f32.mxu0 0.0
        %3270 = vmatmul.mubr.f32.gmra.mrb[0].mxu0 %v3051
        %v3271 = vpop.f32.mrb[0].mxu0
        %v3272 = vadd.f32 0.0, %v3271
        %v3273 = vpop.f32.mrb[0].mxu0
        %3274 = vmatprep.mubr.f32.mxu0 0.0
        %3275 = vmatmul.mubr.f32.gmra.mrb[0].mxu0 %v3054
        %v3276 = vpop.f32.mrb[0].mxu0
        %v3277 = vadd.f32 0.0, %v3276
        %v3278 = vpop.f32.mrb[0].mxu0
        %3279 = vmatprep.mubr.f32.mxu0 0.0
        %3280 = vmatmul.mubr.f32.gmra.mrb[0].mxu0 %v3057
        %v3281 = vpop.f32.mrb[0].mxu0
        %v3282 = vadd.f32 0.0, %v3281
        %v3283 = vpop.f32.mrb[0].mxu0
        %3284 = vmatprep.mubr.f32.mxu0 0.0
        %3285 = vmatmul.mubr.f32.gmra.mrb[0].mxu0 %v3060
        %v3286 = vpop.f32.mrb[0].mxu0
        %v3287 = vadd.f32 0.0, %v3286
        %v3288 = vpop.f32.mrb[0].mxu0
        %3289 = vdwg.mxu0
        %v3290 = vadd.f32 %v2900, %v3132
        %v3291 = vadd.f32 %v2901, %v3137
        %v3292 = vadd.f32 %v2902, %v3142
        %v3293 = vadd.f32 %v2903, %v3147
        %v3294 = vadd.f32 %v2904, %v3152
        %v3295 = vadd.f32 %v2905, %v3157
        %v3296 = vadd.f32 %v2906, %v3162
        %v3297 = vadd.f32 %v2907, %v3167
        %v3298 = vadd.f32 %v2908, %v3172
        %v3299 = vadd.f32 %v2909, %v3177
        %v3300 = vadd.f32 %v2910, %v3182
        %v3301 = vadd.f32 %v2911, %v3187
        %v3302 = vadd.f32 %v2912, %v3192
        %v3303 = vadd.f32 %v2913, %v3197
        %v3304 = vadd.f32 %v2914, %v3202
        %v3305 = vadd.f32 %v2915, %v3207
        %v3306 = vadd.f32 %v2916, %v3212
        %v3307 = vadd.f32 %v2917, %v3217
        %v3308 = vadd.f32 %v2918, %v3222
        %v3309 = vadd.f32 %v2919, %v3227
        %v3310 = vadd.f32 %v2920, %v3232
        %v3311 = vadd.f32 %v2921, %v3237
        %v3312 = vadd.f32 %v2922, %v3242
        %v3313 = vadd.f32 %v2923, %v3247
        %v3314 = vadd.f32 %v2924, %v3252
        %v3315 = vadd.f32 %v2925, %v3257
        %v3316 = vadd.f32 %v2926, %v3262
        %v3317 = vadd.f32 %v2927, %v3267
        %v3318 = vadd.f32 %v2928, %v3272
        %v3319 = vadd.f32 %v2929, %v3277
        %v3320 = vadd.f32 %v2930, %v3282
        %v3321 = vadd.f32 %v2931, %v3287
        %v3322 = vld [vmem:[%s2541 + $0x2] sm:$0xff]
        %v3323 = vld [vmem:[%s2541 + $0xa] sm:$0xff]
        %v3324 = vld [vmem:[%s2541 + $0x1a] sm:$0xff]
        %v3325 = vld [vmem:[%s2541 + $0x22] sm:$0xff]
        %v3326 = vld [vmem:[%s2541 + $0x32] sm:$0xff]
        %v3327 = vld [vmem:[%s2541 + $0x3a] sm:$0xff]
        %v3328 = vld [vmem:[%s2541 + $0x4a] sm:$0xff]
        %v3329 = vld [vmem:[%s2541 + $0x52] sm:$0xff]
        %v3330 = vld [vmem:[%s2541 + $0x62] sm:$0xff]
        %v3331 = vld [vmem:[%s2541 + $0x6a] sm:$0xff]
        %v3332 = vld [vmem:[%s2541 + $0x7a] sm:$0xff]
        %v3333 = vld [vmem:[%s2541 + $0x82] sm:$0xff]
        %v3334 = vld [vmem:[%s2541 + $0x92] sm:$0xff]
        %v3335 = vld [vmem:[%s2541 + $0x9a] sm:$0xff]
        %v3336 = vld [vmem:[%s2541 + $0xaa] sm:$0xff]
        %v3337 = vld [vmem:[%s2541 + $0xb2] sm:$0xff]
        %v3338 = vld [vmem:[%s2541 + $0xc2] sm:$0xff]
        %v3339 = vld [vmem:[%s2541 + $0xca] sm:$0xff]
        %v3340 = vld [vmem:[%s2541 + $0xda] sm:$0xff]
        %v3341 = vld [vmem:[%s2541 + $0xe2] sm:$0xff]
        %v3342 = vld [vmem:[%s2541 + $0xf2] sm:$0xff]
        %v3343 = vld [vmem:[%s2541 + $0xfa] sm:$0xff]
        %v3344 = vld [vmem:[%s2541 + $0x10a] sm:$0xff]
        %v3345 = vld [vmem:[%s2541 + $0x112] sm:$0xff]
        %v3346 = vld [vmem:[%s2541 + $0x122] sm:$0xff]
        %v3347 = vld [vmem:[%s2541 + $0x12a] sm:$0xff]
        %v3348 = vld [vmem:[%s2541 + $0x13a] sm:$0xff]
        %v3349 = vld [vmem:[%s2541 + $0x142] sm:$0xff]
        %v3350 = vld [vmem:[%s2541 + $0x152] sm:$0xff]
        %v3351 = vld [vmem:[%s2541 + $0x15a] sm:$0xff]
        %v3352 = vld [vmem:[%s2541 + $0x16a] sm:$0xff]
        %v3353 = vld [vmem:[%s2541 + $0x172] sm:$0xff]
        %s3354 = scalar_lea.vmem %s1, 32
        %v3355 = vld [vmem:[%s3354] sm:$0xf]
        %v3357 = vsel %vm228, %v3322, 0
        %v3360 = vsel %vm228, %v3323, 0
        %v3363 = vsel %vm228, %v3324, 0
        %v3366 = vsel %vm228, %v3325, 0
        %v3369 = vsel %vm228, %v3326, 0
        %v3372 = vsel %vm228, %v3327, 0
        %v3375 = vsel %vm228, %v3328, 0
        %v3378 = vsel %vm228, %v3329, 0
        %v3381 = vsel %vm228, %v3330, 0
        %v3384 = vsel %vm228, %v3331, 0
        %v3387 = vsel %vm228, %v3332, 0
        %v3390 = vsel %vm228, %v3333, 0
        %v3393 = vsel %vm228, %v3334, 0
        %v3396 = vsel %vm228, %v3335, 0
        %v3399 = vsel %vm228, %v3336, 0
        %v3402 = vsel %vm228, %v3337, 0
        %v3405 = vsel %vm228, %v3338, 0
        %v3408 = vsel %vm228, %v3339, 0
        %v3411 = vsel %vm228, %v3340, 0
        %v3414 = vsel %vm228, %v3341, 0
        %v3417 = vsel %vm228, %v3342, 0
        %v3420 = vsel %vm228, %v3343, 0
        %v3423 = vsel %vm228, %v3344, 0
        %v3426 = vsel %vm228, %v3345, 0
        %v3429 = vsel %vm228, %v3346, 0
        %v3432 = vsel %vm228, %v3347, 0
        %v3435 = vsel %vm228, %v3348, 0
        %v3438 = vsel %vm228, %v3349, 0
        %v3441 = vsel %vm228, %v3350, 0
        %v3444 = vsel %vm228, %v3351, 0
        %v3447 = vsel %vm228, %v3352, 0
        %v3450 = vsel %vm228, %v3353, 0
        %v3453 = vsel %vm325, %v3355, 0
        %3455 = vmatprep.subr.mxu0 0.0
        %3456 = vmatpush1.msra.mxu0 %v3453
        %3457 = vmatprep.subr.mxu0 0.0
        %3458 = vmatpush1.msra.mxu0 0.0
        %3459 = vmatprep.subr.mxu0 0.0
        %3460 = vmatpush1.msra.mxu0 0.0
        %3461 = vmatprep.subr.mxu0 0.0
        %3462 = vmatpush1.msra.mxu0 0.0
        %3463 = vmatprep.subr.mxu0 0.0
        %3464 = vmatpush1.msra.mxu0 0.0
        %3465 = vmatprep.subr.mxu0 0.0
        %3466 = vmatpush1.msra.mxu0 0.0
        %3467 = vmatprep.subr.mxu0 0.0
        %3468 = vmatpush1.msra.mxu0 0.0
        %3469 = vmatprep.subr.mxu0 0.0
        %3470 = vmatpush1.msra.mxu0 0.0
        %3471 = vmatprep.subr.mxu0 0.0
        %3472 = vmatpush1.msra.mxu0 0.0
        %3473 = vmatprep.subr.mxu0 0.0
        %3474 = vmatpush1.msra.mxu0 0.0
        %3475 = vmatprep.subr.mxu0 0.0
        %3476 = vmatpush1.msra.mxu0 0.0
        %3477 = vmatprep.subr.mxu0 0.0
        %3478 = vmatpush1.msra.mxu0 0.0
        %3479 = vmatprep.subr.mxu0 0.0
        %3480 = vmatpush1.msra.mxu0 0.0
        %3481 = vmatprep.subr.mxu0 0.0
        %3482 = vmatpush1.msra.mxu0 0.0
        %3483 = vmatprep.subr.mxu0 0.0
        %3484 = vmatpush1.msra.mxu0 0.0
        %3485 = vmatprep.subr.mxu0 0.0
        %3486 = vmatpush1.msra.mxu0 0.0
        %3487 = vmatprep.subr.mxu0 0.0
        %3488 = vmatpush1.msra.mxu0 0.0
        %3489 = vmatprep.subr.mxu0 0.0
        %3490 = vmatpush1.msra.mxu0 0.0
        %3491 = vmatprep.subr.mxu0 0.0
        %3492 = vmatpush1.msra.mxu0 0.0
        %3493 = vmatprep.subr.mxu0 0.0
        %3494 = vmatpush1.msra.mxu0 0.0
        %3495 = vmatprep.subr.mxu0 0.0
        %3496 = vmatpush1.msra.mxu0 0.0
        %3497 = vmatprep.subr.mxu0 0.0
        %3498 = vmatpush1.msra.mxu0 0.0
        %3499 = vmatprep.subr.mxu0 0.0
        %3500 = vmatpush1.msra.mxu0 0.0
        %3501 = vmatprep.subr.mxu0 0.0
        %3502 = vmatpush1.msra.mxu0 0.0
        %3503 = vmatprep.subr.mxu0 0.0
        %3504 = vmatpush1.msra.mxu0 0.0
        %3505 = vmatprep.subr.mxu0 0.0
        %3506 = vmatpush1.msra.mxu0 0.0
        %3507 = vmatprep.subr.mxu0 0.0
        %3508 = vmatpush1.msra.mxu0 0.0
        %3509 = vmatprep.subr.mxu0 0.0
        %3510 = vmatpush1.msra.mxu0 0.0
        %3511 = vmatprep.subr.mxu0 0.0
        %3512 = vmatpush1.msra.mxu0 0.0
        %3513 = vmatprep.subr.mxu0 0.0
        %3514 = vmatpush1.msra.mxu0 0.0
        %3515 = vmatprep.subr.mxu0 0.0
        %3516 = vmatpush1.msra.mxu0 0.0
        %3517 = vmatprep.subr.mxu0 0.0
        %3518 = vmatpush1.msra.mxu0 0.0
        %3519 = vmatprep.mubr.f32.mxu0 0.0
        %3520 = vmatmul.mubr.f32.gmra.mrb[0].mxu0 %v3357
        %v3521 = vpop.f32.mrb[0].mxu0
        %v3522 = vadd.f32 0.0, %v3521
        %v3523 = vpop.f32.mrb[0].mxu0
        %3524 = vmatprep.mubr.f32.mxu0 0.0
        %3525 = vmatmul.mubr.f32.gmra.mrb[0].mxu0 %v3360
        %v3526 = vpop.f32.mrb[0].mxu0
        %v3527 = vadd.f32 0.0, %v3526
        %v3528 = vpop.f32.mrb[0].mxu0
        %3529 = vmatprep.mubr.f32.mxu0 0.0
        %3530 = vmatmul.mubr.f32.gmra.mrb[0].mxu0 %v3363
        %v3531 = vpop.f32.mrb[0].mxu0
        %v3532 = vadd.f32 0.0, %v3531
        %v3533 = vpop.f32.mrb[0].mxu0
        %3534 = vmatprep.mubr.f32.mxu0 0.0
        %3535 = vmatmul.mubr.f32.gmra.mrb[0].mxu0 %v3366
        %v3536 = vpop.f32.mrb[0].mxu0
        %v3537 = vadd.f32 0.0, %v3536
        %v3538 = vpop.f32.mrb[0].mxu0
        %3539 = vmatprep.mubr.f32.mxu0 0.0
        %3540 = vmatmul.mubr.f32.gmra.mrb[0].mxu0 %v3369
        %v3541 = vpop.f32.mrb[0].mxu0
        %v3542 = vadd.f32 0.0, %v3541
        %v3543 = vpop.f32.mrb[0].mxu0
        %3544 = vmatprep.mubr.f32.mxu0 0.0
        %3545 = vmatmul.mubr.f32.gmra.mrb[0].mxu0 %v3372
        %v3546 = vpop.f32.mrb[0].mxu0
        %v3547 = vadd.f32 0.0, %v3546
        %v3548 = vpop.f32.mrb[0].mxu0
        %3549 = vmatprep.mubr.f32.mxu0 0.0
        %3550 = vmatmul.mubr.f32.gmra.mrb[0].mxu0 %v3375
        %v3551 = vpop.f32.mrb[0].mxu0
        %v3552 = vadd.f32 0.0, %v3551
        %v3553 = vpop.f32.mrb[0].mxu0
        %3554 = vmatprep.mubr.f32.mxu0 0.0
        %3555 = vmatmul.mubr.f32.gmra.mrb[0].mxu0 %v3378
        %v3556 = vpop.f32.mrb[0].mxu0
        %v3557 = vadd.f32 0.0, %v3556
        %v3558 = vpop.f32.mrb[0].mxu0
        %3559 = vmatprep.mubr.f32.mxu0 0.0
        %3560 = vmatmul.mubr.f32.gmra.mrb[0].mxu0 %v3381
        %v3561 = vpop.f32.mrb[0].mxu0
        %v3562 = vadd.f32 0.0, %v3561
        %v3563 = vpop.f32.mrb[0].mxu0
        %3564 = vmatprep.mubr.f32.mxu0 0.0
        %3565 = vmatmul.mubr.f32.gmra.mrb[0].mxu0 %v3384
        %v3566 = vpop.f32.mrb[0].mxu0
        %v3567 = vadd.f32 0.0, %v3566
        %v3568 = vpop.f32.mrb[0].mxu0
        %3569 = vmatprep.mubr.f32.mxu0 0.0
        %3570 = vmatmul.mubr.f32.gmra.mrb[0].mxu0 %v3387
        %v3571 = vpop.f32.mrb[0].mxu0
        %v3572 = vadd.f32 0.0, %v3571
        %v3573 = vpop.f32.mrb[0].mxu0
        %3574 = vmatprep.mubr.f32.mxu0 0.0
        %3575 = vmatmul.mubr.f32.gmra.mrb[0].mxu0 %v3390
        %v3576 = vpop.f32.mrb[0].mxu0
        %v3577 = vadd.f32 0.0, %v3576
        %v3578 = vpop.f32.mrb[0].mxu0
        %3579 = vmatprep.mubr.f32.mxu0 0.0
        %3580 = vmatmul.mubr.f32.gmra.mrb[0].mxu0 %v3393
        %v3581 = vpop.f32.mrb[0].mxu0
        %v3582 = vadd.f32 0.0, %v3581
        %v3583 = vpop.f32.mrb[0].mxu0
        %3584 = vmatprep.mubr.f32.mxu0 0.0
        %3585 = vmatmul.mubr.f32.gmra.mrb[0].mxu0 %v3396
        %v3586 = vpop.f32.mrb[0].mxu0
        %v3587 = vadd.f32 0.0, %v3586
        %v3588 = vpop.f32.mrb[0].mxu0
        %3589 = vmatprep.mubr.f32.mxu0 0.0
        %3590 = vmatmul.mubr.f32.gmra.mrb[0].mxu0 %v3399
        %v3591 = vpop.f32.mrb[0].mxu0
        %v3592 = vadd.f32 0.0, %v3591
        %v3593 = vpop.f32.mrb[0].mxu0
        %3594 = vmatprep.mubr.f32.mxu0 0.0
        %3595 = vmatmul.mubr.f32.gmra.mrb[0].mxu0 %v3402
        %v3596 = vpop.f32.mrb[0].mxu0
        %v3597 = vadd.f32 0.0, %v3596
        %v3598 = vpop.f32.mrb[0].mxu0
        %3599 = vmatprep.mubr.f32.mxu0 0.0
        %3600 = vmatmul.mubr.f32.gmra.mrb[0].mxu0 %v3405
        %v3601 = vpop.f32.mrb[0].mxu0
        %v3602 = vadd.f32 0.0, %v3601
        %v3603 = vpop.f32.mrb[0].mxu0
        %3604 = vmatprep.mubr.f32.mxu0 0.0
        %3605 = vmatmul.mubr.f32.gmra.mrb[0].mxu0 %v3408
        %v3606 = vpop.f32.mrb[0].mxu0
        %v3607 = vadd.f32 0.0, %v3606
        %v3608 = vpop.f32.mrb[0].mxu0
        %3609 = vmatprep.mubr.f32.mxu0 0.0
        %3610 = vmatmul.mubr.f32.gmra.mrb[0].mxu0 %v3411
        %v3611 = vpop.f32.mrb[0].mxu0
        %v3612 = vadd.f32 0.0, %v3611
        %v3613 = vpop.f32.mrb[0].mxu0
        %3614 = vmatprep.mubr.f32.mxu0 0.0
        %3615 = vmatmul.mubr.f32.gmra.mrb[0].mxu0 %v3414
        %v3616 = vpop.f32.mrb[0].mxu0
        %v3617 = vadd.f32 0.0, %v3616
        %v3618 = vpop.f32.mrb[0].mxu0
        %3619 = vmatprep.mubr.f32.mxu0 0.0
        %3620 = vmatmul.mubr.f32.gmra.mrb[0].mxu0 %v3417
        %v3621 = vpop.f32.mrb[0].mxu0
        %v3622 = vadd.f32 0.0, %v3621
        %v3623 = vpop.f32.mrb[0].mxu0
        %3624 = vmatprep.mubr.f32.mxu0 0.0
        %3625 = vmatmul.mubr.f32.gmra.mrb[0].mxu0 %v3420
        %v3626 = vpop.f32.mrb[0].mxu0
        %v3627 = vadd.f32 0.0, %v3626
        %v3628 = vpop.f32.mrb[0].mxu0
        %3629 = vmatprep.mubr.f32.mxu0 0.0
        %3630 = vmatmul.mubr.f32.gmra.mrb[0].mxu0 %v3423
        %v3631 = vpop.f32.mrb[0].mxu0
        %v3632 = vadd.f32 0.0, %v3631
        %v3633 = vpop.f32.mrb[0].mxu0
        %3634 = vmatprep.mubr.f32.mxu0 0.0
        %3635 = vmatmul.mubr.f32.gmra.mrb[0].mxu0 %v3426
        %v3636 = vpop.f32.mrb[0].mxu0
        %v3637 = vadd.f32 0.0, %v3636
        %v3638 = vpop.f32.mrb[0].mxu0
        %3639 = vmatprep.mubr.f32.mxu0 0.0
        %3640 = vmatmul.mubr.f32.gmra.mrb[0].mxu0 %v3429
        %v3641 = vpop.f32.mrb[0].mxu0
        %v3642 = vadd.f32 0.0, %v3641
        %v3643 = vpop.f32.mrb[0].mxu0
        %3644 = vmatprep.mubr.f32.mxu0 0.0
        %3645 = vmatmul.mubr.f32.gmra.mrb[0].mxu0 %v3432
        %v3646 = vpop.f32.mrb[0].mxu0
        %v3647 = vadd.f32 0.0, %v3646
        %v3648 = vpop.f32.mrb[0].mxu0
        %3649 = vmatprep.mubr.f32.mxu0 0.0
        %3650 = vmatmul.mubr.f32.gmra.mrb[0].mxu0 %v3435
        %v3651 = vpop.f32.mrb[0].mxu0
        %v3652 = vadd.f32 0.0, %v3651
        %v3653 = vpop.f32.mrb[0].mxu0
        %3654 = vmatprep.mubr.f32.mxu0 0.0
        %3655 = vmatmul.mubr.f32.gmra.mrb[0].mxu0 %v3438
        %v3656 = vpop.f32.mrb[0].mxu0
        %v3657 = vadd.f32 0.0, %v3656
        %v3658 = vpop.f32.mrb[0].mxu0
        %3659 = vmatprep.mubr.f32.mxu0 0.0
        %3660 = vmatmul.mubr.f32.gmra.mrb[0].mxu0 %v3441
        %v3661 = vpop.f32.mrb[0].mxu0
        %v3662 = vadd.f32 0.0, %v3661
        %v3663 = vpop.f32.mrb[0].mxu0
        %3664 = vmatprep.mubr.f32.mxu0 0.0
        %3665 = vmatmul.mubr.f32.gmra.mrb[0].mxu0 %v3444
        %v3666 = vpop.f32.mrb[0].mxu0
        %v3667 = vadd.f32 0.0, %v3666
        %v3668 = vpop.f32.mrb[0].mxu0
        %3669 = vmatprep.mubr.f32.mxu0 0.0
        %3670 = vmatmul.mubr.f32.gmra.mrb[0].mxu0 %v3447
        %v3671 = vpop.f32.mrb[0].mxu0
        %v3672 = vadd.f32 0.0, %v3671
        %v3673 = vpop.f32.mrb[0].mxu0
        %3674 = vmatprep.mubr.f32.mxu0 0.0
        %3675 = vmatmul.mubr.f32.gmra.mrb[0].mxu0 %v3450
        %v3676 = vpop.f32.mrb[0].mxu0
        %v3677 = vadd.f32 0.0, %v3676
        %v3678 = vpop.f32.mrb[0].mxu0
        %3679 = vdwg.mxu0
        %v3680 = vadd.f32 %v3290, %v3522
        %v3681 = vadd.f32 %v3291, %v3527
        %v3682 = vadd.f32 %v3292, %v3532
        %v3683 = vadd.f32 %v3293, %v3537
        %v3684 = vadd.f32 %v3294, %v3542
        %v3685 = vadd.f32 %v3295, %v3547
        %v3686 = vadd.f32 %v3296, %v3552
        %v3687 = vadd.f32 %v3297, %v3557
        %v3688 = vadd.f32 %v3298, %v3562
        %v3689 = vadd.f32 %v3299, %v3567
        %v3690 = vadd.f32 %v3300, %v3572
        %v3691 = vadd.f32 %v3301, %v3577
        %v3692 = vadd.f32 %v3302, %v3582
        %v3693 = vadd.f32 %v3303, %v3587
        %v3694 = vadd.f32 %v3304, %v3592
        %v3695 = vadd.f32 %v3305, %v3597
        %v3696 = vadd.f32 %v3306, %v3602
        %v3697 = vadd.f32 %v3307, %v3607
        %v3698 = vadd.f32 %v3308, %v3612
        %v3699 = vadd.f32 %v3309, %v3617
        %v3700 = vadd.f32 %v3310, %v3622
        %v3701 = vadd.f32 %v3311, %v3627
        %v3702 = vadd.f32 %v3312, %v3632
        %v3703 = vadd.f32 %v3313, %v3637
        %v3704 = vadd.f32 %v3314, %v3642
        %v3705 = vadd.f32 %v3315, %v3647
        %v3706 = vadd.f32 %v3316, %v3652
        %v3707 = vadd.f32 %v3317, %v3657
        %v3708 = vadd.f32 %v3318, %v3662
        %v3709 = vadd.f32 %v3319, %v3667
        %v3710 = vadd.f32 %v3320, %v3672
        %v3711 = vadd.f32 %v3321, %v3677
        %v3712 = vmul.f32 %v3680, 256.0
        %v3713 = vmul.f32 %v3681, 256.0
        %v3714 = vmul.f32 %v3682, 256.0
        %v3715 = vmul.f32 %v3683, 256.0
        %v3716 = vmul.f32 %v3684, 256.0
        %v3717 = vmul.f32 %v3685, 256.0
        %v3718 = vmul.f32 %v3686, 256.0
        %v3719 = vmul.f32 %v3687, 256.0
        %v3720 = vmul.f32 %v3688, 256.0
        %v3721 = vmul.f32 %v3689, 256.0
        %v3722 = vmul.f32 %v3690, 256.0
        %v3723 = vmul.f32 %v3691, 256.0
        %v3724 = vmul.f32 %v3692, 256.0
        %v3725 = vmul.f32 %v3693, 256.0
        %v3726 = vmul.f32 %v3694, 256.0
        %v3727 = vmul.f32 %v3695, 256.0
        %v3728 = vmul.f32 %v3696, 256.0
        %v3729 = vmul.f32 %v3697, 256.0
        %v3730 = vmul.f32 %v3698, 256.0
        %v3731 = vmul.f32 %v3699, 256.0
        %v3732 = vmul.f32 %v3700, 256.0
        %v3733 = vmul.f32 %v3701, 256.0
        %v3734 = vmul.f32 %v3702, 256.0
        %v3735 = vmul.f32 %v3703, 256.0
        %v3736 = vmul.f32 %v3704, 256.0
        %v3737 = vmul.f32 %v3705, 256.0
        %v3738 = vmul.f32 %v3706, 256.0
        %v3739 = vmul.f32 %v3707, 256.0
        %v3740 = vmul.f32 %v3708, 256.0
        %v3741 = vmul.f32 %v3709, 256.0
        %v3742 = vmul.f32 %v3710, 256.0
        %v3743 = vmul.f32 %v3711, 256.0
        %v3744 = vround.ne.pseudo %v3712
        %v3745 = vround.ne.pseudo %v3713
        %v3746 = vround.ne.pseudo %v3714
        %v3747 = vround.ne.pseudo %v3715
        %v3748 = vround.ne.pseudo %v3716
        %v3749 = vround.ne.pseudo %v3717
        %v3750 = vround.ne.pseudo %v3718
        %v3751 = vround.ne.pseudo %v3719
        %v3752 = vround.ne.pseudo %v3720
        %v3753 = vround.ne.pseudo %v3721
        %v3754 = vround.ne.pseudo %v3722
        %v3755 = vround.ne.pseudo %v3723
        %v3756 = vround.ne.pseudo %v3724
        %v3757 = vround.ne.pseudo %v3725
        %v3758 = vround.ne.pseudo %v3726
        %v3759 = vround.ne.pseudo %v3727
        %v3760 = vround.ne.pseudo %v3728
        %v3761 = vround.ne.pseudo %v3729
        %v3762 = vround.ne.pseudo %v3730
        %v3763 = vround.ne.pseudo %v3731
        %v3764 = vround.ne.pseudo %v3732
        %v3765 = vround.ne.pseudo %v3733
        %v3766 = vround.ne.pseudo %v3734
        %v3767 = vround.ne.pseudo %v3735
        %v3768 = vround.ne.pseudo %v3736
        %v3769 = vround.ne.pseudo %v3737
        %v3770 = vround.ne.pseudo %v3738
        %v3771 = vround.ne.pseudo %v3739
        %v3772 = vround.ne.pseudo %v3740
        %v3773 = vround.ne.pseudo %v3741
        %v3774 = vround.ne.pseudo %v3742
        %v3775 = vround.ne.pseudo %v3743
        %v3776 = vmul.f32 %v3744, 0.00390625
        %v3777 = vmul.f32 %v3745, 0.00390625
        %v3778 = vmul.f32 %v3746, 0.00390625
        %v3779 = vmul.f32 %v3747, 0.00390625
        %v3780 = vmul.f32 %v3748, 0.00390625
        %v3781 = vmul.f32 %v3749, 0.00390625
        %v3782 = vmul.f32 %v3750, 0.00390625
        %v3783 = vmul.f32 %v3751, 0.00390625
        %v3784 = vmul.f32 %v3752, 0.00390625
        %v3785 = vmul.f32 %v3753, 0.00390625
        %v3786 = vmul.f32 %v3754, 0.00390625
        %v3787 = vmul.f32 %v3755, 0.00390625
        %v3788 = vmul.f32 %v3756, 0.00390625
        %v3789 = vmul.f32 %v3757, 0.00390625
        %v3790 = vmul.f32 %v3758, 0.00390625
        %v3791 = vmul.f32 %v3759, 0.00390625
        %v3792 = vmul.f32 %v3760, 0.00390625
        %v3793 = vmul.f32 %v3761, 0.00390625
        %v3794 = vmul.f32 %v3762, 0.00390625
        %v3795 = vmul.f32 %v3763, 0.00390625
        %v3796 = vmul.f32 %v3764, 0.00390625
        %v3797 = vmul.f32 %v3765, 0.00390625
        %v3798 = vmul.f32 %v3766, 0.00390625
        %v3799 = vmul.f32 %v3767, 0.00390625
        %v3800 = vmul.f32 %v3768, 0.00390625
        %v3801 = vmul.f32 %v3769, 0.00390625
        %v3802 = vmul.f32 %v3770, 0.00390625
        %v3803 = vmul.f32 %v3771, 0.00390625
        %v3804 = vmul.f32 %v3772, 0.00390625
        %v3805 = vmul.f32 %v3773, 0.00390625
        %v3806 = vmul.f32 %v3774, 0.00390625
        %v3807 = vmul.f32 %v3775, 0.00390625
        %3808 = vst [vmem:[%s177] sm:$0xff] %v3776
        %3809 = vst [vmem:[%s177 + $0x8] sm:$0xff] %v3777
        %3810 = vst [vmem:[%s177 + $0x10] sm:$0xff] %v3778
        %3811 = vst [vmem:[%s177 + $0x18] sm:$0xff] %v3779
        %3812 = vst [vmem:[%s177 + $0x20] sm:$0xff] %v3780
        %3813 = vst [vmem:[%s177 + $0x28] sm:$0xff] %v3781
        %3814 = vst [vmem:[%s177 + $0x30] sm:$0xff] %v3782
        %3815 = vst [vmem:[%s177 + $0x38] sm:$0xff] %v3783
        %3816 = vst [vmem:[%s177 + $0x40] sm:$0xff] %v3784
        %3817 = vst [vmem:[%s177 + $0x48] sm:$0xff] %v3785
        %3818 = vst [vmem:[%s177 + $0x50] sm:$0xff] %v3786
        %3819 = vst [vmem:[%s177 + $0x58] sm:$0xff] %v3787
        %3820 = vst [vmem:[%s177 + $0x60] sm:$0xff] %v3788
        %3821 = vst [vmem:[%s177 + $0x68] sm:$0xff] %v3789
        %3822 = vst [vmem:[%s177 + $0x70] sm:$0xff] %v3790
        %3823 = vst [vmem:[%s177 + $0x78] sm:$0xff] %v3791
        %3824 = vst [vmem:[%s177 + $0x80] sm:$0xff] %v3792
        %3825 = vst [vmem:[%s177 + $0x88] sm:$0xff] %v3793
        %3826 = vst [vmem:[%s177 + $0x90] sm:$0xff] %v3794
        %3827 = vst [vmem:[%s177 + $0x98] sm:$0xff] %v3795
        %3828 = vst [vmem:[%s177 + $0xa0] sm:$0xff] %v3796
        %3829 = vst [vmem:[%s177 + $0xa8] sm:$0xff] %v3797
        %3830 = vst [vmem:[%s177 + $0xb0] sm:$0xff] %v3798
        %3831 = vst [vmem:[%s177 + $0xb8] sm:$0xff] %v3799
        %3832 = vst [vmem:[%s177 + $0xc0] sm:$0xff] %v3800
        %3833 = vst [vmem:[%s177 + $0xc8] sm:$0xff] %v3801
        %3834 = vst [vmem:[%s177 + $0xd0] sm:$0xff] %v3802
        %3835 = vst [vmem:[%s177 + $0xd8] sm:$0xff] %v3803
        %3836 = vst [vmem:[%s177 + $0xe0] sm:$0xff] %v3804
        %3837 = vst [vmem:[%s177 + $0xe8] sm:$0xff] %v3805
        %3838 = vst [vmem:[%s177 + $0xf0] sm:$0xff] %v3806
        %3839 = vst [vmem:[%s177 + $0xf8] sm:$0xff] %v3807
        %s3840 = sand.u32 %s107, 1
        %s3841 = scalar_lea.sflag [#allocation3], %s3840
        %s3842 = sand.u32 %s107, 1
        %s3843 = smul.addr %s3842, 256
        %s3844 = scalar_lea.vmem [#allocation2], %s3843
        // Predicated region
        $region33: #{tpu_custom_call.1} parent=31 // pred_check
          %p3845 = pneg %p117
        $region34: #{tpu_custom_call.1} parent=31 // pred_check_branch
          %3847 = sbr.rel (%p3845) target = $region36
        $region35: #{tpu_custom_call.1} parent=31 // pred_region
          %s3848 = smul.u32 32, %s22
          %s3850 = ssub.s32 4096, 4096
          %3851 = vsyncadd %s3841, %s3850
          %s3852 = smul.addr %s21, 32
          %s3853 = sadd.s32 %s3848, %s3852
          %s3854 = smul.addr %s3853, 128
          %s3855 = scalar_lea.hbm %s3, %s3854
          %s3856 = sshll.u32 %s3844, 4
          %s3857 = int_to_ptr.vmem [resolvable:$true] %s3856
          %3862 = dma.vmem_to_hbm [thread:$0]  %s3857, 4096, %s3855, %s3841, 128, 128, 8
        $region36: #{tpu_custom_call.1} parent=31 // pred_fallthru
          _
      $region32: #{tpu_custom_call.1} parent=5 // pred_fallthru
        _
      %p3863 = scmp.le.s32.totalorder 2, %s12
      // Predicated region
      $region37: #{tpu_custom_call.1} parent=5 // pred_check
        %p3864 = pneg %p3863
      $region38: #{tpu_custom_call.1} parent=5 // pred_check_branch
        %3866 = sbr.rel (%p3864) target = $region40
      $region39: #{tpu_custom_call.1} parent=5 // pred_region
        %s3867 = ssub.s32 %s12, 2
        // Predicated region
        $region41: #{tpu_custom_call.1} parent=39 // pred_check
          %p3868 = pneg %p123
        $region42: #{tpu_custom_call.1} parent=39 // pred_check_branch
          %3870 = sbr.rel (%p3868) target = $region44
        $region43: #{tpu_custom_call.1} parent=39 // pred_region
          %s3871 = sand.u32 %s108, 1
          %s3872 = scalar_lea.sflag [#allocation3], %s3871
          %s3873 = sand.u32 %s108, 1
          %s3874 = smul.addr %s3873, 256
          %s3875 = scalar_lea.vmem [#allocation2], %s3874
          %3876 = dma.done %s3872, 4096
        $region44: #{tpu_custom_call.1} parent=39 // pred_fallthru
          _
      $region40: #{tpu_custom_call.1} parent=5 // pred_fallthru
        _
    $region6: #{tpu_custom_call.1} parent=1 // loop_footer
      %s16 = sadd.s32 1, %s12
    $region7: #{tpu_custom_call.1} parent=1 // loop_footer_branch
      %11 = sbr.rel target = $region3
    $region8: #{tpu_custom_call.1} parent=1 // loop_exit
      _
    %3877 = vsyncpa [#allocation3], 1
    %s3878 = scalar_lea.sflag [#allocation3], 1
    %3879 = vsyncpa %s3878, 1

</llo_original>
